<compile_context>
chip_gen: v7x
topology: tpu7x:2x2x1
jax: 0.10.0
libtpu: 0.0.40
codegen_flags: <defaults>
</compile_context>

<pallas_src>
import jax
import jax.numpy as jnp
from jax.experimental import pallas as pl
from jax.experimental.pallas import tpu as pltpu

LANE = 128
_NEG_BIG = -1e30  # bias for padded logit lanes -> exp underflows to exactly 0


def _round_up(n, m):
    return ((n + m - 1) // m) * m


def _preferred_lane_multiple():
    """Feature-pad multiple for widths > 128: 256 on v6e/v7x MXUs, 128 on v5e/older."""
    try:
        kind = jax.devices()[0].device_kind.lower()
    except Exception:
        return 128
    if any(tag in kind for tag in ("v2", "v3", "v4", "v5")):
        return 128
    return 256


def _pad_feature(dim, mult):
    # <=128-wide features stay one 128-lane vreg; wider features round up to the
    # MXU-native tile width so the systolic array isn't driven at half width.
    return _round_up(dim, LANE) if dim <= LANE else _round_up(dim, mult)


def _choose_tb(batch, tb_cap, min_tiles):
    """Largest batch tile (multiple of 8 sublanes, <= tb_cap) that still yields at
    least `min_tiles` grid steps, so both v7x TensorCores get work."""
    tb = min(int(tb_cap), _round_up(pl.cdiv(batch, min_tiles), 8))
    return max(8, (tb // 8) * 8)


def _mlp_kernel(x_ref,
                w1, b1, w2, b2, w3, b3, w4, b4, w5, b5,
                out_ref):
    """Fused forward: 4x (Linear[+folded BN] + ReLU) + Linear + LogSoftmax.

    Weights are bf16 (MXU-native inputs); accumulation and the elementwise
    epilogue (bias add, ReLU, softmax) run in f32.  INVARIANT: b5 and the
    log-softmax temporaries must stay f32 so the -1e30 padded-lane bias stays
    finite and exp() underflows exactly to 0 on padded columns.
    """

    def lin_relu(h, w_ref, b_ref):
        y = jnp.dot(h, w_ref[...], preferred_element_type=jnp.float32)
        y = jnp.maximum(y + b_ref[...], 0.0)          # bias + ReLU in f32
        return y.astype(jnp.bfloat16)                 # bf16 into next MXU pass

    h = x_ref[...].astype(jnp.bfloat16)               # in-kernel cast (no wrapper pass)
    h = lin_relu(h, w1, b1)
    h = lin_relu(h, w2, b2)                           # Dropout -> identity (eval)
    h = lin_relu(h, w3, b3)
    h = lin_relu(h, w4, b4)                           # Dropout -> identity (eval)

    logits = jnp.dot(h, w5[...], preferred_element_type=jnp.float32) + b5[...]

    # LogSoftmax over the lane (feature) axis.  Padded columns carry a -1e30
    # bias, so exp() underflows to 0 and they do not perturb the real columns.
    m = jnp.max(logits, axis=1, keepdims=True)
    z = logits - m
    lse = jnp.log(jnp.sum(jnp.exp(z), axis=1, keepdims=True))
    out_ref[...] = (z - lse).astype(out_ref.dtype)    # bf16 store: half the HBM writeback


def net_forward(x, folded, *, tb_cap=1024, min_tiles=2):
    """x: (B, input_dim) f32.  Returns (B, output_dim) f32 log-probabilities."""
    B, din = x.shape
    ws, bs = folded["ws"], folded["bs"]
    out_dim = folded["output_dim"]
    f_out = ws[-1].shape[1]                           # lane-padded output width

    TB = _choose_tb(B, tb_cap, min_tiles)
    grid = (pl.cdiv(B, TB),)                          # >= 2 steps -> megacore sharding

    # VMEM budget (worst case: double-buffered weights).  Only pass an explicit
    # limit once the resident set outgrows the ~32 MiB scoped default (large
    # hidden_dim); for very large widths the right fix is to tile dout instead.
    weight_bytes = sum(int(w.size) * w.dtype.itemsize + int(b.size) * b.dtype.itemsize
                       for w, b in zip(ws, bs))
    io_bytes = 2 * TB * (din * 4 + f_out * 2)         # double-buffered x / out tiles
    need = 2 * weight_bytes + io_bytes
    vmem_limit = int(min(1.5 * need, 100 * 2**20)) if need > 24 * 2**20 else None

    def build(single_buffer_weights):
        wkw = {}
        if single_buffer_weights and hasattr(pl, "Buffered"):
            # Constant-index_map operands never change across grid steps; a
            # single buffer halves their VMEM footprint (matters on v7x: 64 MiB).
            wkw = dict(pipeline_mode=pl.Buffered(1))
        in_specs = [pl.BlockSpec((TB, din), lambda i: (i, 0))]
        for w, b in zip(ws, bs):
            # Constant index_map -> weights/biases stay VMEM-resident across tiles.
            in_specs.append(pl.BlockSpec(w.shape, lambda i: (0, 0), **wkw))
            in_specs.append(pl.BlockSpec(b.shape, lambda i: (0, 0), **wkw))
        return pl.pallas_call(
            _mlp_kernel,
            out_shape=jax.ShapeDtypeStruct((B, f_out), jnp.bfloat16),
            grid=grid,
            in_specs=in_specs,
            out_specs=pl.BlockSpec((TB, f_out), lambda i: (i, 0)),
            compiler_params=pltpu.CompilerParams(
                dimension_semantics=("parallel",),    # shard tiles over v7x's 2 TCs
                vmem_limit_bytes=vmem_limit),
        )

    args = [x]
    for w, b in zip(ws, bs):
        args += [w, b]

    try:
        out = build(True)(*args)                      # single-buffered resident weights
    except Exception:
        out = build(False)(*args)                     # fallback: default buffering

    return out[:, :out_dim].astype(jnp.float32)


def make_params(key, input_dim, hidden_dim, output_dim):
    """Deterministic synthetic parameters matching Net.__init__ shapes.

    Linear weights are stored transposed, i.e. (in, out) = PyTorch W^T.
    Layers 1-4 also carry eval-mode BatchNorm1d statistics/affine params.
    """
    dims = [(input_dim, hidden_dim)] + [(hidden_dim, hidden_dim)] * 3 \
           + [(hidden_dim, output_dim)]
    params = []
    for li, (din, dout) in enumerate(dims):
        key, kw, kb, kg, kbeta, km, kv = jax.random.split(key, 7)
        entry = {
            "w": jax.random.normal(kw, (din, dout), jnp.float32) * 0.1,
            "b": jax.random.normal(kb, (dout,), jnp.float32) * 0.05,
        }
        if li < 4:
            entry["gamma"] = 1.0 + 0.1 * jax.random.normal(kg, (dout,), jnp.float32)
            entry["beta"] = 0.05 * jax.random.normal(kbeta, (dout,), jnp.float32)
            entry["mean"] = 0.1 * jax.random.normal(km, (dout,), jnp.float32)
            entry["var"] = 1.0 + 0.1 * jax.random.uniform(kv, (dout,), jnp.float32)
        params.append(entry)
    return params


def fold_and_pad(params, eps=1e-5):
    """Fold eval-mode BN into each Linear, pad features to MXU-friendly lanes,
    cast weights to bf16.

    Padded hidden weight columns and bias entries are zero (so ReLU keeps the
    padded hidden lanes at exactly 0); padded output-logit bias entries are
    -1e30 so the in-kernel log-softmax ignores them.
    """
    mult = _preferred_lane_multiple()
    ws, bs = [], []
    n = len(params)
    for li, p in enumerate(params):
        w, b = p["w"], p["b"]
        if li < n - 1:                                # fold BatchNorm (eval mode)
            s = p["gamma"] / jnp.sqrt(p["var"] + eps)
            t = p["beta"] - p["mean"] * s
            w = w * s[None, :]
            b = b * s + t
        din, dout = w.shape
        din_p = din if li == 0 else _pad_feature(din, mult)
        dout_p = _pad_feature(dout, mult)
        w_p = jnp.zeros((din_p, dout_p), jnp.float32).at[:din, :dout].set(w)
        if li == n - 1:
            b_p = jnp.full((1, dout_p), _NEG_BIG, jnp.float32).at[0, :dout].set(b)
        else:
            b_p = jnp.zeros((1, dout_p), jnp.float32).at[0, :dout].set(b)
        ws.append(w_p.astype(jnp.bfloat16))           # MXU inputs in bf16
        bs.append(b_p)                                # epilogue stays f32
    return {"ws": ws, "bs": bs, "output_dim": params[-1]["w"].shape[1]}


def net_reference_f32(x, params, eps=1e-5):
    """Pure-JAX f32 reference of the original PyTorch eval-mode forward."""
    h = x
    n = len(params)
    for li, p in enumerate(params):
        h = h @ p["w"] + p["b"]
        if li < n - 1:
            s = p["gamma"] / jnp.sqrt(p["var"] + eps)
            t = p["beta"] - p["mean"] * s
            h = jnp.maximum(h * s + t, 0.0)
    return jax.nn.log_softmax(h, axis=1)


def net_reference_matched(x, folded):
    """Pure-JAX reference using the same folded/padded bf16 weights as the kernel."""
    ws, bs = folded["ws"], folded["bs"]
    h = x.astype(jnp.bfloat16)
    for w, b in zip(ws[:-1], bs[:-1]):
        y = jnp.dot(h, w, preferred_element_type=jnp.float32) + b
        h = jnp.maximum(y, 0.0).astype(jnp.bfloat16)
    logits = jnp.dot(h, ws[-1], preferred_element_type=jnp.float32) + bs[-1]
    return jax.nn.log_softmax(logits, axis=1)[:, :folded["output_dim"]]


if __name__ == "__main__":
    B, INPUT_DIM, HIDDEN_DIM, OUTPUT_DIM = 256, 32, 32, 8

    key = jax.random.PRNGKey(0)
    kx, kp = jax.random.split(key)
    x = jax.random.normal(kx, (B, INPUT_DIM), jnp.float32)
    params = make_params(kp, INPUT_DIM, HIDDEN_DIM, OUTPUT_DIM)
    folded = fold_and_pad(params)

    out = net_forward(x, folded)                      # TB=128 -> grid=(2,): both v7x TCs busy
    out = jax.block_until_ready(out)
    assert out.shape == (B, OUTPUT_DIM) and out.dtype == jnp.float32

    # Check against a precision-matched (bf16-input / f32-accum) reference.
    # Tolerance accounts for the bf16 rounding of the stored log-probs.
    ref_matched = net_reference_matched(x, folded)
    assert jnp.allclose(out, ref_matched, atol=2e-2, rtol=2e-2), \
        "mismatch vs precision-matched reference"

    # Looser check against the full-f32 eval-mode reference.
    ref_f32 = net_reference_f32(x, params)
    assert jnp.allclose(out, ref_f32, atol=6e-2, rtol=6e-2), \
        "mismatch vs f32 reference"

    # Rows must be valid log-probabilities (bf16 output -> ~0.5% slack).
    assert jnp.allclose(jnp.exp(out).sum(axis=1), 1.0, atol=1e-2)

    print("KERNEL_OK")
</pallas_src>

<mosaic_0001>
module attributes {stable_mosaic.version = 11 : i64} {
  func.func @_mlp_kernel(%arg0: i32, %arg1: memref<128x32xf32, #tpu.memory_space<vmem>>, %arg2: memref<32x128xbf16, #tpu.memory_space<vmem>>, %arg3: memref<1x128xf32, #tpu.memory_space<vmem>>, %arg4: memref<128x128xbf16, #tpu.memory_space<vmem>>, %arg5: memref<1x128xf32, #tpu.memory_space<vmem>>, %arg6: memref<128x128xbf16, #tpu.memory_space<vmem>>, %arg7: memref<1x128xf32, #tpu.memory_space<vmem>>, %arg8: memref<128x128xbf16, #tpu.memory_space<vmem>>, %arg9: memref<1x128xf32, #tpu.memory_space<vmem>>, %arg10: memref<128x128xbf16, #tpu.memory_space<vmem>>, %arg11: memref<1x128xf32, #tpu.memory_space<vmem>>, %arg12: memref<128x128xbf16, #tpu.memory_space<vmem>>) attributes {dimension_semantics = [#tpu.dimension_semantics<parallel>], iteration_bounds = array<i64: 2>, scalar_prefetch = 0 : i64, scratch_operands = 0 : i64, tpu.core_type = #tpu.core_type<tc>, window_params = [{transform_indices = @transform_0, window_bounds = array<i64: 128, 32>}, {pipeline_mode = #tpu.pipeline_mode<synchronous>, transform_indices = @transform_1, window_bounds = array<i64: 32, 128>}, {pipeline_mode = #tpu.pipeline_mode<synchronous>, transform_indices = @transform_2, window_bounds = array<i64: 1, 128>}, {pipeline_mode = #tpu.pipeline_mode<synchronous>, transform_indices = @transform_3, window_bounds = array<i64: 128, 128>}, {pipeline_mode = #tpu.pipeline_mode<synchronous>, transform_indices = @transform_4, window_bounds = array<i64: 1, 128>}, {pipeline_mode = #tpu.pipeline_mode<synchronous>, transform_indices = @transform_5, window_bounds = array<i64: 128, 128>}, {pipeline_mode = #tpu.pipeline_mode<synchronous>, transform_indices = @transform_6, window_bounds = array<i64: 1, 128>}, {pipeline_mode = #tpu.pipeline_mode<synchronous>, transform_indices = @transform_7, window_bounds = array<i64: 128, 128>}, {pipeline_mode = #tpu.pipeline_mode<synchronous>, transform_indices = @transform_8, window_bounds = array<i64: 1, 128>}, {pipeline_mode = #tpu.pipeline_mode<synchronous>, transform_indices = @transform_9, window_bounds = array<i64: 128, 128>}, {pipeline_mode = #tpu.pipeline_mode<synchronous>, transform_indices = @transform_10, window_bounds = array<i64: 1, 128>}, {transform_indices = @transform_11, window_bounds = array<i64: 128, 128>}]} {
    %c0 = arith.constant 0 : index
    %c0_0 = arith.constant 0 : index
    %0 = vector.load %arg1[%c0, %c0_0] : memref<128x32xf32, #tpu.memory_space<vmem>>, vector<128x32xf32>
    %1 = arith.truncf %0 : vector<128x32xf32> to vector<128x32xbf16>
    %c0_1 = arith.constant 0 : index
    %c0_2 = arith.constant 0 : index
    %2 = vector.load %arg2[%c0_1, %c0_2] : memref<32x128xbf16, #tpu.memory_space<vmem>>, vector<32x128xbf16>
    %cst = arith.constant dense<0.000000e+00> : vector<128x128xf32>
    %3 = tpu.matmul %1, %2, %cst {dimension_numbers = #tpu.dot_dimension_numbers<[1], [0], [0], [1], [0, 0, 1, 1], [], []>} : vector<128x32xbf16>, vector<32x128xbf16>, vector<128x128xf32> -> vector<128x128xf32>
    %c0_3 = arith.constant 0 : index
    %c0_4 = arith.constant 0 : index
    %4 = vector.load %arg3[%c0_3, %c0_4] : memref<1x128xf32, #tpu.memory_space<vmem>>, vector<1x128xf32>
    %5 = vector.broadcast %4 : vector<1x128xf32> to vector<128x128xf32>
    %6 = arith.addf %3, %5 : vector<128x128xf32>
    %cst_5 = arith.constant 0.000000e+00 : f32
    %7 = vector.broadcast %cst_5 : f32 to vector<128x128xf32>
    %8 = arith.maximumf %6, %7 : vector<128x128xf32>
    %9 = arith.truncf %8 : vector<128x128xf32> to vector<128x128xbf16>
    %c0_6 = arith.constant 0 : index
    %c0_7 = arith.constant 0 : index
    %10 = vector.load %arg4[%c0_6, %c0_7] : memref<128x128xbf16, #tpu.memory_space<vmem>>, vector<128x128xbf16>
    %cst_8 = arith.constant dense<0.000000e+00> : vector<128x128xf32>
    %11 = tpu.matmul %9, %10, %cst_8 {dimension_numbers = #tpu.dot_dimension_numbers<[1], [0], [0], [1], [0, 0, 1, 1], [], []>} : vector<128x128xbf16>, vector<128x128xbf16>, vector<128x128xf32> -> vector<128x128xf32>
    %c0_9 = arith.constant 0 : index
    %c0_10 = arith.constant 0 : index
    %12 = vector.load %arg5[%c0_9, %c0_10] : memref<1x128xf32, #tpu.memory_space<vmem>>, vector<1x128xf32>
    %13 = vector.broadcast %12 : vector<1x128xf32> to vector<128x128xf32>
    %14 = arith.addf %11, %13 : vector<128x128xf32>
    %cst_11 = arith.constant 0.000000e+00 : f32
    %15 = vector.broadcast %cst_11 : f32 to vector<128x128xf32>
    %16 = arith.maximumf %14, %15 : vector<128x128xf32>
    %17 = arith.truncf %16 : vector<128x128xf32> to vector<128x128xbf16>
    %c0_12 = arith.constant 0 : index
    %c0_13 = arith.constant 0 : index
    %18 = vector.load %arg6[%c0_12, %c0_13] : memref<128x128xbf16, #tpu.memory_space<vmem>>, vector<128x128xbf16>
    %cst_14 = arith.constant dense<0.000000e+00> : vector<128x128xf32>
    %19 = tpu.matmul %17, %18, %cst_14 {dimension_numbers = #tpu.dot_dimension_numbers<[1], [0], [0], [1], [0, 0, 1, 1], [], []>} : vector<128x128xbf16>, vector<128x128xbf16>, vector<128x128xf32> -> vector<128x128xf32>
    %c0_15 = arith.constant 0 : index
    %c0_16 = arith.constant 0 : index
    %20 = vector.load %arg7[%c0_15, %c0_16] : memref<1x128xf32, #tpu.memory_space<vmem>>, vector<1x128xf32>
    %21 = vector.broadcast %20 : vector<1x128xf32> to vector<128x128xf32>
    %22 = arith.addf %19, %21 : vector<128x128xf32>
    %cst_17 = arith.constant 0.000000e+00 : f32
    %23 = vector.broadcast %cst_17 : f32 to vector<128x128xf32>
    %24 = arith.maximumf %22, %23 : vector<128x128xf32>
    %25 = arith.truncf %24 : vector<128x128xf32> to vector<128x128xbf16>
    %c0_18 = arith.constant 0 : index
    %c0_19 = arith.constant 0 : index
    %26 = vector.load %arg8[%c0_18, %c0_19] : memref<128x128xbf16, #tpu.memory_space<vmem>>, vector<128x128xbf16>
    %cst_20 = arith.constant dense<0.000000e+00> : vector<128x128xf32>
    %27 = tpu.matmul %25, %26, %cst_20 {dimension_numbers = #tpu.dot_dimension_numbers<[1], [0], [0], [1], [0, 0, 1, 1], [], []>} : vector<128x128xbf16>, vector<128x128xbf16>, vector<128x128xf32> -> vector<128x128xf32>
    %c0_21 = arith.constant 0 : index
    %c0_22 = arith.constant 0 : index
    %28 = vector.load %arg9[%c0_21, %c0_22] : memref<1x128xf32, #tpu.memory_space<vmem>>, vector<1x128xf32>
    %29 = vector.broadcast %28 : vector<1x128xf32> to vector<128x128xf32>
    %30 = arith.addf %27, %29 : vector<128x128xf32>
    %cst_23 = arith.constant 0.000000e+00 : f32
    %31 = vector.broadcast %cst_23 : f32 to vector<128x128xf32>
    %32 = arith.maximumf %30, %31 : vector<128x128xf32>
    %33 = arith.truncf %32 : vector<128x128xf32> to vector<128x128xbf16>
    %c0_24 = arith.constant 0 : index
    %c0_25 = arith.constant 0 : index
    %34 = vector.load %arg10[%c0_24, %c0_25] : memref<128x128xbf16, #tpu.memory_space<vmem>>, vector<128x128xbf16>
    %cst_26 = arith.constant dense<0.000000e+00> : vector<128x128xf32>
    %35 = tpu.matmul %33, %34, %cst_26 {dimension_numbers = #tpu.dot_dimension_numbers<[1], [0], [0], [1], [0, 0, 1, 1], [], []>} : vector<128x128xbf16>, vector<128x128xbf16>, vector<128x128xf32> -> vector<128x128xf32>
    %c0_27 = arith.constant 0 : index
    %c0_28 = arith.constant 0 : index
    %36 = vector.load %arg11[%c0_27, %c0_28] : memref<1x128xf32, #tpu.memory_space<vmem>>, vector<1x128xf32>
    %37 = vector.broadcast %36 : vector<1x128xf32> to vector<128x128xf32>
    %38 = arith.addf %35, %37 : vector<128x128xf32>
    %cst_29 = arith.constant dense<0xFF800000> : vector<128xf32>
    %39 = vector.multi_reduction <maximumf>, %38, %cst_29 [1] : vector<128x128xf32> to vector<128xf32>
    %40 = vector.shape_cast %39 : vector<128xf32> to vector<128x1xf32>
    %41 = vector.broadcast %40 : vector<128x1xf32> to vector<128x128xf32>
    %42 = arith.subf %38, %41 : vector<128x128xf32>
    %43 = math.exp %42 : vector<128x128xf32>
    %cst_30 = arith.constant dense<0.000000e+00> : vector<128xf32>
    %44 = vector.multi_reduction <add>, %43, %cst_30 [1] : vector<128x128xf32> to vector<128xf32>
    %45 = vector.shape_cast %44 : vector<128xf32> to vector<128x1xf32>
    %46 = math.log %45 : vector<128x1xf32>
    %47 = vector.broadcast %46 : vector<128x1xf32> to vector<128x128xf32>
    %48 = arith.subf %42, %47 : vector<128x128xf32>
    %49 = arith.truncf %48 : vector<128x128xf32> to vector<128x128xbf16>
    %c0_31 = arith.constant 0 : index
    %c0_32 = arith.constant 0 : index
    %50 = vector.load %arg12[%c0_31, %c0_32] : memref<128x128xbf16, #tpu.memory_space<vmem>>, vector<128x128xbf16>
    tpu.vector_store %arg12[%c0_31, %c0_32], %49 {strides = array<i32>} : memref<128x128xbf16, #tpu.memory_space<vmem>>, vector<128x128xbf16>,
    return
  }
  func.func @transform_0(%arg0: i32) -> (i32, i32) {
    %c0_i32 = arith.constant 0 : i32
    %c0_i32_0 = arith.constant 0 : i32
    return %arg0, %c0_i32 : i32, i32
  }
  func.func @transform_1(%arg0: i32) -> (i32, i32) {
    %c0_i32 = arith.constant 0 : i32
    %c0_i32_0 = arith.constant 0 : i32
    %c0_i32_1 = arith.constant 0 : i32
    return %c0_i32, %c0_i32_0 : i32, i32
  }
  func.func @transform_2(%arg0: i32) -> (i32, i32) {
    %c0_i32 = arith.constant 0 : i32
    %c0_i32_0 = arith.constant 0 : i32
    %c0_i32_1 = arith.constant 0 : i32
    return %c0_i32, %c0_i32_0 : i32, i32
  }
  func.func @transform_3(%arg0: i32) -> (i32, i32) {
    %c0_i32 = arith.constant 0 : i32
    %c0_i32_0 = arith.constant 0 : i32
    %c0_i32_1 = arith.constant 0 : i32
    return %c0_i32, %c0_i32_0 : i32, i32
  }
  func.func @transform_4(%arg0: i32) -> (i32, i32) {
    %c0_i32 = arith.constant 0 : i32
    %c0_i32_0 = arith.constant 0 : i32
    %c0_i32_1 = arith.constant 0 : i32
    return %c0_i32, %c0_i32_0 : i32, i32
  }
  func.func @transform_5(%arg0: i32) -> (i32, i32) {
    %c0_i32 = arith.constant 0 : i32
    %c0_i32_0 = arith.constant 0 : i32
    %c0_i32_1 = arith.constant 0 : i32
    return %c0_i32, %c0_i32_0 : i32, i32
  }
  func.func @transform_6(%arg0: i32) -> (i32, i32) {
    %c0_i32 = arith.constant 0 : i32
    %c0_i32_0 = arith.constant 0 : i32
    %c0_i32_1 = arith.constant 0 : i32
    return %c0_i32, %c0_i32_0 : i32, i32
  }
  func.func @transform_7(%arg0: i32) -> (i32, i32) {
    %c0_i32 = arith.constant 0 : i32
    %c0_i32_0 = arith.constant 0 : i32
    %c0_i32_1 = arith.constant 0 : i32
    return %c0_i32, %c0_i32_0 : i32, i32
  }
  func.func @transform_8(%arg0: i32) -> (i32, i32) {
    %c0_i32 = arith.constant 0 : i32
    %c0_i32_0 = arith.constant 0 : i32
    %c0_i32_1 = arith.constant 0 : i32
    return %c0_i32, %c0_i32_0 : i32, i32
  }
  func.func @transform_9(%arg0: i32) -> (i32, i32) {
    %c0_i32 = arith.constant 0 : i32
    %c0_i32_0 = arith.constant 0 : i32
    %c0_i32_1 = arith.constant 0 : i32
    return %c0_i32, %c0_i32_0 : i32, i32
  }
  func.func @transform_10(%arg0: i32) -> (i32, i32) {
    %c0_i32 = arith.constant 0 : i32
    %c0_i32_0 = arith.constant 0 : i32
    %c0_i32_1 = arith.constant 0 : i32
    return %c0_i32, %c0_i32_0 : i32, i32
  }
  func.func @transform_11(%arg0: i32) -> (i32, i32) {
    %c0_i32 = arith.constant 0 : i32
    %c0_i32_0 = arith.constant 0 : i32
    return %arg0, %c0_i32 : i32, i32
  }
}

module attributes {stable_mosaic.version = 11 : i64} {
  func.func @_mlp_kernel(%arg0: i32, %arg1: memref<128x32xf32, #tpu.memory_space<vmem>>, %arg2: memref<32x128xbf16, #tpu.memory_space<vmem>>, %arg3: memref<1x128xf32, #tpu.memory_space<vmem>>, %arg4: memref<128x128xbf16, #tpu.memory_space<vmem>>, %arg5: memref<1x128xf32, #tpu.memory_space<vmem>>, %arg6: memref<128x128xbf16, #tpu.memory_space<vmem>>, %arg7: memref<1x128xf32, #tpu.memory_space<vmem>>, %arg8: memref<128x128xbf16, #tpu.memory_space<vmem>>, %arg9: memref<1x128xf32, #tpu.memory_space<vmem>>, %arg10: memref<128x128xbf16, #tpu.memory_space<vmem>>, %arg11: memref<1x128xf32, #tpu.memory_space<vmem>>, %arg12: memref<128x128xbf16, #tpu.memory_space<vmem>>) attributes {dimension_semantics = [#tpu.dimension_semantics<parallel>], iteration_bounds = array<i64: 2>, scalar_prefetch = 0 : i64, scratch_operands = 0 : i64, tpu.core_type = #tpu.core_type<tc>, window_params = [{transform_indices = @transform_0, window_bounds = array<i64: 128, 32>}, {pipeline_mode = #tpu.pipeline_mode<synchronous>, transform_indices = @transform_1, window_bounds = array<i64: 32, 128>}, {pipeline_mode = #tpu.pipeline_mode<synchronous>, transform_indices = @transform_2, window_bounds = array<i64: 1, 128>}, {pipeline_mode = #tpu.pipeline_mode<synchronous>, transform_indices = @transform_3, window_bounds = array<i64: 128, 128>}, {pipeline_mode = #tpu.pipeline_mode<synchronous>, transform_indices = @transform_4, window_bounds = array<i64: 1, 128>}, {pipeline_mode = #tpu.pipeline_mode<synchronous>, transform_indices = @transform_5, window_bounds = array<i64: 128, 128>}, {pipeline_mode = #tpu.pipeline_mode<synchronous>, transform_indices = @transform_6, window_bounds = array<i64: 1, 128>}, {pipeline_mode = #tpu.pipeline_mode<synchronous>, transform_indices = @transform_7, window_bounds = array<i64: 128, 128>}, {pipeline_mode = #tpu.pipeline_mode<synchronous>, transform_indices = @transform_8, window_bounds = array<i64: 1, 128>}, {pipeline_mode = #tpu.pipeline_mode<synchronous>, transform_indices = @transform_9, window_bounds = array<i64: 128, 128>}, {pipeline_mode = #tpu.pipeline_mode<synchronous>, transform_indices = @transform_10, window_bounds = array<i64: 1, 128>}, {transform_indices = @transform_11, window_bounds = array<i64: 128, 128>}]} {
    %c0 = arith.constant 0 : index
    %c0_0 = arith.constant 0 : index
    %0 = vector.load %arg1[%c0, %c0_0] : memref<128x32xf32, #tpu.memory_space<vmem>>, vector<128x32xf32>
    %1 = arith.truncf %0 : vector<128x32xf32> to vector<128x32xbf16>
    %c0_1 = arith.constant 0 : index
    %c0_2 = arith.constant 0 : index
    %2 = vector.load %arg2[%c0_1, %c0_2] : memref<32x128xbf16, #tpu.memory_space<vmem>>, vector<32x128xbf16>
    %cst = arith.constant dense<0.000000e+00> : vector<128x128xf32>
    %3 = tpu.matmul %1, %2, %cst {dimension_numbers = #tpu.dot_dimension_numbers<[1], [0], [0], [1], [0, 0, 1, 1], [], []>} : vector<128x32xbf16>, vector<32x128xbf16>, vector<128x128xf32> -> vector<128x128xf32>
    %c0_3 = arith.constant 0 : index
    %c0_4 = arith.constant 0 : index
    %4 = vector.load %arg3[%c0_3, %c0_4] : memref<1x128xf32, #tpu.memory_space<vmem>>, vector<1x128xf32>
    %5 = vector.broadcast %4 : vector<1x128xf32> to vector<128x128xf32>
    %6 = arith.addf %3, %5 : vector<128x128xf32>
    %cst_5 = arith.constant 0.000000e+00 : f32
    %7 = vector.broadcast %cst_5 : f32 to vector<128x128xf32>
    %8 = arith.maximumf %6, %7 : vector<128x128xf32>
    %9 = arith.truncf %8 : vector<128x128xf32> to vector<128x128xbf16>
    %c0_6 = arith.constant 0 : index
    %c0_7 = arith.constant 0 : index
    %10 = vector.load %arg4[%c0_6, %c0_7] : memref<128x128xbf16, #tpu.memory_space<vmem>>, vector<128x128xbf16>
    %cst_8 = arith.constant dense<0.000000e+00> : vector<128x128xf32>
    %11 = tpu.matmul %9, %10, %cst_8 {dimension_numbers = #tpu.dot_dimension_numbers<[1], [0], [0], [1], [0, 0, 1, 1], [], []>} : vector<128x128xbf16>, vector<128x128xbf16>, vector<128x128xf32> -> vector<128x128xf32>
    %c0_9 = arith.constant 0 : index
    %c0_10 = arith.constant 0 : index
    %12 = vector.load %arg5[%c0_9, %c0_10] : memref<1x128xf32, #tpu.memory_space<vmem>>, vector<1x128xf32>
    %13 = vector.broadcast %12 : vector<1x128xf32> to vector<128x128xf32>
    %14 = arith.addf %11, %13 : vector<128x128xf32>
    %cst_11 = arith.constant 0.000000e+00 : f32
    %15 = vector.broadcast %cst_11 : f32 to vector<128x128xf32>
    %16 = arith.maximumf %14, %15 : vector<128x128xf32>
    %17 = arith.truncf %16 : vector<128x128xf32> to vector<128x128xbf16>
    %c0_12 = arith.constant 0 : index
    %c0_13 = arith.constant 0 : index
    %18 = vector.load %arg6[%c0_12, %c0_13] : memref<128x128xbf16, #tpu.memory_space<vmem>>, vector<128x128xbf16>
    %cst_14 = arith.constant dense<0.000000e+00> : vector<128x128xf32>
    %19 = tpu.matmul %17, %18, %cst_14 {dimension_numbers = #tpu.dot_dimension_numbers<[1], [0], [0], [1], [0, 0, 1, 1], [], []>} : vector<128x128xbf16>, vector<128x128xbf16>, vector<128x128xf32> -> vector<128x128xf32>
    %c0_15 = arith.constant 0 : index
    %c0_16 = arith.constant 0 : index
    %20 = vector.load %arg7[%c0_15, %c0_16] : memref<1x128xf32, #tpu.memory_space<vmem>>, vector<1x128xf32>
    %21 = vector.broadcast %20 : vector<1x128xf32> to vector<128x128xf32>
    %22 = arith.addf %19, %21 : vector<128x128xf32>
    %cst_17 = arith.constant 0.000000e+00 : f32
    %23 = vector.broadcast %cst_17 : f32 to vector<128x128xf32>
    %24 = arith.maximumf %22, %23 : vector<128x128xf32>
    %25 = arith.truncf %24 : vector<128x128xf32> to vector<128x128xbf16>
    %c0_18 = arith.constant 0 : index
    %c0_19 = arith.constant 0 : index
    %26 = vector.load %arg8[%c0_18, %c0_19] : memref<128x128xbf16, #tpu.memory_space<vmem>>, vector<128x128xbf16>
    %cst_20 = arith.constant dense<0.000000e+00> : vector<128x128xf32>
    %27 = tpu.matmul %25, %26, %cst_20 {dimension_numbers = #tpu.dot_dimension_numbers<[1], [0], [0], [1], [0, 0, 1, 1], [], []>} : vector<128x128xbf16>, vector<128x128xbf16>, vector<128x128xf32> -> vector<128x128xf32>
    %c0_21 = arith.constant 0 : index
    %c0_22 = arith.constant 0 : index
    %28 = vector.load %arg9[%c0_21, %c0_22] : memref<1x128xf32, #tpu.memory_space<vmem>>, vector<1x128xf32>
    %29 = vector.broadcast %28 : vector<1x128xf32> to vector<128x128xf32>
    %30 = arith.addf %27, %29 : vector<128x128xf32>
    %cst_23 = arith.constant 0.000000e+00 : f32
    %31 = vector.broadcast %cst_23 : f32 to vector<128x128xf32>
    %32 = arith.maximumf %30, %31 : vector<128x128xf32>
    %33 = arith.truncf %32 : vector<128x128xf32> to vector<128x128xbf16>
    %c0_24 = arith.constant 0 : index
    %c0_25 = arith.constant 0 : index
    %34 = vector.load %arg10[%c0_24, %c0_25] : memref<128x128xbf16, #tpu.memory_space<vmem>>, vector<128x128xbf16>
    %cst_26 = arith.constant dense<0.000000e+00> : vector<128x128xf32>
    %35 = tpu.matmul %33, %34, %cst_26 {dimension_numbers = #tpu.dot_dimension_numbers<[1], [0], [0], [1], [0, 0, 1, 1], [], []>} : vector<128x128xbf16>, vector<128x128xbf16>, vector<128x128xf32> -> vector<128x128xf32>
    %c0_27 = arith.constant 0 : index
    %c0_28 = arith.constant 0 : index
    %36 = vector.load %arg11[%c0_27, %c0_28] : memref<1x128xf32, #tpu.memory_space<vmem>>, vector<1x128xf32>
    %37 = vector.broadcast %36 : vector<1x128xf32> to vector<128x128xf32>
    %38 = arith.addf %35, %37 : vector<128x128xf32>
    %cst_29 = arith.constant dense<0xFF800000> : vector<128xf32>
    %39 = vector.multi_reduction <maximumf>, %38, %cst_29 [1] : vector<128x128xf32> to vector<128xf32>
    %40 = vector.shape_cast %39 : vector<128xf32> to vector<128x1xf32>
    %41 = vector.broadcast %40 : vector<128x1xf32> to vector<128x128xf32>
    %42 = arith.subf %38, %41 : vector<128x128xf32>
    %43 = math.exp %42 : vector<128x128xf32>
    %cst_30 = arith.constant dense<0.000000e+00> : vector<128xf32>
    %44 = vector.multi_reduction <add>, %43, %cst_30 [1] : vector<128x128xf32> to vector<128xf32>
    %45 = vector.shape_cast %44 : vector<128xf32> to vector<128x1xf32>
    %46 = math.log %45 : vector<128x1xf32>
    %47 = vector.broadcast %46 : vector<128x1xf32> to vector<128x128xf32>
    %48 = arith.subf %42, %47 : vector<128x128xf32>
    %49 = arith.truncf %48 : vector<128x128xf32> to vector<128x128xbf16>
    %c0_31 = arith.constant 0 : index
    %c0_32 = arith.constant 0 : index
    %50 = vector.load %arg12[%c0_31, %c0_32] : memref<128x128xbf16, #tpu.memory_space<vmem>>, vector<128x128xbf16>
    tpu.vector_store %arg12[%c0_31, %c0_32], %49 {strides = array<i32>} : memref<128x128xbf16, #tpu.memory_space<vmem>>, vector<128x128xbf16>,
    return
  }
  func.func @transform_0(%arg0: i32) -> (i32, i32) {
    %c0_i32 = arith.constant 0 : i32
    %c0_i32_0 = arith.constant 0 : i32
    return %arg0, %c0_i32 : i32, i32
  }
  func.func @transform_1(%arg0: i32) -> (i32, i32) {
    %c0_i32 = arith.constant 0 : i32
    %c0_i32_0 = arith.constant 0 : i32
    %c0_i32_1 = arith.constant 0 : i32
    return %c0_i32, %c0_i32_0 : i32, i32
  }
  func.func @transform_2(%arg0: i32) -> (i32, i32) {
    %c0_i32 = arith.constant 0 : i32
    %c0_i32_0 = arith.constant 0 : i32
    %c0_i32_1 = arith.constant 0 : i32
    return %c0_i32, %c0_i32_0 : i32, i32
  }
  func.func @transform_3(%arg0: i32) -> (i32, i32) {
    %c0_i32 = arith.constant 0 : i32
    %c0_i32_0 = arith.constant 0 : i32
    %c0_i32_1 = arith.constant 0 : i32
    return %c0_i32, %c0_i32_0 : i32, i32
  }
  func.func @transform_4(%arg0: i32) -> (i32, i32) {
    %c0_i32 = arith.constant 0 : i32
    %c0_i32_0 = arith.constant 0 : i32
    %c0_i32_1 = arith.constant 0 : i32
    return %c0_i32, %c0_i32_0 : i32, i32
  }
  func.func @transform_5(%arg0: i32) -> (i32, i32) {
    %c0_i32 = arith.constant 0 : i32
    %c0_i32_0 = arith.constant 0 : i32
    %c0_i32_1 = arith.constant 0 : i32
    return %c0_i32, %c0_i32_0 : i32, i32
  }
  func.func @transform_6(%arg0: i32) -> (i32, i32) {
    %c0_i32 = arith.constant 0 : i32
    %c0_i32_0 = arith.constant 0 : i32
    %c0_i32_1 = arith.constant 0 : i32
    return %c0_i32, %c0_i32_0 : i32, i32
  }
  func.func @transform_7(%arg0: i32) -> (i32, i32) {
    %c0_i32 = arith.constant 0 : i32
    %c0_i32_0 = arith.constant 0 : i32
    %c0_i32_1 = arith.constant 0 : i32
    return %c0_i32, %c0_i32_0 : i32, i32
  }
  func.func @transform_8(%arg0: i32) -> (i32, i32) {
    %c0_i32 = arith.constant 0 : i32
    %c0_i32_0 = arith.constant 0 : i32
    %c0_i32_1 = arith.constant 0 : i32
    return %c0_i32, %c0_i32_0 : i32, i32
  }
  func.func @transform_9(%arg0: i32) -> (i32, i32) {
    %c0_i32 = arith.constant 0 : i32
    %c0_i32_0 = arith.constant 0 : i32
    %c0_i32_1 = arith.constant 0 : i32
    return %c0_i32, %c0_i32_0 : i32, i32
  }
  func.func @transform_10(%arg0: i32) -> (i32, i32) {
    %c0_i32 = arith.constant 0 : i32
    %c0_i32_0 = arith.constant 0 : i32
    %c0_i32_1 = arith.constant 0 : i32
    return %c0_i32, %c0_i32_0 : i32, i32
  }
  func.func @transform_11(%arg0: i32) -> (i32, i32) {
    %c0_i32 = arith.constant 0 : i32
    %c0_i32_0 = arith.constant 0 : i32
    return %arg0, %c0_i32 : i32, i32
  }
}

</mosaic_0001>

<llo_original>
// kernel: tpu_custom_call.1
$region0: #{tpu_custom_call.1}
  #allocation0 [shape = 'u32[]', space=smem, size = 0x4, offset = 0x4, fixed_abs, tag = 'smem constant byte address 0x4 - core index']
  #allocation1 [shape = 'u32[144,128]{1,0:T(1,128)}', space=vmem, size = 0x12000, scoped, tag = 'internal scratch']
  %s0 = inlined_call_operand.vmem [shape: f32[256,32], index: 0, kind: input, shape index: {}]
  %s1 = inlined_call_operand.vmem [shape: bf16[32,128], index: 1, kind: input, shape index: {}]
  %s2 = inlined_call_operand.vmem [shape: f32[1,128], index: 2, kind: input, shape index: {}]
  %s3 = inlined_call_operand.vmem [shape: bf16[128,128], index: 3, kind: input, shape index: {}]
  %s4 = inlined_call_operand.vmem [shape: f32[1,128], index: 4, kind: input, shape index: {}]
  %s5 = inlined_call_operand.vmem [shape: bf16[128,128], index: 5, kind: input, shape index: {}]
  %s6 = inlined_call_operand.vmem [shape: f32[1,128], index: 6, kind: input, shape index: {}]
  %s7 = inlined_call_operand.vmem [shape: bf16[128,128], index: 7, kind: input, shape index: {}]
  %s8 = inlined_call_operand.vmem [shape: f32[1,128], index: 8, kind: input, shape index: {}]
  %s9 = inlined_call_operand.vmem [shape: bf16[128,128], index: 9, kind: input, shape index: {}]
  %s10 = inlined_call_operand.vmem [shape: f32[1,128], index: 10, kind: input, shape index: {}]
  %s11 = inlined_call_operand.hbm [shape: bf16[256,128], index: 11, kind: output, shape index: {}]
  %s12 = sld [smem:[#allocation0]]
  $region77: #{tpu_custom_call.1} parent=0
    _
  %s14 = ssub.s32 1, %s12
  %s15 = scalar_select 0, %s14, %s12
  $region1: #{tpu_custom_call.1} parent=0
    #allocation2 [shape = 'u8[65536]{0}', space=vmem, size = 0x10000, scoped, tag = 'output window, operand 0']
    #allocation3 [shape = 's32[2]{0}', space=sflag, size = 0x8, scoped, tag = 'scoped memory for tpu_custom_call.1']
    %16 = vsyncpa [#allocation3], 0
    %s17 = scalar_lea.sflag [#allocation3], 1
    %18 = vsyncpa %s17, 0
    loop: start=0, step=1, limit=4
    $region2: #{tpu_custom_call.1} parent=1 // loop_pre_header
      _
    $region3: #{tpu_custom_call.1} parent=1 // loop_header
      %s20 = sphi 0, %s24
      %p21 = scmp.ge.s32.totalorder %s20, 4
      %s30 = sphi 0, %s32
      %s33 = sphi 0, %s30
      %s34 = sphi 0, %s33
      %s50 = sphi 0, %s34
      %s54 = sphi 0, %s54
      %s56 = sphi 0, %s54
      %s57 = sphi 0, %s56
      %s71 = sphi 0, %s57
      %s75 = sphi 0, %s75
      %s77 = sphi 0, %s75
      %s78 = sphi 0, %s77
      %s92 = sphi 0, %s78
      %s96 = sphi 0, %s96
      %s98 = sphi 0, %s96
      %s99 = sphi 0, %s98
      %s113 = sphi 0, %s99
      %s117 = sphi 0, %s117
      %s119 = sphi 0, %s117
      %s120 = sphi 0, %s119
      %s134 = sphi 0, %s120
      %s138 = sphi 0, %s138
      %s140 = sphi 0, %s138
      %s141 = sphi 0, %s140
      %s155 = sphi 0, %s141
      %s159 = sphi 0, %s159
      %s161 = sphi 0, %s159
      %s162 = sphi 0, %s161
      %s176 = sphi 0, %s162
      %s180 = sphi 0, %s180
      %s182 = sphi 0, %s180
      %s183 = sphi 0, %s182
      %s197 = sphi 0, %s183
      %s201 = sphi 0, %s201
      %s203 = sphi 0, %s201
      %s204 = sphi 0, %s203
      %s218 = sphi 0, %s204
      %s222 = sphi 0, %s222
      %s224 = sphi 0, %s222
      %s225 = sphi 0, %s224
      %s239 = sphi 0, %s225
      %s243 = sphi 0, %s243
      %s245 = sphi 0, %s243
      %s246 = sphi 0, %s245
      %s260 = sphi 0, %s246
      %s266 = sphi 0, %s268
      %s269 = sphi 0, %s266
      %s270 = sphi 0, %s269
      %s286 = sphi 0, %s270
    $region4: #{tpu_custom_call.1} parent=1 // loop_header_branch
      %23 = sbr.rel (%p21) target = $region8
    $region5: #{tpu_custom_call.1} parent=1 // loop_body
      %s25 = ssub.s32 %s20, 1
      %s26 = ssub.s32 %s20, 2
      %s27 = sadd.s32 %s20, 1
      %s28 = ssub.s32 %s20, %s27
      %p29 = scmp.eq.s32.totalorder %s28, 0
      %s31 = sadd.s32 %s30, 1
      %s32 = scalar_select %p29, %s30, %s31
      %p35 = pneg %p29
      %p36 = scmp.eq.s32.totalorder %s20, 1
      %p37 = por %p35, %p36
      %p38 = scmp.ne.s32.totalorder %s30, %s33
      %p39 = scmp.eq.s32.totalorder %s20, 0
      %p40 = por %p38, %p39
      %p41 = scmp.ne.s32.totalorder %s30, %s33
      %p42 = scmp.eq.s32.totalorder %s25, 1
      %p43 = por %p41, %p42
      %p44 = scmp.ne.s32.totalorder %s33, %s34
      %p45 = scmp.eq.s32.totalorder %s25, 0
      %p46 = por %p44, %p45
      %p47 = scmp.ne.s32.totalorder %s33, %s34
      %p48 = scmp.eq.s32.totalorder %s26, 1
      %p49 = por %p47, %p48
      %p51 = scmp.ne.s32.totalorder %s34, %s50
      %p52 = scmp.eq.s32.totalorder %s26, 0
      %p53 = por %p51, %p52
      %s55 = sadd.s32 %s54, 1
      %p58 = scmp.eq.s32.totalorder %s20, 1
      %p59 = scmp.ne.s32.totalorder %s54, %s56
      %p60 = scmp.eq.s32.totalorder %s20, 0
      %p61 = por %p59, %p60
      %p62 = scmp.ne.s32.totalorder %s54, %s56
      %p63 = scmp.eq.s32.totalorder %s25, 1
      %p64 = por %p62, %p63
      %p65 = scmp.ne.s32.totalorder %s56, %s57
      %p66 = scmp.eq.s32.totalorder %s25, 0
      %p67 = por %p65, %p66
      %p68 = scmp.ne.s32.totalorder %s56, %s57
      %p69 = scmp.eq.s32.totalorder %s26, 1
      %p70 = por %p68, %p69
      %p72 = scmp.ne.s32.totalorder %s57, %s71
      %p73 = scmp.eq.s32.totalorder %s26, 0
      %p74 = por %p72, %p73
      %s76 = sadd.s32 %s75, 1
      %p79 = scmp.eq.s32.totalorder %s20, 1
      %p80 = scmp.ne.s32.totalorder %s75, %s77
      %p81 = scmp.eq.s32.totalorder %s20, 0
      %p82 = por %p80, %p81
      %p83 = scmp.ne.s32.totalorder %s75, %s77
      %p84 = scmp.eq.s32.totalorder %s25, 1
      %p85 = por %p83, %p84
      %p86 = scmp.ne.s32.totalorder %s77, %s78
      %p87 = scmp.eq.s32.totalorder %s25, 0
      %p88 = por %p86, %p87
      %p89 = scmp.ne.s32.totalorder %s77, %s78
      %p90 = scmp.eq.s32.totalorder %s26, 1
      %p91 = por %p89, %p90
      %p93 = scmp.ne.s32.totalorder %s78, %s92
      %p94 = scmp.eq.s32.totalorder %s26, 0
      %p95 = por %p93, %p94
      %s97 = sadd.s32 %s96, 1
      %p100 = scmp.eq.s32.totalorder %s20, 1
      %p101 = scmp.ne.s32.totalorder %s96, %s98
      %p102 = scmp.eq.s32.totalorder %s20, 0
      %p103 = por %p101, %p102
      %p104 = scmp.ne.s32.totalorder %s96, %s98
      %p105 = scmp.eq.s32.totalorder %s25, 1
      %p106 = por %p104, %p105
      %p107 = scmp.ne.s32.totalorder %s98, %s99
      %p108 = scmp.eq.s32.totalorder %s25, 0
      %p109 = por %p107, %p108
      %p110 = scmp.ne.s32.totalorder %s98, %s99
      %p111 = scmp.eq.s32.totalorder %s26, 1
      %p112 = por %p110, %p111
      %p114 = scmp.ne.s32.totalorder %s99, %s113
      %p115 = scmp.eq.s32.totalorder %s26, 0
      %p116 = por %p114, %p115
      %s118 = sadd.s32 %s117, 1
      %p121 = scmp.eq.s32.totalorder %s20, 1
      %p122 = scmp.ne.s32.totalorder %s117, %s119
      %p123 = scmp.eq.s32.totalorder %s20, 0
      %p124 = por %p122, %p123
      %p125 = scmp.ne.s32.totalorder %s117, %s119
      %p126 = scmp.eq.s32.totalorder %s25, 1
      %p127 = por %p125, %p126
      %p128 = scmp.ne.s32.totalorder %s119, %s120
      %p129 = scmp.eq.s32.totalorder %s25, 0
      %p130 = por %p128, %p129
      %p131 = scmp.ne.s32.totalorder %s119, %s120
      %p132 = scmp.eq.s32.totalorder %s26, 1
      %p133 = por %p131, %p132
      %p135 = scmp.ne.s32.totalorder %s120, %s134
      %p136 = scmp.eq.s32.totalorder %s26, 0
      %p137 = por %p135, %p136
      %s139 = sadd.s32 %s138, 1
      %p142 = scmp.eq.s32.totalorder %s20, 1
      %p143 = scmp.ne.s32.totalorder %s138, %s140
      %p144 = scmp.eq.s32.totalorder %s20, 0
      %p145 = por %p143, %p144
      %p146 = scmp.ne.s32.totalorder %s138, %s140
      %p147 = scmp.eq.s32.totalorder %s25, 1
      %p148 = por %p146, %p147
      %p149 = scmp.ne.s32.totalorder %s140, %s141
      %p150 = scmp.eq.s32.totalorder %s25, 0
      %p151 = por %p149, %p150
      %p152 = scmp.ne.s32.totalorder %s140, %s141
      %p153 = scmp.eq.s32.totalorder %s26, 1
      %p154 = por %p152, %p153
      %p156 = scmp.ne.s32.totalorder %s141, %s155
      %p157 = scmp.eq.s32.totalorder %s26, 0
      %p158 = por %p156, %p157
      %s160 = sadd.s32 %s159, 1
      %p163 = scmp.eq.s32.totalorder %s20, 1
      %p164 = scmp.ne.s32.totalorder %s159, %s161
      %p165 = scmp.eq.s32.totalorder %s20, 0
      %p166 = por %p164, %p165
      %p167 = scmp.ne.s32.totalorder %s159, %s161
      %p168 = scmp.eq.s32.totalorder %s25, 1
      %p169 = por %p167, %p168
      %p170 = scmp.ne.s32.totalorder %s161, %s162
      %p171 = scmp.eq.s32.totalorder %s25, 0
      %p172 = por %p170, %p171
      %p173 = scmp.ne.s32.totalorder %s161, %s162
      %p174 = scmp.eq.s32.totalorder %s26, 1
      %p175 = por %p173, %p174
      %p177 = scmp.ne.s32.totalorder %s162, %s176
      %p178 = scmp.eq.s32.totalorder %s26, 0
      %p179 = por %p177, %p178
      %s181 = sadd.s32 %s180, 1
      %p184 = scmp.eq.s32.totalorder %s20, 1
      %p185 = scmp.ne.s32.totalorder %s180, %s182
      %p186 = scmp.eq.s32.totalorder %s20, 0
      %p187 = por %p185, %p186
      %p188 = scmp.ne.s32.totalorder %s180, %s182
      %p189 = scmp.eq.s32.totalorder %s25, 1
      %p190 = por %p188, %p189
      %p191 = scmp.ne.s32.totalorder %s182, %s183
      %p192 = scmp.eq.s32.totalorder %s25, 0
      %p193 = por %p191, %p192
      %p194 = scmp.ne.s32.totalorder %s182, %s183
      %p195 = scmp.eq.s32.totalorder %s26, 1
      %p196 = por %p194, %p195
      %p198 = scmp.ne.s32.totalorder %s183, %s197
      %p199 = scmp.eq.s32.totalorder %s26, 0
      %p200 = por %p198, %p199
      %s202 = sadd.s32 %s201, 1
      %p205 = scmp.eq.s32.totalorder %s20, 1
      %p206 = scmp.ne.s32.totalorder %s201, %s203
      %p207 = scmp.eq.s32.totalorder %s20, 0
      %p208 = por %p206, %p207
      %p209 = scmp.ne.s32.totalorder %s201, %s203
      %p210 = scmp.eq.s32.totalorder %s25, 1
      %p211 = por %p209, %p210
      %p212 = scmp.ne.s32.totalorder %s203, %s204
      %p213 = scmp.eq.s32.totalorder %s25, 0
      %p214 = por %p212, %p213
      %p215 = scmp.ne.s32.totalorder %s203, %s204
      %p216 = scmp.eq.s32.totalorder %s26, 1
      %p217 = por %p215, %p216
      %p219 = scmp.ne.s32.totalorder %s204, %s218
      %p220 = scmp.eq.s32.totalorder %s26, 0
      %p221 = por %p219, %p220
      %s223 = sadd.s32 %s222, 1
      %p226 = scmp.eq.s32.totalorder %s20, 1
      %p227 = scmp.ne.s32.totalorder %s222, %s224
      %p228 = scmp.eq.s32.totalorder %s20, 0
      %p229 = por %p227, %p228
      %p230 = scmp.ne.s32.totalorder %s222, %s224
      %p231 = scmp.eq.s32.totalorder %s25, 1
      %p232 = por %p230, %p231
      %p233 = scmp.ne.s32.totalorder %s224, %s225
      %p234 = scmp.eq.s32.totalorder %s25, 0
      %p235 = por %p233, %p234
      %p236 = scmp.ne.s32.totalorder %s224, %s225
      %p237 = scmp.eq.s32.totalorder %s26, 1
      %p238 = por %p236, %p237
      %p240 = scmp.ne.s32.totalorder %s225, %s239
      %p241 = scmp.eq.s32.totalorder %s26, 0
      %p242 = por %p240, %p241
      %s244 = sadd.s32 %s243, 1
      %p247 = scmp.eq.s32.totalorder %s20, 1
      %p248 = scmp.ne.s32.totalorder %s243, %s245
      %p249 = scmp.eq.s32.totalorder %s20, 0
      %p250 = por %p248, %p249
      %p251 = scmp.ne.s32.totalorder %s243, %s245
      %p252 = scmp.eq.s32.totalorder %s25, 1
      %p253 = por %p251, %p252
      %p254 = scmp.ne.s32.totalorder %s245, %s246
      %p255 = scmp.eq.s32.totalorder %s25, 0
      %p256 = por %p254, %p255
      %p257 = scmp.ne.s32.totalorder %s245, %s246
      %p258 = scmp.eq.s32.totalorder %s26, 1
      %p259 = por %p257, %p258
      %p261 = scmp.ne.s32.totalorder %s246, %s260
      %p262 = scmp.eq.s32.totalorder %s26, 0
      %p263 = por %p261, %p262
      %s264 = ssub.s32 %s20, %s27
      %p265 = scmp.eq.s32.totalorder %s264, 0
      %s267 = sadd.s32 %s266, 1
      %s268 = scalar_select %p265, %s266, %s267
      %p271 = pneg %p265
      %p272 = scmp.eq.s32.totalorder %s20, 1
      %p273 = por %p271, %p272
      %p274 = scmp.ne.s32.totalorder %s266, %s269
      %p275 = scmp.eq.s32.totalorder %s20, 0
      %p276 = por %p274, %p275
      %p277 = scmp.ne.s32.totalorder %s266, %s269
      %p278 = scmp.eq.s32.totalorder %s25, 1
      %p279 = por %p277, %p278
      %p280 = scmp.ne.s32.totalorder %s269, %s270
      %p281 = scmp.eq.s32.totalorder %s25, 0
      %p282 = por %p280, %p281
      %p283 = scmp.ne.s32.totalorder %s269, %s270
      %p284 = scmp.eq.s32.totalorder %s26, 1
      %p285 = por %p283, %p284
      %p287 = scmp.ne.s32.totalorder %s270, %s286
      %p288 = scmp.eq.s32.totalorder %s26, 0
      %p289 = por %p287, %p288
      %p290 = scmp.le.s32.totalorder 1, %s20
      %p291 = scmp.lt.s32.totalorder %s20, 3
      %p292 = pnand %p290, %p291
      %p293 = pneg %p292
      // Predicated region
      $region9: #{tpu_custom_call.1} parent=5 // pred_check
        _
      $region10: #{tpu_custom_call.1} parent=5 // pred_check_branch
        %295 = sbr.rel (%p292) target = $region12
      $region11: #{tpu_custom_call.1} parent=5 // pred_region
        %s296 = ssub.s32 %s20, 1
        // Predicated region
        $region13: #{tpu_custom_call.1} parent=11 // pred_check
          %p297 = pneg %p67
        $region14: #{tpu_custom_call.1} parent=11 // pred_check_branch
          %299 = sbr.rel (%p297) target = $region16
        $region15: #{tpu_custom_call.1} parent=11 // pred_region
          _
        $region16: #{tpu_custom_call.1} parent=11 // pred_fallthru
          _
        // Predicated region
        $region17: #{tpu_custom_call.1} parent=11 // pred_check
          %p300 = pneg %p88
        $region18: #{tpu_custom_call.1} parent=11 // pred_check_branch
          %302 = sbr.rel (%p300) target = $region20
        $region19: #{tpu_custom_call.1} parent=11 // pred_region
          _
        $region20: #{tpu_custom_call.1} parent=11 // pred_fallthru
          _
        // Predicated region
        $region21: #{tpu_custom_call.1} parent=11 // pred_check
          %p303 = pneg %p109
        $region22: #{tpu_custom_call.1} parent=11 // pred_check_branch
          %305 = sbr.rel (%p303) target = $region24
        $region23: #{tpu_custom_call.1} parent=11 // pred_region
          _
        $region24: #{tpu_custom_call.1} parent=11 // pred_fallthru
          _
        // Predicated region
        $region25: #{tpu_custom_call.1} parent=11 // pred_check
          %p306 = pneg %p130
        $region26: #{tpu_custom_call.1} parent=11 // pred_check_branch
          %308 = sbr.rel (%p306) target = $region28
        $region27: #{tpu_custom_call.1} parent=11 // pred_region
          _
        $region28: #{tpu_custom_call.1} parent=11 // pred_fallthru
          _
        // Predicated region
        $region29: #{tpu_custom_call.1} parent=11 // pred_check
          %p309 = pneg %p151
        $region30: #{tpu_custom_call.1} parent=11 // pred_check_branch
          %311 = sbr.rel (%p309) target = $region32
        $region31: #{tpu_custom_call.1} parent=11 // pred_region
          _
        $region32: #{tpu_custom_call.1} parent=11 // pred_fallthru
          _
        // Predicated region
        $region33: #{tpu_custom_call.1} parent=11 // pred_check
          %p312 = pneg %p172
        $region34: #{tpu_custom_call.1} parent=11 // pred_check_branch
          %314 = sbr.rel (%p312) target = $region36
        $region35: #{tpu_custom_call.1} parent=11 // pred_region
          _
        $region36: #{tpu_custom_call.1} parent=11 // pred_fallthru
          _
        // Predicated region
        $region37: #{tpu_custom_call.1} parent=11 // pred_check
          %p315 = pneg %p193
        $region38: #{tpu_custom_call.1} parent=11 // pred_check_branch
          %317 = sbr.rel (%p315) target = $region40
        $region39: #{tpu_custom_call.1} parent=11 // pred_region
          _
        $region40: #{tpu_custom_call.1} parent=11 // pred_fallthru
          _
        // Predicated region
        $region41: #{tpu_custom_call.1} parent=11 // pred_check
          %p318 = pneg %p214
        $region42: #{tpu_custom_call.1} parent=11 // pred_check_branch
          %320 = sbr.rel (%p318) target = $region44
        $region43: #{tpu_custom_call.1} parent=11 // pred_region
          _
        $region44: #{tpu_custom_call.1} parent=11 // pred_fallthru
          _
        // Predicated region
        $region45: #{tpu_custom_call.1} parent=11 // pred_check
          %p321 = pneg %p235
        $region46: #{tpu_custom_call.1} parent=11 // pred_check_branch
          %323 = sbr.rel (%p321) target = $region48
        $region47: #{tpu_custom_call.1} parent=11 // pred_region
          _
        $region48: #{tpu_custom_call.1} parent=11 // pred_fallthru
          _
        // Predicated region
        $region49: #{tpu_custom_call.1} parent=11 // pred_check
          %p324 = pneg %p256
        $region50: #{tpu_custom_call.1} parent=11 // pred_check_branch
          %326 = sbr.rel (%p324) target = $region52
        $region51: #{tpu_custom_call.1} parent=11 // pred_region
          _
        $region52: #{tpu_custom_call.1} parent=11 // pred_fallthru
          _
      $region12: #{tpu_custom_call.1} parent=5 // pred_fallthru
        _
      %p327 = scmp.lt.s32.totalorder %s20, 2
      // Predicated region
      $region53: #{tpu_custom_call.1} parent=5 // pred_check
        %p328 = pneg %p327
      $region54: #{tpu_custom_call.1} parent=5 // pred_check_branch
        %330 = sbr.rel (%p328) target = $region56
      $region55: #{tpu_custom_call.1} parent=5 // pred_region
        // Predicated region
        $region57: #{tpu_custom_call.1} parent=55 // pred_check
          %p331 = pneg %p40
        $region58: #{tpu_custom_call.1} parent=55 // pred_check_branch
          %333 = sbr.rel (%p331) target = $region60
        $region59: #{tpu_custom_call.1} parent=55 // pred_region
          %s334 = smul.u32 16, %s20
          %p335 = scmp.lt.s32.totalorder %s334, 31
          %s336 = scalar_select %p335, %s334, 31
          %s337 = smul.addr %s336, 8
          %s338 = scalar_lea.vmem %s0, %s337
          %s339 = smul.u32 16, %s20
        $region60: #{tpu_custom_call.1} parent=55 // pred_fallthru
          _
      $region56: #{tpu_custom_call.1} parent=5 // pred_fallthru
        _
      %p340 = scmp.le.s32.totalorder 1, %s20
      %p341 = scmp.lt.s32.totalorder %s20, 3
      %p342 = pnand %p340, %p341
      %p343 = pneg %p342
      // Predicated region
      $region61: #{tpu_custom_call.1} parent=5 // pred_check
        _
      $region62: #{tpu_custom_call.1} parent=5 // pred_check_branch
        %345 = sbr.rel (%p342) target = $region64
      $region63: #{tpu_custom_call.1} parent=5 // pred_region
        %s346 = ssub.s32 %s20, 1
        %s347 = smul.u32 16, %s25
        %p348 = scmp.lt.s32.totalorder %s347, 31
        %s349 = scalar_select %p348, %s347, 31
        %s350 = smul.addr %s349, 8
        %s351 = scalar_lea.vmem %s0, %s350
        %p352 = pneg %p46
        %p353 = pneg %p43
        %p354 = pneg %p67
        %p355 = pneg %p64
        %p356 = pneg %p88
        %p357 = pneg %p85
        %p358 = pneg %p109
        %p359 = pneg %p106
        %p360 = pneg %p130
        %p361 = pneg %p127
        %p362 = pneg %p151
        %p363 = pneg %p148
        %p364 = pneg %p172
        %p365 = pneg %p169
        %p366 = pneg %p193
        %p367 = pneg %p190
        %p368 = pneg %p214
        %p369 = pneg %p211
        %p370 = pneg %p235
        %p371 = pneg %p232
        %p372 = pneg %p256
        %p373 = pneg %p253
        %p374 = pneg %p282
        %p375 = pneg %p279
        %s376 = sand.u32 %s269, 1
        %s377 = scalar_lea.sflag [#allocation3], %s376
        %s378 = sand.u32 %s269, 1
        %s379 = smul.addr %s378, 64
        %s380 = scalar_lea.vmem [#allocation2], %s379
        %s381 = smul.u32 16, %s25
        %p382 = scmp.lt.s32.totalorder %s381, 31
        %s383 = scalar_select %p382, %s381, 31
        %s384 = smul.addr %s383, 8
        %s385 = scalar_lea.vmem %s0, %s384
        %s386 = smul.u32 16, %s25
        %s387 = smul.u32 16, %s25
        %v389 = vld [vmem:[%s385] sm:$0xff]
        %v390 = vld [vmem:[%s385 + $0x8] sm:$0xff]
        %v391 = vld [vmem:[%s385 + $0x10] sm:$0xff]
        %v392 = vld [vmem:[%s385 + $0x18] sm:$0xff]
        %v393 = vld [vmem:[%s385 + $0x20] sm:$0xff]
        %v394 = vld [vmem:[%s385 + $0x28] sm:$0xff]
        %v395 = vld [vmem:[%s385 + $0x30] sm:$0xff]
        %v396 = vld [vmem:[%s385 + $0x38] sm:$0xff]
        %v397 = vld [vmem:[%s385 + $0x40] sm:$0xff]
        %v398 = vld [vmem:[%s385 + $0x48] sm:$0xff]
        %v399 = vld [vmem:[%s385 + $0x50] sm:$0xff]
        %v400 = vld [vmem:[%s385 + $0x58] sm:$0xff]
        %v401 = vld [vmem:[%s385 + $0x60] sm:$0xff]
        %v402 = vld [vmem:[%s385 + $0x68] sm:$0xff]
        %v403 = vld [vmem:[%s385 + $0x70] sm:$0xff]
        %v404 = vld [vmem:[%s385 + $0x78] sm:$0xff]
        %v405 = vpack.c.bf16 %v390, %v389
        %v406 = vpack.c.bf16 %v392, %v391
        %v407 = vpack.c.bf16 %v394, %v393
        %v408 = vpack.c.bf16 %v396, %v395
        %v409 = vpack.c.bf16 %v398, %v397
        %v410 = vpack.c.bf16 %v400, %v399
        %v411 = vpack.c.bf16 %v402, %v401
        %v412 = vpack.c.bf16 %v404, %v403
        %v413 = vld [vmem:[%s1] sm:$0xf]
        %v414 = vld [vmem:[%s1 + $0x4] sm:$0xf]
        %v415 = vld [vmem:[%s1 + $0x8] sm:$0xf]
        %v416 = vld [vmem:[%s1 + $0xc] sm:$0xf]
        %v417 = vld [vmem:[%s2] sm:$0x1]
        %v419 = vlaneseq
        %v420 = vshrl.u32 %v419, 7
        %v421 = vsub.s32 0, %v420
        %v422 = vrot.slane %v417, %v421
        %v428 = vunpack.c.l.b16 %v413
        %v429 = vunpack.c.l.b16 %v414
        %v430 = vunpack.c.l.b16 %v415
        %v431 = vunpack.c.l.b16 %v416
        %v432 = vpack.c.b16 %v429, %v428
        %v433 = vpack.c.b16 %v431, %v430
        %vm436 = vcmask 261120
        %v438 = vsel %vm436, %v405, 0
        %v441 = vsel %vm436, %v406, 0
        %v444 = vsel %vm436, %v407, 0
        %v447 = vsel %vm436, %v408, 0
        %v450 = vsel %vm436, %v409, 0
        %v453 = vsel %vm436, %v410, 0
        %v456 = vsel %vm436, %v411, 0
        %v459 = vsel %vm436, %v412, 0
        %461 = vmatprep.subr.bf16.mxu0 0
        %462 = vmatpush1.bf16.msra.mxu0 %v432
        %463 = vmatprep.subr.bf16.mxu0 0
        %464 = vmatpush1.bf16.msra.mxu0 %v433
        %465 = vmatprep.subr.bf16.mxu0 0
        %466 = vmatpush1.bf16.msra.mxu0 0
        %467 = vmatprep.subr.bf16.mxu0 0
        %468 = vmatpush1.bf16.msra.mxu0 0
        %469 = vmatprep.subr.bf16.mxu0 0
        %470 = vmatpush1.bf16.msra.mxu0 0
        %471 = vmatprep.subr.bf16.mxu0 0
        %472 = vmatpush1.bf16.msra.mxu0 0
        %473 = vmatprep.subr.bf16.mxu0 0
        %474 = vmatpush1.bf16.msra.mxu0 0
        %475 = vmatprep.subr.bf16.mxu0 0
        %476 = vmatpush1.bf16.msra.mxu0 0
        %477 = vmatprep.subr.bf16.mxu0 0
        %478 = vmatpush1.bf16.msra.mxu0 0
        %479 = vmatprep.subr.bf16.mxu0 0
        %480 = vmatpush1.bf16.msra.mxu0 0
        %481 = vmatprep.subr.bf16.mxu0 0
        %482 = vmatpush1.bf16.msra.mxu0 0
        %483 = vmatprep.subr.bf16.mxu0 0
        %484 = vmatpush1.bf16.msra.mxu0 0
        %485 = vmatprep.subr.bf16.mxu0 0
        %486 = vmatpush1.bf16.msra.mxu0 0
        %487 = vmatprep.subr.bf16.mxu0 0
        %488 = vmatpush1.bf16.msra.mxu0 0
        %489 = vmatprep.subr.bf16.mxu0 0
        %490 = vmatpush1.bf16.msra.mxu0 0
        %491 = vmatprep.subr.bf16.mxu0 0
        %492 = vmatpush1.bf16.msra.mxu0 0
        %493 = vmatprep.mubr.bf16.mxu0 0
        %494 = vmatmul.mubr.bf16.gmra.mrb[0].mxu0 %v438
        %v495 = vpop.f32.mrb[0].mxu0
        %v496 = vadd.f32 %v422, %v495
        %v497 = vpop.f32.mrb[0].mxu0
        %v498 = vpop.f32.mrb[0].mxu0
        %v499 = vadd.f32 %v422, %v498
        %v500 = vpop.f32.mrb[0].mxu0
        %501 = vmatprep.mubr.bf16.mxu0 0
        %502 = vmatmul.mubr.bf16.gmra.mrb[0].mxu0 %v441
        %v503 = vpop.f32.mrb[0].mxu0
        %v504 = vadd.f32 %v422, %v503
        %v505 = vpop.f32.mrb[0].mxu0
        %v506 = vpop.f32.mrb[0].mxu0
        %v507 = vadd.f32 %v422, %v506
        %v508 = vpop.f32.mrb[0].mxu0
        %509 = vmatprep.mubr.bf16.mxu0 0
        %510 = vmatmul.mubr.bf16.gmra.mrb[0].mxu0 %v444
        %v511 = vpop.f32.mrb[0].mxu0
        %v512 = vadd.f32 %v422, %v511
        %v513 = vpop.f32.mrb[0].mxu0
        %v514 = vpop.f32.mrb[0].mxu0
        %v515 = vadd.f32 %v422, %v514
        %v516 = vpop.f32.mrb[0].mxu0
        %517 = vmatprep.mubr.bf16.mxu0 0
        %518 = vmatmul.mubr.bf16.gmra.mrb[0].mxu0 %v447
        %v519 = vpop.f32.mrb[0].mxu0
        %v520 = vadd.f32 %v422, %v519
        %v521 = vpop.f32.mrb[0].mxu0
        %v522 = vpop.f32.mrb[0].mxu0
        %v523 = vadd.f32 %v422, %v522
        %v524 = vpop.f32.mrb[0].mxu0
        %525 = vmatprep.mubr.bf16.mxu0 0
        %526 = vmatmul.mubr.bf16.gmra.mrb[0].mxu0 %v450
        %v527 = vpop.f32.mrb[0].mxu0
        %v528 = vadd.f32 %v422, %v527
        %v529 = vpop.f32.mrb[0].mxu0
        %v530 = vpop.f32.mrb[0].mxu0
        %v531 = vadd.f32 %v422, %v530
        %v532 = vpop.f32.mrb[0].mxu0
        %533 = vmatprep.mubr.bf16.mxu0 0
        %534 = vmatmul.mubr.bf16.gmra.mrb[0].mxu0 %v453
        %v535 = vpop.f32.mrb[0].mxu0
        %v536 = vadd.f32 %v422, %v535
        %v537 = vpop.f32.mrb[0].mxu0
        %v538 = vpop.f32.mrb[0].mxu0
        %v539 = vadd.f32 %v422, %v538
        %v540 = vpop.f32.mrb[0].mxu0
        %541 = vmatprep.mubr.bf16.mxu0 0
        %542 = vmatmul.mubr.bf16.gmra.mrb[0].mxu0 %v456
        %v543 = vpop.f32.mrb[0].mxu0
        %v544 = vadd.f32 %v422, %v543
        %v545 = vpop.f32.mrb[0].mxu0
        %v546 = vpop.f32.mrb[0].mxu0
        %v547 = vadd.f32 %v422, %v546
        %v548 = vpop.f32.mrb[0].mxu0
        %549 = vmatprep.mubr.bf16.mxu0 0
        %550 = vmatmul.mubr.bf16.gmra.mrb[0].mxu0 %v459
        %v551 = vpop.f32.mrb[0].mxu0
        %v552 = vadd.f32 %v422, %v551
        %v553 = vpop.f32.mrb[0].mxu0
        %v554 = vpop.f32.mrb[0].mxu0
        %v555 = vadd.f32 %v422, %v554
        %v556 = vpop.f32.mrb[0].mxu0
        %557 = vdwg.mxu0
        %v558 = vmax.f32 %v496, 0.0
        %v559 = vmax.f32 %v499, 0.0
        %v560 = vmax.f32 %v504, 0.0
        %v561 = vmax.f32 %v507, 0.0
        %v562 = vmax.f32 %v512, 0.0
        %v563 = vmax.f32 %v515, 0.0
        %v564 = vmax.f32 %v520, 0.0
        %v565 = vmax.f32 %v523, 0.0
        %v566 = vmax.f32 %v528, 0.0
        %v567 = vmax.f32 %v531, 0.0
        %v568 = vmax.f32 %v536, 0.0
        %v569 = vmax.f32 %v539, 0.0
        %v570 = vmax.f32 %v544, 0.0
        %v571 = vmax.f32 %v547, 0.0
        %v572 = vmax.f32 %v552, 0.0
        %v573 = vmax.f32 %v555, 0.0
        %v574 = vpack.c.bf16 %v559, %v558
        %v575 = vpack.c.bf16 %v561, %v560
        %v576 = vpack.c.bf16 %v563, %v562
        %v577 = vpack.c.bf16 %v565, %v564
        %v578 = vpack.c.bf16 %v567, %v566
        %v579 = vpack.c.bf16 %v569, %v568
        %v580 = vpack.c.bf16 %v571, %v570
        %v581 = vpack.c.bf16 %v573, %v572
        %v582 = vld [vmem:[%s3] sm:$0xf]
        %v583 = vld [vmem:[%s3 + $0x4] sm:$0xf]
        %v584 = vld [vmem:[%s3 + $0x8] sm:$0xf]
        %v585 = vld [vmem:[%s3 + $0xc] sm:$0xf]
        %v586 = vld [vmem:[%s3 + $0x10] sm:$0xf]
        %v587 = vld [vmem:[%s3 + $0x14] sm:$0xf]
        %v588 = vld [vmem:[%s3 + $0x18] sm:$0xf]
        %v589 = vld [vmem:[%s3 + $0x1c] sm:$0xf]
        %v590 = vld [vmem:[%s3 + $0x20] sm:$0xf]
        %v591 = vld [vmem:[%s3 + $0x24] sm:$0xf]
        %v592 = vld [vmem:[%s3 + $0x28] sm:$0xf]
        %v593 = vld [vmem:[%s3 + $0x2c] sm:$0xf]
        %v594 = vld [vmem:[%s3 + $0x30] sm:$0xf]
        %v595 = vld [vmem:[%s3 + $0x34] sm:$0xf]
        %v596 = vld [vmem:[%s3 + $0x38] sm:$0xf]
        %v597 = vld [vmem:[%s3 + $0x3c] sm:$0xf]
        %v598 = vld [vmem:[%s4] sm:$0x1]
        %v600 = vlaneseq
        %v601 = vshrl.u32 %v600, 7
        %v602 = vsub.s32 0, %v601
        %v603 = vrot.slane %v598, %v602
        %v621 = vunpack.c.l.b16 %v582
        %v622 = vunpack.c.l.b16 %v583
        %v623 = vunpack.c.l.b16 %v584
        %v624 = vunpack.c.l.b16 %v585
        %v625 = vunpack.c.l.b16 %v586
        %v626 = vunpack.c.l.b16 %v587
        %v627 = vunpack.c.l.b16 %v588
        %v628 = vunpack.c.l.b16 %v589
        %v629 = vunpack.c.l.b16 %v590
        %v630 = vunpack.c.l.b16 %v591
        %v631 = vunpack.c.l.b16 %v592
        %v632 = vunpack.c.l.b16 %v593
        %v633 = vunpack.c.l.b16 %v594
        %v634 = vunpack.c.l.b16 %v595
        %v635 = vunpack.c.l.b16 %v596
        %v636 = vunpack.c.l.b16 %v597
        %v637 = vpack.c.b16 %v622, %v621
        %v638 = vpack.c.b16 %v624, %v623
        %v639 = vpack.c.b16 %v626, %v625
        %v640 = vpack.c.b16 %v628, %v627
        %v641 = vpack.c.b16 %v630, %v629
        %v642 = vpack.c.b16 %v632, %v631
        %v643 = vpack.c.b16 %v634, %v633
        %v644 = vpack.c.b16 %v636, %v635
        %653 = vmatprep.subr.bf16.mxu0 0
        %654 = vmatpush1.bf16.msra.mxu0 %v637
        %655 = vmatprep.subr.bf16.mxu0 0
        %656 = vmatpush1.bf16.msra.mxu0 %v638
        %657 = vmatprep.subr.bf16.mxu0 0
        %658 = vmatpush1.bf16.msra.mxu0 %v639
        %659 = vmatprep.subr.bf16.mxu0 0
        %660 = vmatpush1.bf16.msra.mxu0 %v640
        %661 = vmatprep.subr.bf16.mxu0 0
        %662 = vmatpush1.bf16.msra.mxu0 %v641
        %663 = vmatprep.subr.bf16.mxu0 0
        %664 = vmatpush1.bf16.msra.mxu0 %v642
        %665 = vmatprep.subr.bf16.mxu0 0
        %666 = vmatpush1.bf16.msra.mxu0 %v643
        %667 = vmatprep.subr.bf16.mxu0 0
        %668 = vmatpush1.bf16.msra.mxu0 %v644
        %669 = vmatprep.subr.bf16.mxu0 0
        %670 = vmatpush1.bf16.msra.mxu0 0
        %671 = vmatprep.subr.bf16.mxu0 0
        %672 = vmatpush1.bf16.msra.mxu0 0
        %673 = vmatprep.subr.bf16.mxu0 0
        %674 = vmatpush1.bf16.msra.mxu0 0
        %675 = vmatprep.subr.bf16.mxu0 0
        %676 = vmatpush1.bf16.msra.mxu0 0
        %677 = vmatprep.subr.bf16.mxu0 0
        %678 = vmatpush1.bf16.msra.mxu0 0
        %679 = vmatprep.subr.bf16.mxu0 0
        %680 = vmatpush1.bf16.msra.mxu0 0
        %681 = vmatprep.subr.bf16.mxu0 0
        %682 = vmatpush1.bf16.msra.mxu0 0
        %683 = vmatprep.subr.bf16.mxu0 0
        %684 = vmatpush1.bf16.msra.mxu0 0
        %685 = vmatprep.mubr.bf16.mxu0 0
        %686 = vmatmul.mubr.bf16.gmra.mrb[0].mxu0 %v574
        %v687 = vpop.f32.mrb[0].mxu0
        %v688 = vadd.f32 %v603, %v687
        %v689 = vpop.f32.mrb[0].mxu0
        %v690 = vpop.f32.mrb[0].mxu0
        %v691 = vadd.f32 %v603, %v690
        %v692 = vpop.f32.mrb[0].mxu0
        %693 = vmatprep.mubr.bf16.mxu0 0
        %694 = vmatmul.mubr.bf16.gmra.mrb[0].mxu0 %v575
        %v695 = vpop.f32.mrb[0].mxu0
        %v696 = vadd.f32 %v603, %v695
        %v697 = vpop.f32.mrb[0].mxu0
        %v698 = vpop.f32.mrb[0].mxu0
        %v699 = vadd.f32 %v603, %v698
        %v700 = vpop.f32.mrb[0].mxu0
        %701 = vmatprep.mubr.bf16.mxu0 0
        %702 = vmatmul.mubr.bf16.gmra.mrb[0].mxu0 %v576
        %v703 = vpop.f32.mrb[0].mxu0
        %v704 = vadd.f32 %v603, %v703
        %v705 = vpop.f32.mrb[0].mxu0
        %v706 = vpop.f32.mrb[0].mxu0
        %v707 = vadd.f32 %v603, %v706
        %v708 = vpop.f32.mrb[0].mxu0
        %709 = vmatprep.mubr.bf16.mxu0 0
        %710 = vmatmul.mubr.bf16.gmra.mrb[0].mxu0 %v577
        %v711 = vpop.f32.mrb[0].mxu0
        %v712 = vadd.f32 %v603, %v711
        %v713 = vpop.f32.mrb[0].mxu0
        %v714 = vpop.f32.mrb[0].mxu0
        %v715 = vadd.f32 %v603, %v714
        %v716 = vpop.f32.mrb[0].mxu0
        %717 = vmatprep.mubr.bf16.mxu0 0
        %718 = vmatmul.mubr.bf16.gmra.mrb[0].mxu0 %v578
        %v719 = vpop.f32.mrb[0].mxu0
        %v720 = vadd.f32 %v603, %v719
        %v721 = vpop.f32.mrb[0].mxu0
        %v722 = vpop.f32.mrb[0].mxu0
        %v723 = vadd.f32 %v603, %v722
        %v724 = vpop.f32.mrb[0].mxu0
        %725 = vmatprep.mubr.bf16.mxu0 0
        %726 = vmatmul.mubr.bf16.gmra.mrb[0].mxu0 %v579
        %v727 = vpop.f32.mrb[0].mxu0
        %v728 = vadd.f32 %v603, %v727
        %v729 = vpop.f32.mrb[0].mxu0
        %v730 = vpop.f32.mrb[0].mxu0
        %v731 = vadd.f32 %v603, %v730
        %v732 = vpop.f32.mrb[0].mxu0
        %733 = vmatprep.mubr.bf16.mxu0 0
        %734 = vmatmul.mubr.bf16.gmra.mrb[0].mxu0 %v580
        %v735 = vpop.f32.mrb[0].mxu0
        %v736 = vadd.f32 %v603, %v735
        %v737 = vpop.f32.mrb[0].mxu0
        %v738 = vpop.f32.mrb[0].mxu0
        %v739 = vadd.f32 %v603, %v738
        %v740 = vpop.f32.mrb[0].mxu0
        %741 = vmatprep.mubr.bf16.mxu0 0
        %742 = vmatmul.mubr.bf16.gmra.mrb[0].mxu0 %v581
        %v743 = vpop.f32.mrb[0].mxu0
        %v744 = vadd.f32 %v603, %v743
        %v745 = vpop.f32.mrb[0].mxu0
        %v746 = vpop.f32.mrb[0].mxu0
        %v747 = vadd.f32 %v603, %v746
        %v748 = vpop.f32.mrb[0].mxu0
        %749 = vdwg.mxu0
        %v750 = vmax.f32 %v688, 0.0
        %v751 = vmax.f32 %v691, 0.0
        %v752 = vmax.f32 %v696, 0.0
        %v753 = vmax.f32 %v699, 0.0
        %v754 = vmax.f32 %v704, 0.0
        %v755 = vmax.f32 %v707, 0.0
        %v756 = vmax.f32 %v712, 0.0
        %v757 = vmax.f32 %v715, 0.0
        %v758 = vmax.f32 %v720, 0.0
        %v759 = vmax.f32 %v723, 0.0
        %v760 = vmax.f32 %v728, 0.0
        %v761 = vmax.f32 %v731, 0.0
        %v762 = vmax.f32 %v736, 0.0
        %v763 = vmax.f32 %v739, 0.0
        %v764 = vmax.f32 %v744, 0.0
        %v765 = vmax.f32 %v747, 0.0
        %v766 = vpack.c.bf16 %v751, %v750
        %v767 = vpack.c.bf16 %v753, %v752
        %v768 = vpack.c.bf16 %v755, %v754
        %v769 = vpack.c.bf16 %v757, %v756
        %v770 = vpack.c.bf16 %v759, %v758
        %v771 = vpack.c.bf16 %v761, %v760
        %v772 = vpack.c.bf16 %v763, %v762
        %v773 = vpack.c.bf16 %v765, %v764
        %v774 = vld [vmem:[%s5] sm:$0xf]
        %v775 = vld [vmem:[%s5 + $0x4] sm:$0xf]
        %v776 = vld [vmem:[%s5 + $0x8] sm:$0xf]
        %v777 = vld [vmem:[%s5 + $0xc] sm:$0xf]
        %v778 = vld [vmem:[%s5 + $0x10] sm:$0xf]
        %v779 = vld [vmem:[%s5 + $0x14] sm:$0xf]
        %v780 = vld [vmem:[%s5 + $0x18] sm:$0xf]
        %v781 = vld [vmem:[%s5 + $0x1c] sm:$0xf]
        %v782 = vld [vmem:[%s5 + $0x20] sm:$0xf]
        %v783 = vld [vmem:[%s5 + $0x24] sm:$0xf]
        %v784 = vld [vmem:[%s5 + $0x28] sm:$0xf]
        %v785 = vld [vmem:[%s5 + $0x2c] sm:$0xf]
        %v786 = vld [vmem:[%s5 + $0x30] sm:$0xf]
        %v787 = vld [vmem:[%s5 + $0x34] sm:$0xf]
        %v788 = vld [vmem:[%s5 + $0x38] sm:$0xf]
        %v789 = vld [vmem:[%s5 + $0x3c] sm:$0xf]
        %v790 = vld [vmem:[%s6] sm:$0x1]
        %v792 = vlaneseq
        %v793 = vshrl.u32 %v792, 7
        %v794 = vsub.s32 0, %v793
        %v795 = vrot.slane %v790, %v794
        %v813 = vunpack.c.l.b16 %v774
        %v814 = vunpack.c.l.b16 %v775
        %v815 = vunpack.c.l.b16 %v776
        %v816 = vunpack.c.l.b16 %v777
        %v817 = vunpack.c.l.b16 %v778
        %v818 = vunpack.c.l.b16 %v779
        %v819 = vunpack.c.l.b16 %v780
        %v820 = vunpack.c.l.b16 %v781
        %v821 = vunpack.c.l.b16 %v782
        %v822 = vunpack.c.l.b16 %v783
        %v823 = vunpack.c.l.b16 %v784
        %v824 = vunpack.c.l.b16 %v785
        %v825 = vunpack.c.l.b16 %v786
        %v826 = vunpack.c.l.b16 %v787
        %v827 = vunpack.c.l.b16 %v788
        %v828 = vunpack.c.l.b16 %v789
        %v829 = vpack.c.b16 %v814, %v813
        %v830 = vpack.c.b16 %v816, %v815
        %v831 = vpack.c.b16 %v818, %v817
        %v832 = vpack.c.b16 %v820, %v819
        %v833 = vpack.c.b16 %v822, %v821
        %v834 = vpack.c.b16 %v824, %v823
        %v835 = vpack.c.b16 %v826, %v825
        %v836 = vpack.c.b16 %v828, %v827
        %845 = vmatprep.subr.bf16.mxu0 0
        %846 = vmatpush1.bf16.msra.mxu0 %v829
        %847 = vmatprep.subr.bf16.mxu0 0
        %848 = vmatpush1.bf16.msra.mxu0 %v830
        %849 = vmatprep.subr.bf16.mxu0 0
        %850 = vmatpush1.bf16.msra.mxu0 %v831
        %851 = vmatprep.subr.bf16.mxu0 0
        %852 = vmatpush1.bf16.msra.mxu0 %v832
        %853 = vmatprep.subr.bf16.mxu0 0
        %854 = vmatpush1.bf16.msra.mxu0 %v833
        %855 = vmatprep.subr.bf16.mxu0 0
        %856 = vmatpush1.bf16.msra.mxu0 %v834
        %857 = vmatprep.subr.bf16.mxu0 0
        %858 = vmatpush1.bf16.msra.mxu0 %v835
        %859 = vmatprep.subr.bf16.mxu0 0
        %860 = vmatpush1.bf16.msra.mxu0 %v836
        %861 = vmatprep.subr.bf16.mxu0 0
        %862 = vmatpush1.bf16.msra.mxu0 0
        %863 = vmatprep.subr.bf16.mxu0 0
        %864 = vmatpush1.bf16.msra.mxu0 0
        %865 = vmatprep.subr.bf16.mxu0 0
        %866 = vmatpush1.bf16.msra.mxu0 0
        %867 = vmatprep.subr.bf16.mxu0 0
        %868 = vmatpush1.bf16.msra.mxu0 0
        %869 = vmatprep.subr.bf16.mxu0 0
        %870 = vmatpush1.bf16.msra.mxu0 0
        %871 = vmatprep.subr.bf16.mxu0 0
        %872 = vmatpush1.bf16.msra.mxu0 0
        %873 = vmatprep.subr.bf16.mxu0 0
        %874 = vmatpush1.bf16.msra.mxu0 0
        %875 = vmatprep.subr.bf16.mxu0 0
        %876 = vmatpush1.bf16.msra.mxu0 0
        %877 = vmatprep.mubr.bf16.mxu0 0
        %878 = vmatmul.mubr.bf16.gmra.mrb[0].mxu0 %v766
        %v879 = vpop.f32.mrb[0].mxu0
        %v880 = vadd.f32 %v795, %v879
        %v881 = vpop.f32.mrb[0].mxu0
        %v882 = vpop.f32.mrb[0].mxu0
        %v883 = vadd.f32 %v795, %v882
        %v884 = vpop.f32.mrb[0].mxu0
        %885 = vmatprep.mubr.bf16.mxu0 0
        %886 = vmatmul.mubr.bf16.gmra.mrb[0].mxu0 %v767
        %v887 = vpop.f32.mrb[0].mxu0
        %v888 = vadd.f32 %v795, %v887
        %v889 = vpop.f32.mrb[0].mxu0
        %v890 = vpop.f32.mrb[0].mxu0
        %v891 = vadd.f32 %v795, %v890
        %v892 = vpop.f32.mrb[0].mxu0
        %893 = vmatprep.mubr.bf16.mxu0 0
        %894 = vmatmul.mubr.bf16.gmra.mrb[0].mxu0 %v768
        %v895 = vpop.f32.mrb[0].mxu0
        %v896 = vadd.f32 %v795, %v895
        %v897 = vpop.f32.mrb[0].mxu0
        %v898 = vpop.f32.mrb[0].mxu0
        %v899 = vadd.f32 %v795, %v898
        %v900 = vpop.f32.mrb[0].mxu0
        %901 = vmatprep.mubr.bf16.mxu0 0
        %902 = vmatmul.mubr.bf16.gmra.mrb[0].mxu0 %v769
        %v903 = vpop.f32.mrb[0].mxu0
        %v904 = vadd.f32 %v795, %v903
        %v905 = vpop.f32.mrb[0].mxu0
        %v906 = vpop.f32.mrb[0].mxu0
        %v907 = vadd.f32 %v795, %v906
        %v908 = vpop.f32.mrb[0].mxu0
        %909 = vmatprep.mubr.bf16.mxu0 0
        %910 = vmatmul.mubr.bf16.gmra.mrb[0].mxu0 %v770
        %v911 = vpop.f32.mrb[0].mxu0
        %v912 = vadd.f32 %v795, %v911
        %v913 = vpop.f32.mrb[0].mxu0
        %v914 = vpop.f32.mrb[0].mxu0
        %v915 = vadd.f32 %v795, %v914
        %v916 = vpop.f32.mrb[0].mxu0
        %917 = vmatprep.mubr.bf16.mxu0 0
        %918 = vmatmul.mubr.bf16.gmra.mrb[0].mxu0 %v771
        %v919 = vpop.f32.mrb[0].mxu0
        %v920 = vadd.f32 %v795, %v919
        %v921 = vpop.f32.mrb[0].mxu0
        %v922 = vpop.f32.mrb[0].mxu0
        %v923 = vadd.f32 %v795, %v922
        %v924 = vpop.f32.mrb[0].mxu0
        %925 = vmatprep.mubr.bf16.mxu0 0
        %926 = vmatmul.mubr.bf16.gmra.mrb[0].mxu0 %v772
        %v927 = vpop.f32.mrb[0].mxu0
        %v928 = vadd.f32 %v795, %v927
        %v929 = vpop.f32.mrb[0].mxu0
        %v930 = vpop.f32.mrb[0].mxu0
        %v931 = vadd.f32 %v795, %v930
        %v932 = vpop.f32.mrb[0].mxu0
        %933 = vmatprep.mubr.bf16.mxu0 0
        %934 = vmatmul.mubr.bf16.gmra.mrb[0].mxu0 %v773
        %v935 = vpop.f32.mrb[0].mxu0
        %v936 = vadd.f32 %v795, %v935
        %v937 = vpop.f32.mrb[0].mxu0
        %v938 = vpop.f32.mrb[0].mxu0
        %v939 = vadd.f32 %v795, %v938
        %v940 = vpop.f32.mrb[0].mxu0
        %941 = vdwg.mxu0
        %v942 = vmax.f32 %v880, 0.0
        %v943 = vmax.f32 %v883, 0.0
        %v944 = vmax.f32 %v888, 0.0
        %v945 = vmax.f32 %v891, 0.0
        %v946 = vmax.f32 %v896, 0.0
        %v947 = vmax.f32 %v899, 0.0
        %v948 = vmax.f32 %v904, 0.0
        %v949 = vmax.f32 %v907, 0.0
        %v950 = vmax.f32 %v912, 0.0
        %v951 = vmax.f32 %v915, 0.0
        %v952 = vmax.f32 %v920, 0.0
        %v953 = vmax.f32 %v923, 0.0
        %v954 = vmax.f32 %v928, 0.0
        %v955 = vmax.f32 %v931, 0.0
        %v956 = vmax.f32 %v936, 0.0
        %v957 = vmax.f32 %v939, 0.0
        %v958 = vpack.c.bf16 %v943, %v942
        %v959 = vpack.c.bf16 %v945, %v944
        %v960 = vpack.c.bf16 %v947, %v946
        %v961 = vpack.c.bf16 %v949, %v948
        %v962 = vpack.c.bf16 %v951, %v950
        %v963 = vpack.c.bf16 %v953, %v952
        %v964 = vpack.c.bf16 %v955, %v954
        %v965 = vpack.c.bf16 %v957, %v956
        %v966 = vld [vmem:[%s7] sm:$0xf]
        %v967 = vld [vmem:[%s7 + $0x4] sm:$0xf]
        %v968 = vld [vmem:[%s7 + $0x8] sm:$0xf]
        %v969 = vld [vmem:[%s7 + $0xc] sm:$0xf]
        %v970 = vld [vmem:[%s7 + $0x10] sm:$0xf]
        %v971 = vld [vmem:[%s7 + $0x14] sm:$0xf]
        %v972 = vld [vmem:[%s7 + $0x18] sm:$0xf]
        %v973 = vld [vmem:[%s7 + $0x1c] sm:$0xf]
        %v974 = vld [vmem:[%s7 + $0x20] sm:$0xf]
        %v975 = vld [vmem:[%s7 + $0x24] sm:$0xf]
        %v976 = vld [vmem:[%s7 + $0x28] sm:$0xf]
        %v977 = vld [vmem:[%s7 + $0x2c] sm:$0xf]
        %v978 = vld [vmem:[%s7 + $0x30] sm:$0xf]
        %v979 = vld [vmem:[%s7 + $0x34] sm:$0xf]
        %v980 = vld [vmem:[%s7 + $0x38] sm:$0xf]
        %v981 = vld [vmem:[%s7 + $0x3c] sm:$0xf]
        %v982 = vld [vmem:[%s8] sm:$0x1]
        %v984 = vlaneseq
        %v985 = vshrl.u32 %v984, 7
        %v986 = vsub.s32 0, %v985
        %v987 = vrot.slane %v982, %v986
        %v1005 = vunpack.c.l.b16 %v966
        %v1006 = vunpack.c.l.b16 %v967
        %v1007 = vunpack.c.l.b16 %v968
        %v1008 = vunpack.c.l.b16 %v969
        %v1009 = vunpack.c.l.b16 %v970
        %v1010 = vunpack.c.l.b16 %v971
        %v1011 = vunpack.c.l.b16 %v972
        %v1012 = vunpack.c.l.b16 %v973
        %v1013 = vunpack.c.l.b16 %v974
        %v1014 = vunpack.c.l.b16 %v975
        %v1015 = vunpack.c.l.b16 %v976
        %v1016 = vunpack.c.l.b16 %v977
        %v1017 = vunpack.c.l.b16 %v978
        %v1018 = vunpack.c.l.b16 %v979
        %v1019 = vunpack.c.l.b16 %v980
        %v1020 = vunpack.c.l.b16 %v981
        %v1021 = vpack.c.b16 %v1006, %v1005
        %v1022 = vpack.c.b16 %v1008, %v1007
        %v1023 = vpack.c.b16 %v1010, %v1009
        %v1024 = vpack.c.b16 %v1012, %v1011
        %v1025 = vpack.c.b16 %v1014, %v1013
        %v1026 = vpack.c.b16 %v1016, %v1015
        %v1027 = vpack.c.b16 %v1018, %v1017
        %v1028 = vpack.c.b16 %v1020, %v1019
        %1037 = vmatprep.subr.bf16.mxu0 0
        %1038 = vmatpush1.bf16.msra.mxu0 %v1021
        %1039 = vmatprep.subr.bf16.mxu0 0
        %1040 = vmatpush1.bf16.msra.mxu0 %v1022
        %1041 = vmatprep.subr.bf16.mxu0 0
        %1042 = vmatpush1.bf16.msra.mxu0 %v1023
        %1043 = vmatprep.subr.bf16.mxu0 0
        %1044 = vmatpush1.bf16.msra.mxu0 %v1024
        %1045 = vmatprep.subr.bf16.mxu0 0
        %1046 = vmatpush1.bf16.msra.mxu0 %v1025
        %1047 = vmatprep.subr.bf16.mxu0 0
        %1048 = vmatpush1.bf16.msra.mxu0 %v1026
        %1049 = vmatprep.subr.bf16.mxu0 0
        %1050 = vmatpush1.bf16.msra.mxu0 %v1027
        %1051 = vmatprep.subr.bf16.mxu0 0
        %1052 = vmatpush1.bf16.msra.mxu0 %v1028
        %1053 = vmatprep.subr.bf16.mxu0 0
        %1054 = vmatpush1.bf16.msra.mxu0 0
        %1055 = vmatprep.subr.bf16.mxu0 0
        %1056 = vmatpush1.bf16.msra.mxu0 0
        %1057 = vmatprep.subr.bf16.mxu0 0
        %1058 = vmatpush1.bf16.msra.mxu0 0
        %1059 = vmatprep.subr.bf16.mxu0 0
        %1060 = vmatpush1.bf16.msra.mxu0 0
        %1061 = vmatprep.subr.bf16.mxu0 0
        %1062 = vmatpush1.bf16.msra.mxu0 0
        %1063 = vmatprep.subr.bf16.mxu0 0
        %1064 = vmatpush1.bf16.msra.mxu0 0
        %1065 = vmatprep.subr.bf16.mxu0 0
        %1066 = vmatpush1.bf16.msra.mxu0 0
        %1067 = vmatprep.subr.bf16.mxu0 0
        %1068 = vmatpush1.bf16.msra.mxu0 0
        %1069 = vmatprep.mubr.bf16.mxu0 0
        %1070 = vmatmul.mubr.bf16.gmra.mrb[0].mxu0 %v958
        %v1071 = vpop.f32.mrb[0].mxu0
        %v1072 = vadd.f32 %v987, %v1071
        %v1073 = vpop.f32.mrb[0].mxu0
        %v1074 = vpop.f32.mrb[0].mxu0
        %v1075 = vadd.f32 %v987, %v1074
        %v1076 = vpop.f32.mrb[0].mxu0
        %1077 = vmatprep.mubr.bf16.mxu0 0
        %1078 = vmatmul.mubr.bf16.gmra.mrb[0].mxu0 %v959
        %v1079 = vpop.f32.mrb[0].mxu0
        %v1080 = vadd.f32 %v987, %v1079
        %v1081 = vpop.f32.mrb[0].mxu0
        %v1082 = vpop.f32.mrb[0].mxu0
        %v1083 = vadd.f32 %v987, %v1082
        %v1084 = vpop.f32.mrb[0].mxu0
        %1085 = vmatprep.mubr.bf16.mxu0 0
        %1086 = vmatmul.mubr.bf16.gmra.mrb[0].mxu0 %v960
        %v1087 = vpop.f32.mrb[0].mxu0
        %v1088 = vadd.f32 %v987, %v1087
        %v1089 = vpop.f32.mrb[0].mxu0
        %v1090 = vpop.f32.mrb[0].mxu0
        %v1091 = vadd.f32 %v987, %v1090
        %v1092 = vpop.f32.mrb[0].mxu0
        %1093 = vmatprep.mubr.bf16.mxu0 0
        %1094 = vmatmul.mubr.bf16.gmra.mrb[0].mxu0 %v961
        %v1095 = vpop.f32.mrb[0].mxu0
        %v1096 = vadd.f32 %v987, %v1095
        %v1097 = vpop.f32.mrb[0].mxu0
        %v1098 = vpop.f32.mrb[0].mxu0
        %v1099 = vadd.f32 %v987, %v1098
        %v1100 = vpop.f32.mrb[0].mxu0
        %1101 = vmatprep.mubr.bf16.mxu0 0
        %1102 = vmatmul.mubr.bf16.gmra.mrb[0].mxu0 %v962
        %v1103 = vpop.f32.mrb[0].mxu0
        %v1104 = vadd.f32 %v987, %v1103
        %v1105 = vpop.f32.mrb[0].mxu0
        %v1106 = vpop.f32.mrb[0].mxu0
        %v1107 = vadd.f32 %v987, %v1106
        %v1108 = vpop.f32.mrb[0].mxu0
        %1109 = vmatprep.mubr.bf16.mxu0 0
        %1110 = vmatmul.mubr.bf16.gmra.mrb[0].mxu0 %v963
        %v1111 = vpop.f32.mrb[0].mxu0
        %v1112 = vadd.f32 %v987, %v1111
        %v1113 = vpop.f32.mrb[0].mxu0
        %v1114 = vpop.f32.mrb[0].mxu0
        %v1115 = vadd.f32 %v987, %v1114
        %v1116 = vpop.f32.mrb[0].mxu0
        %1117 = vmatprep.mubr.bf16.mxu0 0
        %1118 = vmatmul.mubr.bf16.gmra.mrb[0].mxu0 %v964
        %v1119 = vpop.f32.mrb[0].mxu0
        %v1120 = vadd.f32 %v987, %v1119
        %v1121 = vpop.f32.mrb[0].mxu0
        %v1122 = vpop.f32.mrb[0].mxu0
        %v1123 = vadd.f32 %v987, %v1122
        %v1124 = vpop.f32.mrb[0].mxu0
        %1125 = vmatprep.mubr.bf16.mxu0 0
        %1126 = vmatmul.mubr.bf16.gmra.mrb[0].mxu0 %v965
        %v1127 = vpop.f32.mrb[0].mxu0
        %v1128 = vadd.f32 %v987, %v1127
        %v1129 = vpop.f32.mrb[0].mxu0
        %v1130 = vpop.f32.mrb[0].mxu0
        %v1131 = vadd.f32 %v987, %v1130
        %v1132 = vpop.f32.mrb[0].mxu0
        %1133 = vdwg.mxu0
        %v1134 = vmax.f32 %v1072, 0.0
        %v1135 = vmax.f32 %v1075, 0.0
        %v1136 = vmax.f32 %v1080, 0.0
        %v1137 = vmax.f32 %v1083, 0.0
        %v1138 = vmax.f32 %v1088, 0.0
        %v1139 = vmax.f32 %v1091, 0.0
        %v1140 = vmax.f32 %v1096, 0.0
        %v1141 = vmax.f32 %v1099, 0.0
        %v1142 = vmax.f32 %v1104, 0.0
        %v1143 = vmax.f32 %v1107, 0.0
        %v1144 = vmax.f32 %v1112, 0.0
        %v1145 = vmax.f32 %v1115, 0.0
        %v1146 = vmax.f32 %v1120, 0.0
        %v1147 = vmax.f32 %v1123, 0.0
        %v1148 = vmax.f32 %v1128, 0.0
        %v1149 = vmax.f32 %v1131, 0.0
        %v1150 = vpack.c.bf16 %v1135, %v1134
        %v1151 = vpack.c.bf16 %v1137, %v1136
        %v1152 = vpack.c.bf16 %v1139, %v1138
        %v1153 = vpack.c.bf16 %v1141, %v1140
        %v1154 = vpack.c.bf16 %v1143, %v1142
        %v1155 = vpack.c.bf16 %v1145, %v1144
        %v1156 = vpack.c.bf16 %v1147, %v1146
        %v1157 = vpack.c.bf16 %v1149, %v1148
        %v1158 = vld [vmem:[%s9] sm:$0xf]
        %v1159 = vld [vmem:[%s9 + $0x4] sm:$0xf]
        %v1160 = vld [vmem:[%s9 + $0x8] sm:$0xf]
        %v1161 = vld [vmem:[%s9 + $0xc] sm:$0xf]
        %v1162 = vld [vmem:[%s9 + $0x10] sm:$0xf]
        %v1163 = vld [vmem:[%s9 + $0x14] sm:$0xf]
        %v1164 = vld [vmem:[%s9 + $0x18] sm:$0xf]
        %v1165 = vld [vmem:[%s9 + $0x1c] sm:$0xf]
        %v1166 = vld [vmem:[%s9 + $0x20] sm:$0xf]
        %v1167 = vld [vmem:[%s9 + $0x24] sm:$0xf]
        %v1168 = vld [vmem:[%s9 + $0x28] sm:$0xf]
        %v1169 = vld [vmem:[%s9 + $0x2c] sm:$0xf]
        %v1170 = vld [vmem:[%s9 + $0x30] sm:$0xf]
        %v1171 = vld [vmem:[%s9 + $0x34] sm:$0xf]
        %v1172 = vld [vmem:[%s9 + $0x38] sm:$0xf]
        %v1173 = vld [vmem:[%s9 + $0x3c] sm:$0xf]
        %v1174 = vld [vmem:[%s10] sm:$0x1]
        %v1176 = vlaneseq
        %v1177 = vshrl.u32 %v1176, 7
        %v1178 = vsub.s32 0, %v1177
        %v1179 = vrot.slane %v1174, %v1178
        %v1197 = vunpack.c.l.b16 %v1158
        %v1198 = vunpack.c.l.b16 %v1159
        %v1199 = vunpack.c.l.b16 %v1160
        %v1200 = vunpack.c.l.b16 %v1161
        %v1201 = vunpack.c.l.b16 %v1162
        %v1202 = vunpack.c.l.b16 %v1163
        %v1203 = vunpack.c.l.b16 %v1164
        %v1204 = vunpack.c.l.b16 %v1165
        %v1205 = vunpack.c.l.b16 %v1166
        %v1206 = vunpack.c.l.b16 %v1167
        %v1207 = vunpack.c.l.b16 %v1168
        %v1208 = vunpack.c.l.b16 %v1169
        %v1209 = vunpack.c.l.b16 %v1170
        %v1210 = vunpack.c.l.b16 %v1171
        %v1211 = vunpack.c.l.b16 %v1172
        %v1212 = vunpack.c.l.b16 %v1173
        %v1213 = vpack.c.b16 %v1198, %v1197
        %v1214 = vpack.c.b16 %v1200, %v1199
        %v1215 = vpack.c.b16 %v1202, %v1201
        %v1216 = vpack.c.b16 %v1204, %v1203
        %v1217 = vpack.c.b16 %v1206, %v1205
        %v1218 = vpack.c.b16 %v1208, %v1207
        %v1219 = vpack.c.b16 %v1210, %v1209
        %v1220 = vpack.c.b16 %v1212, %v1211
        %1229 = vmatprep.subr.bf16.mxu0 0
        %1230 = vmatpush1.bf16.msra.mxu0 %v1213
        %1231 = vmatprep.subr.bf16.mxu0 0
        %1232 = vmatpush1.bf16.msra.mxu0 %v1214
        %1233 = vmatprep.subr.bf16.mxu0 0
        %1234 = vmatpush1.bf16.msra.mxu0 %v1215
        %1235 = vmatprep.subr.bf16.mxu0 0
        %1236 = vmatpush1.bf16.msra.mxu0 %v1216
        %1237 = vmatprep.subr.bf16.mxu0 0
        %1238 = vmatpush1.bf16.msra.mxu0 %v1217
        %1239 = vmatprep.subr.bf16.mxu0 0
        %1240 = vmatpush1.bf16.msra.mxu0 %v1218
        %1241 = vmatprep.subr.bf16.mxu0 0
        %1242 = vmatpush1.bf16.msra.mxu0 %v1219
        %1243 = vmatprep.subr.bf16.mxu0 0
        %1244 = vmatpush1.bf16.msra.mxu0 %v1220
        %1245 = vmatprep.subr.bf16.mxu0 0
        %1246 = vmatpush1.bf16.msra.mxu0 0
        %1247 = vmatprep.subr.bf16.mxu0 0
        %1248 = vmatpush1.bf16.msra.mxu0 0
        %1249 = vmatprep.subr.bf16.mxu0 0
        %1250 = vmatpush1.bf16.msra.mxu0 0
        %1251 = vmatprep.subr.bf16.mxu0 0
        %1252 = vmatpush1.bf16.msra.mxu0 0
        %1253 = vmatprep.subr.bf16.mxu0 0
        %1254 = vmatpush1.bf16.msra.mxu0 0
        %1255 = vmatprep.subr.bf16.mxu0 0
        %1256 = vmatpush1.bf16.msra.mxu0 0
        %1257 = vmatprep.subr.bf16.mxu0 0
        %1258 = vmatpush1.bf16.msra.mxu0 0
        %1259 = vmatprep.subr.bf16.mxu0 0
        %1260 = vmatpush1.bf16.msra.mxu0 0
        %1261 = vmatprep.mubr.bf16.mxu0 0
        %1262 = vmatmul.mubr.bf16.gmra.mrb[0].mxu0 %v1150
        %v1263 = vpop.f32.mrb[0].mxu0
        %v1264 = vadd.f32 %v1179, %v1263
        %v1265 = vpop.f32.mrb[0].mxu0
        %v1266 = vpop.f32.mrb[0].mxu0
        %v1267 = vadd.f32 %v1179, %v1266
        %v1268 = vpop.f32.mrb[0].mxu0
        %1269 = vmatprep.mubr.bf16.mxu0 0
        %1270 = vmatmul.mubr.bf16.gmra.mrb[0].mxu0 %v1151
        %v1271 = vpop.f32.mrb[0].mxu0
        %v1272 = vadd.f32 %v1179, %v1271
        %v1273 = vpop.f32.mrb[0].mxu0
        %v1274 = vpop.f32.mrb[0].mxu0
        %v1275 = vadd.f32 %v1179, %v1274
        %v1276 = vpop.f32.mrb[0].mxu0
        %1277 = vmatprep.mubr.bf16.mxu0 0
        %1278 = vmatmul.mubr.bf16.gmra.mrb[0].mxu0 %v1152
        %v1279 = vpop.f32.mrb[0].mxu0
        %v1280 = vadd.f32 %v1179, %v1279
        %v1281 = vpop.f32.mrb[0].mxu0
        %v1282 = vpop.f32.mrb[0].mxu0
        %v1283 = vadd.f32 %v1179, %v1282
        %v1284 = vpop.f32.mrb[0].mxu0
        %1285 = vmatprep.mubr.bf16.mxu0 0
        %1286 = vmatmul.mubr.bf16.gmra.mrb[0].mxu0 %v1153
        %v1287 = vpop.f32.mrb[0].mxu0
        %v1288 = vadd.f32 %v1179, %v1287
        %v1289 = vpop.f32.mrb[0].mxu0
        %v1290 = vpop.f32.mrb[0].mxu0
        %v1291 = vadd.f32 %v1179, %v1290
        %v1292 = vpop.f32.mrb[0].mxu0
        %1293 = vmatprep.mubr.bf16.mxu0 0
        %1294 = vmatmul.mubr.bf16.gmra.mrb[0].mxu0 %v1154
        %v1295 = vpop.f32.mrb[0].mxu0
        %v1296 = vadd.f32 %v1179, %v1295
        %v1297 = vpop.f32.mrb[0].mxu0
        %v1298 = vpop.f32.mrb[0].mxu0
        %v1299 = vadd.f32 %v1179, %v1298
        %v1300 = vpop.f32.mrb[0].mxu0
        %1301 = vmatprep.mubr.bf16.mxu0 0
        %1302 = vmatmul.mubr.bf16.gmra.mrb[0].mxu0 %v1155
        %v1303 = vpop.f32.mrb[0].mxu0
        %v1304 = vadd.f32 %v1179, %v1303
        %v1305 = vpop.f32.mrb[0].mxu0
        %v1306 = vpop.f32.mrb[0].mxu0
        %v1307 = vadd.f32 %v1179, %v1306
        %v1308 = vpop.f32.mrb[0].mxu0
        %1309 = vmatprep.mubr.bf16.mxu0 0
        %1310 = vmatmul.mubr.bf16.gmra.mrb[0].mxu0 %v1156
        %v1311 = vpop.f32.mrb[0].mxu0
        %v1312 = vadd.f32 %v1179, %v1311
        %v1313 = vpop.f32.mrb[0].mxu0
        %v1314 = vpop.f32.mrb[0].mxu0
        %v1315 = vadd.f32 %v1179, %v1314
        %v1316 = vpop.f32.mrb[0].mxu0
        %1317 = vmatprep.mubr.bf16.mxu0 0
        %1318 = vmatmul.mubr.bf16.gmra.mrb[0].mxu0 %v1157
        %v1319 = vpop.f32.mrb[0].mxu0
        %v1320 = vadd.f32 %v1179, %v1319
        %v1321 = vpop.f32.mrb[0].mxu0
        %v1322 = vpop.f32.mrb[0].mxu0
        %v1323 = vadd.f32 %v1179, %v1322
        %v1324 = vpop.f32.mrb[0].mxu0
        %1325 = vdwg.mxu0
        %1326 = vmax.xlane.f32.xlu0 %v1264
        %v1327 = vpop.xlane.xlu0 %1326
        %1328 = vmax.xlane.f32.xlu0 %v1267
        %v1329 = vpop.xlane.xlu0 %1328
        %1330 = vmax.xlane.f32.xlu0 %v1272
        %v1331 = vpop.xlane.xlu0 %1330
        %1332 = vmax.xlane.f32.xlu0 %v1275
        %v1333 = vpop.xlane.xlu0 %1332
        %1334 = vmax.xlane.f32.xlu0 %v1280
        %v1335 = vpop.xlane.xlu0 %1334
        %1336 = vmax.xlane.f32.xlu0 %v1283
        %v1337 = vpop.xlane.xlu0 %1336
        %1338 = vmax.xlane.f32.xlu0 %v1288
        %v1339 = vpop.xlane.xlu0 %1338
        %1340 = vmax.xlane.f32.xlu0 %v1291
        %v1341 = vpop.xlane.xlu0 %1340
        %1342 = vmax.xlane.f32.xlu0 %v1296
        %v1343 = vpop.xlane.xlu0 %1342
        %1344 = vmax.xlane.f32.xlu0 %v1299
        %v1345 = vpop.xlane.xlu0 %1344
        %1346 = vmax.xlane.f32.xlu0 %v1304
        %v1347 = vpop.xlane.xlu0 %1346
        %1348 = vmax.xlane.f32.xlu0 %v1307
        %v1349 = vpop.xlane.xlu0 %1348
        %1350 = vmax.xlane.f32.xlu0 %v1312
        %v1351 = vpop.xlane.xlu0 %1350
        %1352 = vmax.xlane.f32.xlu0 %v1315
        %v1353 = vpop.xlane.xlu0 %1352
        %1354 = vmax.xlane.f32.xlu0 %v1320
        %v1355 = vpop.xlane.xlu0 %1354
        %1356 = vmax.xlane.f32.xlu0 %v1323
        %v1357 = vpop.xlane.xlu0 %1356
        %v1358 = vsub.f32 %v1264, %v1327
        %v1359 = vsub.f32 %v1267, %v1329
        %v1360 = vsub.f32 %v1272, %v1331
        %v1361 = vsub.f32 %v1275, %v1333
        %v1362 = vsub.f32 %v1280, %v1335
        %v1363 = vsub.f32 %v1283, %v1337
        %v1364 = vsub.f32 %v1288, %v1339
        %v1365 = vsub.f32 %v1291, %v1341
        %v1366 = vsub.f32 %v1296, %v1343
        %v1367 = vsub.f32 %v1299, %v1345
        %v1368 = vsub.f32 %v1304, %v1347
        %v1369 = vsub.f32 %v1307, %v1349
        %v1370 = vsub.f32 %v1312, %v1351
        %v1371 = vsub.f32 %v1315, %v1353
        %v1372 = vsub.f32 %v1320, %v1355
        %v1373 = vsub.f32 %v1323, %v1357
        %v1374 = vmul.f32 %v1358, 1.442695
        %v1375 = vpow.pop %v1374
        %v1376 = vmul.f32 %v1359, 1.442695
        %v1377 = vpow.pop %v1376
        %v1378 = vmul.f32 %v1360, 1.442695
        %v1379 = vpow.pop %v1378
        %v1380 = vmul.f32 %v1361, 1.442695
        %v1381 = vpow.pop %v1380
        %v1382 = vmul.f32 %v1362, 1.442695
        %v1383 = vpow.pop %v1382
        %v1384 = vmul.f32 %v1363, 1.442695
        %v1385 = vpow.pop %v1384
        %v1386 = vmul.f32 %v1364, 1.442695
        %v1387 = vpow.pop %v1386
        %v1388 = vmul.f32 %v1365, 1.442695
        %v1389 = vpow.pop %v1388
        %v1390 = vmul.f32 %v1366, 1.442695
        %v1391 = vpow.pop %v1390
        %v1392 = vmul.f32 %v1367, 1.442695
        %v1393 = vpow.pop %v1392
        %v1394 = vmul.f32 %v1368, 1.442695
        %v1395 = vpow.pop %v1394
        %v1396 = vmul.f32 %v1369, 1.442695
        %v1397 = vpow.pop %v1396
        %v1398 = vmul.f32 %v1370, 1.442695
        %v1399 = vpow.pop %v1398
        %v1400 = vmul.f32 %v1371, 1.442695
        %v1401 = vpow.pop %v1400
        %v1402 = vmul.f32 %v1372, 1.442695
        %v1403 = vpow.pop %v1402
        %v1404 = vmul.f32 %v1373, 1.442695
        %v1405 = vpow.pop %v1404
        %1406 = vadd.xlane.f32.xlu0 %v1375
        %v1407 = vpop.xlane.xlu0 %1406
        %1408 = vadd.xlane.f32.xlu0 %v1377
        %v1409 = vpop.xlane.xlu0 %1408
        %1410 = vadd.xlane.f32.xlu0 %v1379
        %v1411 = vpop.xlane.xlu0 %1410
        %1412 = vadd.xlane.f32.xlu0 %v1381
        %v1413 = vpop.xlane.xlu0 %1412
        %1414 = vadd.xlane.f32.xlu0 %v1383
        %v1415 = vpop.xlane.xlu0 %1414
        %1416 = vadd.xlane.f32.xlu0 %v1385
        %v1417 = vpop.xlane.xlu0 %1416
        %1418 = vadd.xlane.f32.xlu0 %v1387
        %v1419 = vpop.xlane.xlu0 %1418
        %1420 = vadd.xlane.f32.xlu0 %v1389
        %v1421 = vpop.xlane.xlu0 %1420
        %1422 = vadd.xlane.f32.xlu0 %v1391
        %v1423 = vpop.xlane.xlu0 %1422
        %1424 = vadd.xlane.f32.xlu0 %v1393
        %v1425 = vpop.xlane.xlu0 %1424
        %1426 = vadd.xlane.f32.xlu0 %v1395
        %v1427 = vpop.xlane.xlu0 %1426
        %1428 = vadd.xlane.f32.xlu0 %v1397
        %v1429 = vpop.xlane.xlu0 %1428
        %1430 = vadd.xlane.f32.xlu0 %v1399
        %v1431 = vpop.xlane.xlu0 %1430
        %1432 = vadd.xlane.f32.xlu0 %v1401
        %v1433 = vpop.xlane.xlu0 %1432
        %1434 = vadd.xlane.f32.xlu0 %v1403
        %v1435 = vpop.xlane.xlu0 %1434
        %1436 = vadd.xlane.f32.xlu0 %v1405
        %v1437 = vpop.xlane.xlu0 %1436
        %v1438 = vlog2.pop %v1407
        %v1439 = vmul.f32 %v1438, 0.6931472
        %v1440 = vlog2.pop %v1409
        %v1441 = vmul.f32 %v1440, 0.6931472
        %v1442 = vlog2.pop %v1411
        %v1443 = vmul.f32 %v1442, 0.6931472
        %v1444 = vlog2.pop %v1413
        %v1445 = vmul.f32 %v1444, 0.6931472
        %v1446 = vlog2.pop %v1415
        %v1447 = vmul.f32 %v1446, 0.6931472
        %v1448 = vlog2.pop %v1417
        %v1449 = vmul.f32 %v1448, 0.6931472
        %v1450 = vlog2.pop %v1419
        %v1451 = vmul.f32 %v1450, 0.6931472
        %v1452 = vlog2.pop %v1421
        %v1453 = vmul.f32 %v1452, 0.6931472
        %v1454 = vlog2.pop %v1423
        %v1455 = vmul.f32 %v1454, 0.6931472
        %v1456 = vlog2.pop %v1425
        %v1457 = vmul.f32 %v1456, 0.6931472
        %v1458 = vlog2.pop %v1427
        %v1459 = vmul.f32 %v1458, 0.6931472
        %v1460 = vlog2.pop %v1429
        %v1461 = vmul.f32 %v1460, 0.6931472
        %v1462 = vlog2.pop %v1431
        %v1463 = vmul.f32 %v1462, 0.6931472
        %v1464 = vlog2.pop %v1433
        %v1465 = vmul.f32 %v1464, 0.6931472
        %v1466 = vlog2.pop %v1435
        %v1467 = vmul.f32 %v1466, 0.6931472
        %v1468 = vlog2.pop %v1437
        %v1469 = vmul.f32 %v1468, 0.6931472
        %v1470 = vsub.f32 %v1358, %v1439
        %v1471 = vsub.f32 %v1359, %v1441
        %v1472 = vsub.f32 %v1360, %v1443
        %v1473 = vsub.f32 %v1361, %v1445
        %v1474 = vsub.f32 %v1362, %v1447
        %v1475 = vsub.f32 %v1363, %v1449
        %v1476 = vsub.f32 %v1364, %v1451
        %v1477 = vsub.f32 %v1365, %v1453
        %v1478 = vsub.f32 %v1366, %v1455
        %v1479 = vsub.f32 %v1367, %v1457
        %v1480 = vsub.f32 %v1368, %v1459
        %v1481 = vsub.f32 %v1369, %v1461
        %v1482 = vsub.f32 %v1370, %v1463
        %v1483 = vsub.f32 %v1371, %v1465
        %v1484 = vsub.f32 %v1372, %v1467
        %v1485 = vsub.f32 %v1373, %v1469
        %v1486 = vpack.c.bf16 %v1471, %v1470
        %v1487 = vpack.c.bf16 %v1473, %v1472
        %v1488 = vpack.c.bf16 %v1475, %v1474
        %v1489 = vpack.c.bf16 %v1477, %v1476
        %v1490 = vpack.c.bf16 %v1479, %v1478
        %v1491 = vpack.c.bf16 %v1481, %v1480
        %v1492 = vpack.c.bf16 %v1483, %v1482
        %v1493 = vpack.c.bf16 %v1485, %v1484
        %v1502 = vunpack.c.l.b16 %v1486
        %v1503 = vunpack.c.h.b16 %v1486
        %v1504 = vunpack.c.l.b16 %v1487
        %v1505 = vunpack.c.h.b16 %v1487
        %v1506 = vunpack.c.l.b16 %v1488
        %v1507 = vunpack.c.h.b16 %v1488
        %v1508 = vunpack.c.l.b16 %v1489
        %v1509 = vunpack.c.h.b16 %v1489
        %v1510 = vunpack.c.l.b16 %v1490
        %v1511 = vunpack.c.h.b16 %v1490
        %v1512 = vunpack.c.l.b16 %v1491
        %v1513 = vunpack.c.h.b16 %v1491
        %v1514 = vunpack.c.l.b16 %v1492
        %v1515 = vunpack.c.h.b16 %v1492
        %v1516 = vunpack.c.l.b16 %v1493
        %v1517 = vunpack.c.h.b16 %v1493
        %v1518 = vpack.c.b16 %v1502, %v1502
        %v1519 = vpack.c.b16 %v1503, %v1503
        %v1520 = vpack.c.b16 %v1504, %v1504
        %v1521 = vpack.c.b16 %v1505, %v1505
        %v1522 = vpack.c.b16 %v1506, %v1506
        %v1523 = vpack.c.b16 %v1507, %v1507
        %v1524 = vpack.c.b16 %v1508, %v1508
        %v1525 = vpack.c.b16 %v1509, %v1509
        %v1526 = vpack.c.b16 %v1510, %v1510
        %v1527 = vpack.c.b16 %v1511, %v1511
        %v1528 = vpack.c.b16 %v1512, %v1512
        %v1529 = vpack.c.b16 %v1513, %v1513
        %v1530 = vpack.c.b16 %v1514, %v1514
        %v1531 = vpack.c.b16 %v1515, %v1515
        %v1532 = vpack.c.b16 %v1516, %v1516
        %v1533 = vpack.c.b16 %v1517, %v1517
        %1550 = vst [vmem:[%s380] sm:$0xf] %v1518
        %1551 = vst [vmem:[%s380 + $0x4] sm:$0xf] %v1519
        %1552 = vst [vmem:[%s380 + $0x8] sm:$0xf] %v1520
        %1553 = vst [vmem:[%s380 + $0xc] sm:$0xf] %v1521
        %1554 = vst [vmem:[%s380 + $0x10] sm:$0xf] %v1522
        %1555 = vst [vmem:[%s380 + $0x14] sm:$0xf] %v1523
        %1556 = vst [vmem:[%s380 + $0x18] sm:$0xf] %v1524
        %1557 = vst [vmem:[%s380 + $0x1c] sm:$0xf] %v1525
        %1558 = vst [vmem:[%s380 + $0x20] sm:$0xf] %v1526
        %1559 = vst [vmem:[%s380 + $0x24] sm:$0xf] %v1527
        %1560 = vst [vmem:[%s380 + $0x28] sm:$0xf] %v1528
        %1561 = vst [vmem:[%s380 + $0x2c] sm:$0xf] %v1529
        %1562 = vst [vmem:[%s380 + $0x30] sm:$0xf] %v1530
        %1563 = vst [vmem:[%s380 + $0x34] sm:$0xf] %v1531
        %1564 = vst [vmem:[%s380 + $0x38] sm:$0xf] %v1532
        %1565 = vst [vmem:[%s380 + $0x3c] sm:$0xf] %v1533
        %s1566 = sand.u32 %s269, 1
        %s1567 = scalar_lea.sflag [#allocation3], %s1566
        %s1568 = sand.u32 %s269, 1
        %s1569 = smul.addr %s1568, 64
        %s1570 = scalar_lea.vmem [#allocation2], %s1569
        // Predicated region
        $region65: #{tpu_custom_call.1} parent=63 // pred_check
          %p1571 = pneg %p279
        $region66: #{tpu_custom_call.1} parent=63 // pred_check_branch
          %1573 = sbr.rel (%p1571) target = $region68
        $region67: #{tpu_custom_call.1} parent=63 // pred_region
          %s1574 = smul.u32 16, %s25
          %s1576 = ssub.s32 1024, 1024
          %1577 = vsyncadd %s1567, %s1576
          %s1578 = smul.addr %s1574, 64
          %s1579 = scalar_lea.hbm %s11, %s1578
          %s1580 = sshll.u32 %s1570, 4
          %s1581 = int_to_ptr.vmem [resolvable:$true] %s1580
          %1586 = dma.vmem_to_hbm [thread:$0]  %s1581, 1024, %s1579, %s1567, 64, 64, 4
        $region68: #{tpu_custom_call.1} parent=63 // pred_fallthru
          _
      $region64: #{tpu_custom_call.1} parent=5 // pred_fallthru
        _
      %p1587 = scmp.le.s32.totalorder 2, %s20
      // Predicated region
      $region69: #{tpu_custom_call.1} parent=5 // pred_check
        %p1588 = pneg %p1587
      $region70: #{tpu_custom_call.1} parent=5 // pred_check_branch
        %1590 = sbr.rel (%p1588) target = $region72
      $region71: #{tpu_custom_call.1} parent=5 // pred_region
        %s1591 = ssub.s32 %s20, 2
        // Predicated region
        $region73: #{tpu_custom_call.1} parent=71 // pred_check
          %p1592 = pneg %p285
        $region74: #{tpu_custom_call.1} parent=71 // pred_check_branch
          %1594 = sbr.rel (%p1592) target = $region76
        $region75: #{tpu_custom_call.1} parent=71 // pred_region
          %s1595 = sand.u32 %s270, 1
          %s1596 = scalar_lea.sflag [#allocation3], %s1595
          %s1597 = sand.u32 %s270, 1
          %s1598 = smul.addr %s1597, 64
          %s1599 = scalar_lea.vmem [#allocation2], %s1598
          %1600 = dma.done %s1596, 1024
        $region76: #{tpu_custom_call.1} parent=71 // pred_fallthru
          _
      $region72: #{tpu_custom_call.1} parent=5 // pred_fallthru
        _
    $region6: #{tpu_custom_call.1} parent=1 // loop_footer
      %s24 = sadd.s32 1, %s20
    $region7: #{tpu_custom_call.1} parent=1 // loop_footer_branch
      %19 = sbr.rel target = $region3
    $region8: #{tpu_custom_call.1} parent=1 // loop_exit
      _
    %1601 = vsyncpa [#allocation3], 1
    %s1602 = scalar_lea.sflag [#allocation3], 1
    %1603 = vsyncpa %s1602, 1

// kernel: tpu_custom_call.1
$region0: #{tpu_custom_call.1}
  #allocation0 [shape = 'u32[]', space=smem, size = 0x4, offset = 0x4, fixed_abs, tag = 'smem constant byte address 0x4 - core index']
  #allocation1 [shape = 'u32[144,128]{1,0:T(1,128)}', space=vmem, size = 0x12000, scoped, tag = 'internal scratch']
  %s0 = inlined_call_operand.vmem [shape: f32[256,32], index: 0, kind: input, shape index: {}]
  %s1 = inlined_call_operand.vmem [shape: bf16[32,128], index: 1, kind: input, shape index: {}]
  %s2 = inlined_call_operand.vmem [shape: f32[1,128], index: 2, kind: input, shape index: {}]
  %s3 = inlined_call_operand.vmem [shape: bf16[128,128], index: 3, kind: input, shape index: {}]
  %s4 = inlined_call_operand.vmem [shape: f32[1,128], index: 4, kind: input, shape index: {}]
  %s5 = inlined_call_operand.vmem [shape: bf16[128,128], index: 5, kind: input, shape index: {}]
  %s6 = inlined_call_operand.vmem [shape: f32[1,128], index: 6, kind: input, shape index: {}]
  %s7 = inlined_call_operand.vmem [shape: bf16[128,128], index: 7, kind: input, shape index: {}]
  %s8 = inlined_call_operand.vmem [shape: f32[1,128], index: 8, kind: input, shape index: {}]
  %s9 = inlined_call_operand.vmem [shape: bf16[128,128], index: 9, kind: input, shape index: {}]
  %s10 = inlined_call_operand.vmem [shape: f32[1,128], index: 10, kind: input, shape index: {}]
  %s11 = inlined_call_operand.hbm [shape: bf16[256,128], index: 11, kind: output, shape index: {}]
  %s12 = sld [smem:[#allocation0]]
  $region77: #{tpu_custom_call.1} parent=0
    _
  %s14 = ssub.s32 1, %s12
  %s15 = scalar_select 0, %s14, %s12
  $region1: #{tpu_custom_call.1} parent=0
    #allocation2 [shape = 'u8[65536]{0}', space=vmem, size = 0x10000, scoped, tag = 'output window, operand 0']
    #allocation3 [shape = 's32[2]{0}', space=sflag, size = 0x8, scoped, tag = 'scoped memory for tpu_custom_call.1']
    %16 = vsyncpa [#allocation3], 0
    %s17 = scalar_lea.sflag [#allocation3], 1
    %18 = vsyncpa %s17, 0
    loop: start=0, step=1, limit=4
    $region2: #{tpu_custom_call.1} parent=1 // loop_pre_header
      _
    $region3: #{tpu_custom_call.1} parent=1 // loop_header
      %s20 = sphi 0, %s24
      %p21 = scmp.ge.s32.totalorder %s20, 4
      %s30 = sphi 0, %s32
      %s33 = sphi 0, %s30
      %s34 = sphi 0, %s33
      %s50 = sphi 0, %s34
      %s54 = sphi 0, %s54
      %s56 = sphi 0, %s54
      %s57 = sphi 0, %s56
      %s71 = sphi 0, %s57
      %s75 = sphi 0, %s75
      %s77 = sphi 0, %s75
      %s78 = sphi 0, %s77
      %s92 = sphi 0, %s78
      %s96 = sphi 0, %s96
      %s98 = sphi 0, %s96
      %s99 = sphi 0, %s98
      %s113 = sphi 0, %s99
      %s117 = sphi 0, %s117
      %s119 = sphi 0, %s117
      %s120 = sphi 0, %s119
      %s134 = sphi 0, %s120
      %s138 = sphi 0, %s138
      %s140 = sphi 0, %s138
      %s141 = sphi 0, %s140
      %s155 = sphi 0, %s141
      %s159 = sphi 0, %s159
      %s161 = sphi 0, %s159
      %s162 = sphi 0, %s161
      %s176 = sphi 0, %s162
      %s180 = sphi 0, %s180
      %s182 = sphi 0, %s180
      %s183 = sphi 0, %s182
      %s197 = sphi 0, %s183
      %s201 = sphi 0, %s201
      %s203 = sphi 0, %s201
      %s204 = sphi 0, %s203
      %s218 = sphi 0, %s204
      %s222 = sphi 0, %s222
      %s224 = sphi 0, %s222
      %s225 = sphi 0, %s224
      %s239 = sphi 0, %s225
      %s243 = sphi 0, %s243
      %s245 = sphi 0, %s243
      %s246 = sphi 0, %s245
      %s260 = sphi 0, %s246
      %s266 = sphi 0, %s268
      %s269 = sphi 0, %s266
      %s270 = sphi 0, %s269
      %s286 = sphi 0, %s270
    $region4: #{tpu_custom_call.1} parent=1 // loop_header_branch
      %23 = sbr.rel (%p21) target = $region8
    $region5: #{tpu_custom_call.1} parent=1 // loop_body
      %s25 = ssub.s32 %s20, 1
      %s26 = ssub.s32 %s20, 2
      %s27 = sadd.s32 %s20, 1
      %s28 = ssub.s32 %s20, %s27
      %p29 = scmp.eq.s32.totalorder %s28, 0
      %s31 = sadd.s32 %s30, 1
      %s32 = scalar_select %p29, %s30, %s31
      %p35 = pneg %p29
      %p36 = scmp.eq.s32.totalorder %s20, 1
      %p37 = por %p35, %p36
      %p38 = scmp.ne.s32.totalorder %s30, %s33
      %p39 = scmp.eq.s32.totalorder %s20, 0
      %p40 = por %p38, %p39
      %p41 = scmp.ne.s32.totalorder %s30, %s33
      %p42 = scmp.eq.s32.totalorder %s25, 1
      %p43 = por %p41, %p42
      %p44 = scmp.ne.s32.totalorder %s33, %s34
      %p45 = scmp.eq.s32.totalorder %s25, 0
      %p46 = por %p44, %p45
      %p47 = scmp.ne.s32.totalorder %s33, %s34
      %p48 = scmp.eq.s32.totalorder %s26, 1
      %p49 = por %p47, %p48
      %p51 = scmp.ne.s32.totalorder %s34, %s50
      %p52 = scmp.eq.s32.totalorder %s26, 0
      %p53 = por %p51, %p52
      %s55 = sadd.s32 %s54, 1
      %p58 = scmp.eq.s32.totalorder %s20, 1
      %p59 = scmp.ne.s32.totalorder %s54, %s56
      %p60 = scmp.eq.s32.totalorder %s20, 0
      %p61 = por %p59, %p60
      %p62 = scmp.ne.s32.totalorder %s54, %s56
      %p63 = scmp.eq.s32.totalorder %s25, 1
      %p64 = por %p62, %p63
      %p65 = scmp.ne.s32.totalorder %s56, %s57
      %p66 = scmp.eq.s32.totalorder %s25, 0
      %p67 = por %p65, %p66
      %p68 = scmp.ne.s32.totalorder %s56, %s57
      %p69 = scmp.eq.s32.totalorder %s26, 1
      %p70 = por %p68, %p69
      %p72 = scmp.ne.s32.totalorder %s57, %s71
      %p73 = scmp.eq.s32.totalorder %s26, 0
      %p74 = por %p72, %p73
      %s76 = sadd.s32 %s75, 1
      %p79 = scmp.eq.s32.totalorder %s20, 1
      %p80 = scmp.ne.s32.totalorder %s75, %s77
      %p81 = scmp.eq.s32.totalorder %s20, 0
      %p82 = por %p80, %p81
      %p83 = scmp.ne.s32.totalorder %s75, %s77
      %p84 = scmp.eq.s32.totalorder %s25, 1
      %p85 = por %p83, %p84
      %p86 = scmp.ne.s32.totalorder %s77, %s78
      %p87 = scmp.eq.s32.totalorder %s25, 0
      %p88 = por %p86, %p87
      %p89 = scmp.ne.s32.totalorder %s77, %s78
      %p90 = scmp.eq.s32.totalorder %s26, 1
      %p91 = por %p89, %p90
      %p93 = scmp.ne.s32.totalorder %s78, %s92
      %p94 = scmp.eq.s32.totalorder %s26, 0
      %p95 = por %p93, %p94
      %s97 = sadd.s32 %s96, 1
      %p100 = scmp.eq.s32.totalorder %s20, 1
      %p101 = scmp.ne.s32.totalorder %s96, %s98
      %p102 = scmp.eq.s32.totalorder %s20, 0
      %p103 = por %p101, %p102
      %p104 = scmp.ne.s32.totalorder %s96, %s98
      %p105 = scmp.eq.s32.totalorder %s25, 1
      %p106 = por %p104, %p105
      %p107 = scmp.ne.s32.totalorder %s98, %s99
      %p108 = scmp.eq.s32.totalorder %s25, 0
      %p109 = por %p107, %p108
      %p110 = scmp.ne.s32.totalorder %s98, %s99
      %p111 = scmp.eq.s32.totalorder %s26, 1
      %p112 = por %p110, %p111
      %p114 = scmp.ne.s32.totalorder %s99, %s113
      %p115 = scmp.eq.s32.totalorder %s26, 0
      %p116 = por %p114, %p115
      %s118 = sadd.s32 %s117, 1
      %p121 = scmp.eq.s32.totalorder %s20, 1
      %p122 = scmp.ne.s32.totalorder %s117, %s119
      %p123 = scmp.eq.s32.totalorder %s20, 0
      %p124 = por %p122, %p123
      %p125 = scmp.ne.s32.totalorder %s117, %s119
      %p126 = scmp.eq.s32.totalorder %s25, 1
      %p127 = por %p125, %p126
      %p128 = scmp.ne.s32.totalorder %s119, %s120
      %p129 = scmp.eq.s32.totalorder %s25, 0
      %p130 = por %p128, %p129
      %p131 = scmp.ne.s32.totalorder %s119, %s120
      %p132 = scmp.eq.s32.totalorder %s26, 1
      %p133 = por %p131, %p132
      %p135 = scmp.ne.s32.totalorder %s120, %s134
      %p136 = scmp.eq.s32.totalorder %s26, 0
      %p137 = por %p135, %p136
      %s139 = sadd.s32 %s138, 1
      %p142 = scmp.eq.s32.totalorder %s20, 1
      %p143 = scmp.ne.s32.totalorder %s138, %s140
      %p144 = scmp.eq.s32.totalorder %s20, 0
      %p145 = por %p143, %p144
      %p146 = scmp.ne.s32.totalorder %s138, %s140
      %p147 = scmp.eq.s32.totalorder %s25, 1
      %p148 = por %p146, %p147
      %p149 = scmp.ne.s32.totalorder %s140, %s141
      %p150 = scmp.eq.s32.totalorder %s25, 0
      %p151 = por %p149, %p150
      %p152 = scmp.ne.s32.totalorder %s140, %s141
      %p153 = scmp.eq.s32.totalorder %s26, 1
      %p154 = por %p152, %p153
      %p156 = scmp.ne.s32.totalorder %s141, %s155
      %p157 = scmp.eq.s32.totalorder %s26, 0
      %p158 = por %p156, %p157
      %s160 = sadd.s32 %s159, 1
      %p163 = scmp.eq.s32.totalorder %s20, 1
      %p164 = scmp.ne.s32.totalorder %s159, %s161
      %p165 = scmp.eq.s32.totalorder %s20, 0
      %p166 = por %p164, %p165
      %p167 = scmp.ne.s32.totalorder %s159, %s161
      %p168 = scmp.eq.s32.totalorder %s25, 1
      %p169 = por %p167, %p168
      %p170 = scmp.ne.s32.totalorder %s161, %s162
      %p171 = scmp.eq.s32.totalorder %s25, 0
      %p172 = por %p170, %p171
      %p173 = scmp.ne.s32.totalorder %s161, %s162
      %p174 = scmp.eq.s32.totalorder %s26, 1
      %p175 = por %p173, %p174
      %p177 = scmp.ne.s32.totalorder %s162, %s176
      %p178 = scmp.eq.s32.totalorder %s26, 0
      %p179 = por %p177, %p178
      %s181 = sadd.s32 %s180, 1
      %p184 = scmp.eq.s32.totalorder %s20, 1
      %p185 = scmp.ne.s32.totalorder %s180, %s182
      %p186 = scmp.eq.s32.totalorder %s20, 0
      %p187 = por %p185, %p186
      %p188 = scmp.ne.s32.totalorder %s180, %s182
      %p189 = scmp.eq.s32.totalorder %s25, 1
      %p190 = por %p188, %p189
      %p191 = scmp.ne.s32.totalorder %s182, %s183
      %p192 = scmp.eq.s32.totalorder %s25, 0
      %p193 = por %p191, %p192
      %p194 = scmp.ne.s32.totalorder %s182, %s183
      %p195 = scmp.eq.s32.totalorder %s26, 1
      %p196 = por %p194, %p195
      %p198 = scmp.ne.s32.totalorder %s183, %s197
      %p199 = scmp.eq.s32.totalorder %s26, 0
      %p200 = por %p198, %p199
      %s202 = sadd.s32 %s201, 1
      %p205 = scmp.eq.s32.totalorder %s20, 1
      %p206 = scmp.ne.s32.totalorder %s201, %s203
      %p207 = scmp.eq.s32.totalorder %s20, 0
      %p208 = por %p206, %p207
      %p209 = scmp.ne.s32.totalorder %s201, %s203
      %p210 = scmp.eq.s32.totalorder %s25, 1
      %p211 = por %p209, %p210
      %p212 = scmp.ne.s32.totalorder %s203, %s204
      %p213 = scmp.eq.s32.totalorder %s25, 0
      %p214 = por %p212, %p213
      %p215 = scmp.ne.s32.totalorder %s203, %s204
      %p216 = scmp.eq.s32.totalorder %s26, 1
      %p217 = por %p215, %p216
      %p219 = scmp.ne.s32.totalorder %s204, %s218
      %p220 = scmp.eq.s32.totalorder %s26, 0
      %p221 = por %p219, %p220
      %s223 = sadd.s32 %s222, 1
      %p226 = scmp.eq.s32.totalorder %s20, 1
      %p227 = scmp.ne.s32.totalorder %s222, %s224
      %p228 = scmp.eq.s32.totalorder %s20, 0
      %p229 = por %p227, %p228
      %p230 = scmp.ne.s32.totalorder %s222, %s224
      %p231 = scmp.eq.s32.totalorder %s25, 1
      %p232 = por %p230, %p231
      %p233 = scmp.ne.s32.totalorder %s224, %s225
      %p234 = scmp.eq.s32.totalorder %s25, 0
      %p235 = por %p233, %p234
      %p236 = scmp.ne.s32.totalorder %s224, %s225
      %p237 = scmp.eq.s32.totalorder %s26, 1
      %p238 = por %p236, %p237
      %p240 = scmp.ne.s32.totalorder %s225, %s239
      %p241 = scmp.eq.s32.totalorder %s26, 0
      %p242 = por %p240, %p241
      %s244 = sadd.s32 %s243, 1
      %p247 = scmp.eq.s32.totalorder %s20, 1
      %p248 = scmp.ne.s32.totalorder %s243, %s245
      %p249 = scmp.eq.s32.totalorder %s20, 0
      %p250 = por %p248, %p249
      %p251 = scmp.ne.s32.totalorder %s243, %s245
      %p252 = scmp.eq.s32.totalorder %s25, 1
      %p253 = por %p251, %p252
      %p254 = scmp.ne.s32.totalorder %s245, %s246
      %p255 = scmp.eq.s32.totalorder %s25, 0
      %p256 = por %p254, %p255
      %p257 = scmp.ne.s32.totalorder %s245, %s246
      %p258 = scmp.eq.s32.totalorder %s26, 1
      %p259 = por %p257, %p258
      %p261 = scmp.ne.s32.totalorder %s246, %s260
      %p262 = scmp.eq.s32.totalorder %s26, 0
      %p263 = por %p261, %p262
      %s264 = ssub.s32 %s20, %s27
      %p265 = scmp.eq.s32.totalorder %s264, 0
      %s267 = sadd.s32 %s266, 1
      %s268 = scalar_select %p265, %s266, %s267
      %p271 = pneg %p265
      %p272 = scmp.eq.s32.totalorder %s20, 1
      %p273 = por %p271, %p272
      %p274 = scmp.ne.s32.totalorder %s266, %s269
      %p275 = scmp.eq.s32.totalorder %s20, 0
      %p276 = por %p274, %p275
      %p277 = scmp.ne.s32.totalorder %s266, %s269
      %p278 = scmp.eq.s32.totalorder %s25, 1
      %p279 = por %p277, %p278
      %p280 = scmp.ne.s32.totalorder %s269, %s270
      %p281 = scmp.eq.s32.totalorder %s25, 0
      %p282 = por %p280, %p281
      %p283 = scmp.ne.s32.totalorder %s269, %s270
      %p284 = scmp.eq.s32.totalorder %s26, 1
      %p285 = por %p283, %p284
      %p287 = scmp.ne.s32.totalorder %s270, %s286
      %p288 = scmp.eq.s32.totalorder %s26, 0
      %p289 = por %p287, %p288
      %p290 = scmp.le.s32.totalorder 1, %s20
      %p291 = scmp.lt.s32.totalorder %s20, 3
      %p292 = pnand %p290, %p291
      %p293 = pneg %p292
      // Predicated region
      $region9: #{tpu_custom_call.1} parent=5 // pred_check
        _
      $region10: #{tpu_custom_call.1} parent=5 // pred_check_branch
        %295 = sbr.rel (%p292) target = $region12
      $region11: #{tpu_custom_call.1} parent=5 // pred_region
        %s296 = ssub.s32 %s20, 1
        // Predicated region
        $region13: #{tpu_custom_call.1} parent=11 // pred_check
          %p297 = pneg %p67
        $region14: #{tpu_custom_call.1} parent=11 // pred_check_branch
          %299 = sbr.rel (%p297) target = $region16
        $region15: #{tpu_custom_call.1} parent=11 // pred_region
          _
        $region16: #{tpu_custom_call.1} parent=11 // pred_fallthru
          _
        // Predicated region
        $region17: #{tpu_custom_call.1} parent=11 // pred_check
          %p300 = pneg %p88
        $region18: #{tpu_custom_call.1} parent=11 // pred_check_branch
          %302 = sbr.rel (%p300) target = $region20
        $region19: #{tpu_custom_call.1} parent=11 // pred_region
          _
        $region20: #{tpu_custom_call.1} parent=11 // pred_fallthru
          _
        // Predicated region
        $region21: #{tpu_custom_call.1} parent=11 // pred_check
          %p303 = pneg %p109
        $region22: #{tpu_custom_call.1} parent=11 // pred_check_branch
          %305 = sbr.rel (%p303) target = $region24
        $region23: #{tpu_custom_call.1} parent=11 // pred_region
          _
        $region24: #{tpu_custom_call.1} parent=11 // pred_fallthru
          _
        // Predicated region
        $region25: #{tpu_custom_call.1} parent=11 // pred_check
          %p306 = pneg %p130
        $region26: #{tpu_custom_call.1} parent=11 // pred_check_branch
          %308 = sbr.rel (%p306) target = $region28
        $region27: #{tpu_custom_call.1} parent=11 // pred_region
          _
        $region28: #{tpu_custom_call.1} parent=11 // pred_fallthru
          _
        // Predicated region
        $region29: #{tpu_custom_call.1} parent=11 // pred_check
          %p309 = pneg %p151
        $region30: #{tpu_custom_call.1} parent=11 // pred_check_branch
          %311 = sbr.rel (%p309) target = $region32
        $region31: #{tpu_custom_call.1} parent=11 // pred_region
          _
        $region32: #{tpu_custom_call.1} parent=11 // pred_fallthru
          _
        // Predicated region
        $region33: #{tpu_custom_call.1} parent=11 // pred_check
          %p312 = pneg %p172
        $region34: #{tpu_custom_call.1} parent=11 // pred_check_branch
          %314 = sbr.rel (%p312) target = $region36
        $region35: #{tpu_custom_call.1} parent=11 // pred_region
          _
        $region36: #{tpu_custom_call.1} parent=11 // pred_fallthru
          _
        // Predicated region
        $region37: #{tpu_custom_call.1} parent=11 // pred_check
          %p315 = pneg %p193
        $region38: #{tpu_custom_call.1} parent=11 // pred_check_branch
          %317 = sbr.rel (%p315) target = $region40
        $region39: #{tpu_custom_call.1} parent=11 // pred_region
          _
        $region40: #{tpu_custom_call.1} parent=11 // pred_fallthru
          _
        // Predicated region
        $region41: #{tpu_custom_call.1} parent=11 // pred_check
          %p318 = pneg %p214
        $region42: #{tpu_custom_call.1} parent=11 // pred_check_branch
          %320 = sbr.rel (%p318) target = $region44
        $region43: #{tpu_custom_call.1} parent=11 // pred_region
          _
        $region44: #{tpu_custom_call.1} parent=11 // pred_fallthru
          _
        // Predicated region
        $region45: #{tpu_custom_call.1} parent=11 // pred_check
          %p321 = pneg %p235
        $region46: #{tpu_custom_call.1} parent=11 // pred_check_branch
          %323 = sbr.rel (%p321) target = $region48
        $region47: #{tpu_custom_call.1} parent=11 // pred_region
          _
        $region48: #{tpu_custom_call.1} parent=11 // pred_fallthru
          _
        // Predicated region
        $region49: #{tpu_custom_call.1} parent=11 // pred_check
          %p324 = pneg %p256
        $region50: #{tpu_custom_call.1} parent=11 // pred_check_branch
          %326 = sbr.rel (%p324) target = $region52
        $region51: #{tpu_custom_call.1} parent=11 // pred_region
          _
        $region52: #{tpu_custom_call.1} parent=11 // pred_fallthru
          _
      $region12: #{tpu_custom_call.1} parent=5 // pred_fallthru
        _
      %p327 = scmp.lt.s32.totalorder %s20, 2
      // Predicated region
      $region53: #{tpu_custom_call.1} parent=5 // pred_check
        %p328 = pneg %p327
      $region54: #{tpu_custom_call.1} parent=5 // pred_check_branch
        %330 = sbr.rel (%p328) target = $region56
      $region55: #{tpu_custom_call.1} parent=5 // pred_region
        // Predicated region
        $region57: #{tpu_custom_call.1} parent=55 // pred_check
          %p331 = pneg %p40
        $region58: #{tpu_custom_call.1} parent=55 // pred_check_branch
          %333 = sbr.rel (%p331) target = $region60
        $region59: #{tpu_custom_call.1} parent=55 // pred_region
          %s334 = smul.u32 16, %s20
          %p335 = scmp.lt.s32.totalorder %s334, 31
          %s336 = scalar_select %p335, %s334, 31
          %s337 = smul.addr %s336, 8
          %s338 = scalar_lea.vmem %s0, %s337
          %s339 = smul.u32 16, %s20
        $region60: #{tpu_custom_call.1} parent=55 // pred_fallthru
          _
      $region56: #{tpu_custom_call.1} parent=5 // pred_fallthru
        _
      %p340 = scmp.le.s32.totalorder 1, %s20
      %p341 = scmp.lt.s32.totalorder %s20, 3
      %p342 = pnand %p340, %p341
      %p343 = pneg %p342
      // Predicated region
      $region61: #{tpu_custom_call.1} parent=5 // pred_check
        _
      $region62: #{tpu_custom_call.1} parent=5 // pred_check_branch
        %345 = sbr.rel (%p342) target = $region64
      $region63: #{tpu_custom_call.1} parent=5 // pred_region
        %s346 = ssub.s32 %s20, 1
        %s347 = smul.u32 16, %s25
        %p348 = scmp.lt.s32.totalorder %s347, 31
        %s349 = scalar_select %p348, %s347, 31
        %s350 = smul.addr %s349, 8
        %s351 = scalar_lea.vmem %s0, %s350
        %p352 = pneg %p46
        %p353 = pneg %p43
        %p354 = pneg %p67
        %p355 = pneg %p64
        %p356 = pneg %p88
        %p357 = pneg %p85
        %p358 = pneg %p109
        %p359 = pneg %p106
        %p360 = pneg %p130
        %p361 = pneg %p127
        %p362 = pneg %p151
        %p363 = pneg %p148
        %p364 = pneg %p172
        %p365 = pneg %p169
        %p366 = pneg %p193
        %p367 = pneg %p190
        %p368 = pneg %p214
        %p369 = pneg %p211
        %p370 = pneg %p235
        %p371 = pneg %p232
        %p372 = pneg %p256
        %p373 = pneg %p253
        %p374 = pneg %p282
        %p375 = pneg %p279
        %s376 = sand.u32 %s269, 1
        %s377 = scalar_lea.sflag [#allocation3], %s376
        %s378 = sand.u32 %s269, 1
        %s379 = smul.addr %s378, 64
        %s380 = scalar_lea.vmem [#allocation2], %s379
        %s381 = smul.u32 16, %s25
        %p382 = scmp.lt.s32.totalorder %s381, 31
        %s383 = scalar_select %p382, %s381, 31
        %s384 = smul.addr %s383, 8
        %s385 = scalar_lea.vmem %s0, %s384
        %s386 = smul.u32 16, %s25
        %s387 = smul.u32 16, %s25
        %v389 = vld [vmem:[%s385] sm:$0xff]
        %v390 = vld [vmem:[%s385 + $0x8] sm:$0xff]
        %v391 = vld [vmem:[%s385 + $0x10] sm:$0xff]
        %v392 = vld [vmem:[%s385 + $0x18] sm:$0xff]
        %v393 = vld [vmem:[%s385 + $0x20] sm:$0xff]
        %v394 = vld [vmem:[%s385 + $0x28] sm:$0xff]
        %v395 = vld [vmem:[%s385 + $0x30] sm:$0xff]
        %v396 = vld [vmem:[%s385 + $0x38] sm:$0xff]
        %v397 = vld [vmem:[%s385 + $0x40] sm:$0xff]
        %v398 = vld [vmem:[%s385 + $0x48] sm:$0xff]
        %v399 = vld [vmem:[%s385 + $0x50] sm:$0xff]
        %v400 = vld [vmem:[%s385 + $0x58] sm:$0xff]
        %v401 = vld [vmem:[%s385 + $0x60] sm:$0xff]
        %v402 = vld [vmem:[%s385 + $0x68] sm:$0xff]
        %v403 = vld [vmem:[%s385 + $0x70] sm:$0xff]
        %v404 = vld [vmem:[%s385 + $0x78] sm:$0xff]
        %v405 = vpack.c.bf16 %v390, %v389
        %v406 = vpack.c.bf16 %v392, %v391
        %v407 = vpack.c.bf16 %v394, %v393
        %v408 = vpack.c.bf16 %v396, %v395
        %v409 = vpack.c.bf16 %v398, %v397
        %v410 = vpack.c.bf16 %v400, %v399
        %v411 = vpack.c.bf16 %v402, %v401
        %v412 = vpack.c.bf16 %v404, %v403
        %v413 = vld [vmem:[%s1] sm:$0xf]
        %v414 = vld [vmem:[%s1 + $0x4] sm:$0xf]
        %v415 = vld [vmem:[%s1 + $0x8] sm:$0xf]
        %v416 = vld [vmem:[%s1 + $0xc] sm:$0xf]
        %v417 = vld [vmem:[%s2] sm:$0x1]
        %v419 = vlaneseq
        %v420 = vshrl.u32 %v419, 7
        %v421 = vsub.s32 0, %v420
        %v422 = vrot.slane %v417, %v421
        %v428 = vunpack.c.l.b16 %v413
        %v429 = vunpack.c.l.b16 %v414
        %v430 = vunpack.c.l.b16 %v415
        %v431 = vunpack.c.l.b16 %v416
        %v432 = vpack.c.b16 %v429, %v428
        %v433 = vpack.c.b16 %v431, %v430
        %vm436 = vcmask 261120
        %v438 = vsel %vm436, %v405, 0
        %v441 = vsel %vm436, %v406, 0
        %v444 = vsel %vm436, %v407, 0
        %v447 = vsel %vm436, %v408, 0
        %v450 = vsel %vm436, %v409, 0
        %v453 = vsel %vm436, %v410, 0
        %v456 = vsel %vm436, %v411, 0
        %v459 = vsel %vm436, %v412, 0
        %461 = vmatprep.subr.bf16.mxu0 0
        %462 = vmatpush1.bf16.msra.mxu0 %v432
        %463 = vmatprep.subr.bf16.mxu0 0
        %464 = vmatpush1.bf16.msra.mxu0 %v433
        %465 = vmatprep.subr.bf16.mxu0 0
        %466 = vmatpush1.bf16.msra.mxu0 0
        %467 = vmatprep.subr.bf16.mxu0 0
        %468 = vmatpush1.bf16.msra.mxu0 0
        %469 = vmatprep.subr.bf16.mxu0 0
        %470 = vmatpush1.bf16.msra.mxu0 0
        %471 = vmatprep.subr.bf16.mxu0 0
        %472 = vmatpush1.bf16.msra.mxu0 0
        %473 = vmatprep.subr.bf16.mxu0 0
        %474 = vmatpush1.bf16.msra.mxu0 0
        %475 = vmatprep.subr.bf16.mxu0 0
        %476 = vmatpush1.bf16.msra.mxu0 0
        %477 = vmatprep.subr.bf16.mxu0 0
        %478 = vmatpush1.bf16.msra.mxu0 0
        %479 = vmatprep.subr.bf16.mxu0 0
        %480 = vmatpush1.bf16.msra.mxu0 0
        %481 = vmatprep.subr.bf16.mxu0 0
        %482 = vmatpush1.bf16.msra.mxu0 0
        %483 = vmatprep.subr.bf16.mxu0 0
        %484 = vmatpush1.bf16.msra.mxu0 0
        %485 = vmatprep.subr.bf16.mxu0 0
        %486 = vmatpush1.bf16.msra.mxu0 0
        %487 = vmatprep.subr.bf16.mxu0 0
        %488 = vmatpush1.bf16.msra.mxu0 0
        %489 = vmatprep.subr.bf16.mxu0 0
        %490 = vmatpush1.bf16.msra.mxu0 0
        %491 = vmatprep.subr.bf16.mxu0 0
        %492 = vmatpush1.bf16.msra.mxu0 0
        %493 = vmatprep.mubr.bf16.mxu0 0
        %494 = vmatmul.mubr.bf16.gmra.mrb[0].mxu0 %v438
        %v495 = vpop.f32.mrb[0].mxu0
        %v496 = vadd.f32 %v422, %v495
        %v497 = vpop.f32.mrb[0].mxu0
        %v498 = vpop.f32.mrb[0].mxu0
        %v499 = vadd.f32 %v422, %v498
        %v500 = vpop.f32.mrb[0].mxu0
        %501 = vmatprep.mubr.bf16.mxu0 0
        %502 = vmatmul.mubr.bf16.gmra.mrb[0].mxu0 %v441
        %v503 = vpop.f32.mrb[0].mxu0
        %v504 = vadd.f32 %v422, %v503
        %v505 = vpop.f32.mrb[0].mxu0
        %v506 = vpop.f32.mrb[0].mxu0
        %v507 = vadd.f32 %v422, %v506
        %v508 = vpop.f32.mrb[0].mxu0
        %509 = vmatprep.mubr.bf16.mxu0 0
        %510 = vmatmul.mubr.bf16.gmra.mrb[0].mxu0 %v444
        %v511 = vpop.f32.mrb[0].mxu0
        %v512 = vadd.f32 %v422, %v511
        %v513 = vpop.f32.mrb[0].mxu0
        %v514 = vpop.f32.mrb[0].mxu0
        %v515 = vadd.f32 %v422, %v514
        %v516 = vpop.f32.mrb[0].mxu0
        %517 = vmatprep.mubr.bf16.mxu0 0
        %518 = vmatmul.mubr.bf16.gmra.mrb[0].mxu0 %v447
        %v519 = vpop.f32.mrb[0].mxu0
        %v520 = vadd.f32 %v422, %v519
        %v521 = vpop.f32.mrb[0].mxu0
        %v522 = vpop.f32.mrb[0].mxu0
        %v523 = vadd.f32 %v422, %v522
        %v524 = vpop.f32.mrb[0].mxu0
        %525 = vmatprep.mubr.bf16.mxu0 0
        %526 = vmatmul.mubr.bf16.gmra.mrb[0].mxu0 %v450
        %v527 = vpop.f32.mrb[0].mxu0
        %v528 = vadd.f32 %v422, %v527
        %v529 = vpop.f32.mrb[0].mxu0
        %v530 = vpop.f32.mrb[0].mxu0
        %v531 = vadd.f32 %v422, %v530
        %v532 = vpop.f32.mrb[0].mxu0
        %533 = vmatprep.mubr.bf16.mxu0 0
        %534 = vmatmul.mubr.bf16.gmra.mrb[0].mxu0 %v453
        %v535 = vpop.f32.mrb[0].mxu0
        %v536 = vadd.f32 %v422, %v535
        %v537 = vpop.f32.mrb[0].mxu0
        %v538 = vpop.f32.mrb[0].mxu0
        %v539 = vadd.f32 %v422, %v538
        %v540 = vpop.f32.mrb[0].mxu0
        %541 = vmatprep.mubr.bf16.mxu0 0
        %542 = vmatmul.mubr.bf16.gmra.mrb[0].mxu0 %v456
        %v543 = vpop.f32.mrb[0].mxu0
        %v544 = vadd.f32 %v422, %v543
        %v545 = vpop.f32.mrb[0].mxu0
        %v546 = vpop.f32.mrb[0].mxu0
        %v547 = vadd.f32 %v422, %v546
        %v548 = vpop.f32.mrb[0].mxu0
        %549 = vmatprep.mubr.bf16.mxu0 0
        %550 = vmatmul.mubr.bf16.gmra.mrb[0].mxu0 %v459
        %v551 = vpop.f32.mrb[0].mxu0
        %v552 = vadd.f32 %v422, %v551
        %v553 = vpop.f32.mrb[0].mxu0
        %v554 = vpop.f32.mrb[0].mxu0
        %v555 = vadd.f32 %v422, %v554
        %v556 = vpop.f32.mrb[0].mxu0
        %557 = vdwg.mxu0
        %v558 = vmax.f32 %v496, 0.0
        %v559 = vmax.f32 %v499, 0.0
        %v560 = vmax.f32 %v504, 0.0
        %v561 = vmax.f32 %v507, 0.0
        %v562 = vmax.f32 %v512, 0.0
        %v563 = vmax.f32 %v515, 0.0
        %v564 = vmax.f32 %v520, 0.0
        %v565 = vmax.f32 %v523, 0.0
        %v566 = vmax.f32 %v528, 0.0
        %v567 = vmax.f32 %v531, 0.0
        %v568 = vmax.f32 %v536, 0.0
        %v569 = vmax.f32 %v539, 0.0
        %v570 = vmax.f32 %v544, 0.0
        %v571 = vmax.f32 %v547, 0.0
        %v572 = vmax.f32 %v552, 0.0
        %v573 = vmax.f32 %v555, 0.0
        %v574 = vpack.c.bf16 %v559, %v558
        %v575 = vpack.c.bf16 %v561, %v560
        %v576 = vpack.c.bf16 %v563, %v562
        %v577 = vpack.c.bf16 %v565, %v564
        %v578 = vpack.c.bf16 %v567, %v566
        %v579 = vpack.c.bf16 %v569, %v568
        %v580 = vpack.c.bf16 %v571, %v570
        %v581 = vpack.c.bf16 %v573, %v572
        %v582 = vld [vmem:[%s3] sm:$0xf]
        %v583 = vld [vmem:[%s3 + $0x4] sm:$0xf]
        %v584 = vld [vmem:[%s3 + $0x8] sm:$0xf]
        %v585 = vld [vmem:[%s3 + $0xc] sm:$0xf]
        %v586 = vld [vmem:[%s3 + $0x10] sm:$0xf]
        %v587 = vld [vmem:[%s3 + $0x14] sm:$0xf]
        %v588 = vld [vmem:[%s3 + $0x18] sm:$0xf]
        %v589 = vld [vmem:[%s3 + $0x1c] sm:$0xf]
        %v590 = vld [vmem:[%s3 + $0x20] sm:$0xf]
        %v591 = vld [vmem:[%s3 + $0x24] sm:$0xf]
        %v592 = vld [vmem:[%s3 + $0x28] sm:$0xf]
        %v593 = vld [vmem:[%s3 + $0x2c] sm:$0xf]
        %v594 = vld [vmem:[%s3 + $0x30] sm:$0xf]
        %v595 = vld [vmem:[%s3 + $0x34] sm:$0xf]
        %v596 = vld [vmem:[%s3 + $0x38] sm:$0xf]
        %v597 = vld [vmem:[%s3 + $0x3c] sm:$0xf]
        %v598 = vld [vmem:[%s4] sm:$0x1]
        %v600 = vlaneseq
        %v601 = vshrl.u32 %v600, 7
        %v602 = vsub.s32 0, %v601
        %v603 = vrot.slane %v598, %v602
        %v621 = vunpack.c.l.b16 %v582
        %v622 = vunpack.c.l.b16 %v583
        %v623 = vunpack.c.l.b16 %v584
        %v624 = vunpack.c.l.b16 %v585
        %v625 = vunpack.c.l.b16 %v586
        %v626 = vunpack.c.l.b16 %v587
        %v627 = vunpack.c.l.b16 %v588
        %v628 = vunpack.c.l.b16 %v589
        %v629 = vunpack.c.l.b16 %v590
        %v630 = vunpack.c.l.b16 %v591
        %v631 = vunpack.c.l.b16 %v592
        %v632 = vunpack.c.l.b16 %v593
        %v633 = vunpack.c.l.b16 %v594
        %v634 = vunpack.c.l.b16 %v595
        %v635 = vunpack.c.l.b16 %v596
        %v636 = vunpack.c.l.b16 %v597
        %v637 = vpack.c.b16 %v622, %v621
        %v638 = vpack.c.b16 %v624, %v623
        %v639 = vpack.c.b16 %v626, %v625
        %v640 = vpack.c.b16 %v628, %v627
        %v641 = vpack.c.b16 %v630, %v629
        %v642 = vpack.c.b16 %v632, %v631
        %v643 = vpack.c.b16 %v634, %v633
        %v644 = vpack.c.b16 %v636, %v635
        %653 = vmatprep.subr.bf16.mxu0 0
        %654 = vmatpush1.bf16.msra.mxu0 %v637
        %655 = vmatprep.subr.bf16.mxu0 0
        %656 = vmatpush1.bf16.msra.mxu0 %v638
        %657 = vmatprep.subr.bf16.mxu0 0
        %658 = vmatpush1.bf16.msra.mxu0 %v639
        %659 = vmatprep.subr.bf16.mxu0 0
        %660 = vmatpush1.bf16.msra.mxu0 %v640
        %661 = vmatprep.subr.bf16.mxu0 0
        %662 = vmatpush1.bf16.msra.mxu0 %v641
        %663 = vmatprep.subr.bf16.mxu0 0
        %664 = vmatpush1.bf16.msra.mxu0 %v642
        %665 = vmatprep.subr.bf16.mxu0 0
        %666 = vmatpush1.bf16.msra.mxu0 %v643
        %667 = vmatprep.subr.bf16.mxu0 0
        %668 = vmatpush1.bf16.msra.mxu0 %v644
        %669 = vmatprep.subr.bf16.mxu0 0
        %670 = vmatpush1.bf16.msra.mxu0 0
        %671 = vmatprep.subr.bf16.mxu0 0
        %672 = vmatpush1.bf16.msra.mxu0 0
        %673 = vmatprep.subr.bf16.mxu0 0
        %674 = vmatpush1.bf16.msra.mxu0 0
        %675 = vmatprep.subr.bf16.mxu0 0
        %676 = vmatpush1.bf16.msra.mxu0 0
        %677 = vmatprep.subr.bf16.mxu0 0
        %678 = vmatpush1.bf16.msra.mxu0 0
        %679 = vmatprep.subr.bf16.mxu0 0
        %680 = vmatpush1.bf16.msra.mxu0 0
        %681 = vmatprep.subr.bf16.mxu0 0
        %682 = vmatpush1.bf16.msra.mxu0 0
        %683 = vmatprep.subr.bf16.mxu0 0
        %684 = vmatpush1.bf16.msra.mxu0 0
        %685 = vmatprep.mubr.bf16.mxu0 0
        %686 = vmatmul.mubr.bf16.gmra.mrb[0].mxu0 %v574
        %v687 = vpop.f32.mrb[0].mxu0
        %v688 = vadd.f32 %v603, %v687
        %v689 = vpop.f32.mrb[0].mxu0
        %v690 = vpop.f32.mrb[0].mxu0
        %v691 = vadd.f32 %v603, %v690
        %v692 = vpop.f32.mrb[0].mxu0
        %693 = vmatprep.mubr.bf16.mxu0 0
        %694 = vmatmul.mubr.bf16.gmra.mrb[0].mxu0 %v575
        %v695 = vpop.f32.mrb[0].mxu0
        %v696 = vadd.f32 %v603, %v695
        %v697 = vpop.f32.mrb[0].mxu0
        %v698 = vpop.f32.mrb[0].mxu0
        %v699 = vadd.f32 %v603, %v698
        %v700 = vpop.f32.mrb[0].mxu0
        %701 = vmatprep.mubr.bf16.mxu0 0
        %702 = vmatmul.mubr.bf16.gmra.mrb[0].mxu0 %v576
        %v703 = vpop.f32.mrb[0].mxu0
        %v704 = vadd.f32 %v603, %v703
        %v705 = vpop.f32.mrb[0].mxu0
        %v706 = vpop.f32.mrb[0].mxu0
        %v707 = vadd.f32 %v603, %v706
        %v708 = vpop.f32.mrb[0].mxu0
        %709 = vmatprep.mubr.bf16.mxu0 0
        %710 = vmatmul.mubr.bf16.gmra.mrb[0].mxu0 %v577
        %v711 = vpop.f32.mrb[0].mxu0
        %v712 = vadd.f32 %v603, %v711
        %v713 = vpop.f32.mrb[0].mxu0
        %v714 = vpop.f32.mrb[0].mxu0
        %v715 = vadd.f32 %v603, %v714
        %v716 = vpop.f32.mrb[0].mxu0
        %717 = vmatprep.mubr.bf16.mxu0 0
        %718 = vmatmul.mubr.bf16.gmra.mrb[0].mxu0 %v578
        %v719 = vpop.f32.mrb[0].mxu0
        %v720 = vadd.f32 %v603, %v719
        %v721 = vpop.f32.mrb[0].mxu0
        %v722 = vpop.f32.mrb[0].mxu0
        %v723 = vadd.f32 %v603, %v722
        %v724 = vpop.f32.mrb[0].mxu0
        %725 = vmatprep.mubr.bf16.mxu0 0
        %726 = vmatmul.mubr.bf16.gmra.mrb[0].mxu0 %v579
        %v727 = vpop.f32.mrb[0].mxu0
        %v728 = vadd.f32 %v603, %v727
        %v729 = vpop.f32.mrb[0].mxu0
        %v730 = vpop.f32.mrb[0].mxu0
        %v731 = vadd.f32 %v603, %v730
        %v732 = vpop.f32.mrb[0].mxu0
        %733 = vmatprep.mubr.bf16.mxu0 0
        %734 = vmatmul.mubr.bf16.gmra.mrb[0].mxu0 %v580
        %v735 = vpop.f32.mrb[0].mxu0
        %v736 = vadd.f32 %v603, %v735
        %v737 = vpop.f32.mrb[0].mxu0
        %v738 = vpop.f32.mrb[0].mxu0
        %v739 = vadd.f32 %v603, %v738
        %v740 = vpop.f32.mrb[0].mxu0
        %741 = vmatprep.mubr.bf16.mxu0 0
        %742 = vmatmul.mubr.bf16.gmra.mrb[0].mxu0 %v581
        %v743 = vpop.f32.mrb[0].mxu0
        %v744 = vadd.f32 %v603, %v743
        %v745 = vpop.f32.mrb[0].mxu0
        %v746 = vpop.f32.mrb[0].mxu0
        %v747 = vadd.f32 %v603, %v746
        %v748 = vpop.f32.mrb[0].mxu0
        %749 = vdwg.mxu0
        %v750 = vmax.f32 %v688, 0.0
        %v751 = vmax.f32 %v691, 0.0
        %v752 = vmax.f32 %v696, 0.0
        %v753 = vmax.f32 %v699, 0.0
        %v754 = vmax.f32 %v704, 0.0
        %v755 = vmax.f32 %v707, 0.0
        %v756 = vmax.f32 %v712, 0.0
        %v757 = vmax.f32 %v715, 0.0
        %v758 = vmax.f32 %v720, 0.0
        %v759 = vmax.f32 %v723, 0.0
        %v760 = vmax.f32 %v728, 0.0
        %v761 = vmax.f32 %v731, 0.0
        %v762 = vmax.f32 %v736, 0.0
        %v763 = vmax.f32 %v739, 0.0
        %v764 = vmax.f32 %v744, 0.0
        %v765 = vmax.f32 %v747, 0.0
        %v766 = vpack.c.bf16 %v751, %v750
        %v767 = vpack.c.bf16 %v753, %v752
        %v768 = vpack.c.bf16 %v755, %v754
        %v769 = vpack.c.bf16 %v757, %v756
        %v770 = vpack.c.bf16 %v759, %v758
        %v771 = vpack.c.bf16 %v761, %v760
        %v772 = vpack.c.bf16 %v763, %v762
        %v773 = vpack.c.bf16 %v765, %v764
        %v774 = vld [vmem:[%s5] sm:$0xf]
        %v775 = vld [vmem:[%s5 + $0x4] sm:$0xf]
        %v776 = vld [vmem:[%s5 + $0x8] sm:$0xf]
        %v777 = vld [vmem:[%s5 + $0xc] sm:$0xf]
        %v778 = vld [vmem:[%s5 + $0x10] sm:$0xf]
        %v779 = vld [vmem:[%s5 + $0x14] sm:$0xf]
        %v780 = vld [vmem:[%s5 + $0x18] sm:$0xf]
        %v781 = vld [vmem:[%s5 + $0x1c] sm:$0xf]
        %v782 = vld [vmem:[%s5 + $0x20] sm:$0xf]
        %v783 = vld [vmem:[%s5 + $0x24] sm:$0xf]
        %v784 = vld [vmem:[%s5 + $0x28] sm:$0xf]
        %v785 = vld [vmem:[%s5 + $0x2c] sm:$0xf]
        %v786 = vld [vmem:[%s5 + $0x30] sm:$0xf]
        %v787 = vld [vmem:[%s5 + $0x34] sm:$0xf]
        %v788 = vld [vmem:[%s5 + $0x38] sm:$0xf]
        %v789 = vld [vmem:[%s5 + $0x3c] sm:$0xf]
        %v790 = vld [vmem:[%s6] sm:$0x1]
        %v792 = vlaneseq
        %v793 = vshrl.u32 %v792, 7
        %v794 = vsub.s32 0, %v793
        %v795 = vrot.slane %v790, %v794
        %v813 = vunpack.c.l.b16 %v774
        %v814 = vunpack.c.l.b16 %v775
        %v815 = vunpack.c.l.b16 %v776
        %v816 = vunpack.c.l.b16 %v777
        %v817 = vunpack.c.l.b16 %v778
        %v818 = vunpack.c.l.b16 %v779
        %v819 = vunpack.c.l.b16 %v780
        %v820 = vunpack.c.l.b16 %v781
        %v821 = vunpack.c.l.b16 %v782
        %v822 = vunpack.c.l.b16 %v783
        %v823 = vunpack.c.l.b16 %v784
        %v824 = vunpack.c.l.b16 %v785
        %v825 = vunpack.c.l.b16 %v786
        %v826 = vunpack.c.l.b16 %v787
        %v827 = vunpack.c.l.b16 %v788
        %v828 = vunpack.c.l.b16 %v789
        %v829 = vpack.c.b16 %v814, %v813
        %v830 = vpack.c.b16 %v816, %v815
        %v831 = vpack.c.b16 %v818, %v817
        %v832 = vpack.c.b16 %v820, %v819
        %v833 = vpack.c.b16 %v822, %v821
        %v834 = vpack.c.b16 %v824, %v823
        %v835 = vpack.c.b16 %v826, %v825
        %v836 = vpack.c.b16 %v828, %v827
        %845 = vmatprep.subr.bf16.mxu0 0
        %846 = vmatpush1.bf16.msra.mxu0 %v829
        %847 = vmatprep.subr.bf16.mxu0 0
        %848 = vmatpush1.bf16.msra.mxu0 %v830
        %849 = vmatprep.subr.bf16.mxu0 0
        %850 = vmatpush1.bf16.msra.mxu0 %v831
        %851 = vmatprep.subr.bf16.mxu0 0
        %852 = vmatpush1.bf16.msra.mxu0 %v832
        %853 = vmatprep.subr.bf16.mxu0 0
        %854 = vmatpush1.bf16.msra.mxu0 %v833
        %855 = vmatprep.subr.bf16.mxu0 0
        %856 = vmatpush1.bf16.msra.mxu0 %v834
        %857 = vmatprep.subr.bf16.mxu0 0
        %858 = vmatpush1.bf16.msra.mxu0 %v835
        %859 = vmatprep.subr.bf16.mxu0 0
        %860 = vmatpush1.bf16.msra.mxu0 %v836
        %861 = vmatprep.subr.bf16.mxu0 0
        %862 = vmatpush1.bf16.msra.mxu0 0
        %863 = vmatprep.subr.bf16.mxu0 0
        %864 = vmatpush1.bf16.msra.mxu0 0
        %865 = vmatprep.subr.bf16.mxu0 0
        %866 = vmatpush1.bf16.msra.mxu0 0
        %867 = vmatprep.subr.bf16.mxu0 0
        %868 = vmatpush1.bf16.msra.mxu0 0
        %869 = vmatprep.subr.bf16.mxu0 0
        %870 = vmatpush1.bf16.msra.mxu0 0
        %871 = vmatprep.subr.bf16.mxu0 0
        %872 = vmatpush1.bf16.msra.mxu0 0
        %873 = vmatprep.subr.bf16.mxu0 0
        %874 = vmatpush1.bf16.msra.mxu0 0
        %875 = vmatprep.subr.bf16.mxu0 0
        %876 = vmatpush1.bf16.msra.mxu0 0
        %877 = vmatprep.mubr.bf16.mxu0 0
        %878 = vmatmul.mubr.bf16.gmra.mrb[0].mxu0 %v766
        %v879 = vpop.f32.mrb[0].mxu0
        %v880 = vadd.f32 %v795, %v879
        %v881 = vpop.f32.mrb[0].mxu0
        %v882 = vpop.f32.mrb[0].mxu0
        %v883 = vadd.f32 %v795, %v882
        %v884 = vpop.f32.mrb[0].mxu0
        %885 = vmatprep.mubr.bf16.mxu0 0
        %886 = vmatmul.mubr.bf16.gmra.mrb[0].mxu0 %v767
        %v887 = vpop.f32.mrb[0].mxu0
        %v888 = vadd.f32 %v795, %v887
        %v889 = vpop.f32.mrb[0].mxu0
        %v890 = vpop.f32.mrb[0].mxu0
        %v891 = vadd.f32 %v795, %v890
        %v892 = vpop.f32.mrb[0].mxu0
        %893 = vmatprep.mubr.bf16.mxu0 0
        %894 = vmatmul.mubr.bf16.gmra.mrb[0].mxu0 %v768
        %v895 = vpop.f32.mrb[0].mxu0
        %v896 = vadd.f32 %v795, %v895
        %v897 = vpop.f32.mrb[0].mxu0
        %v898 = vpop.f32.mrb[0].mxu0
        %v899 = vadd.f32 %v795, %v898
        %v900 = vpop.f32.mrb[0].mxu0
        %901 = vmatprep.mubr.bf16.mxu0 0
        %902 = vmatmul.mubr.bf16.gmra.mrb[0].mxu0 %v769
        %v903 = vpop.f32.mrb[0].mxu0
        %v904 = vadd.f32 %v795, %v903
        %v905 = vpop.f32.mrb[0].mxu0
        %v906 = vpop.f32.mrb[0].mxu0
        %v907 = vadd.f32 %v795, %v906
        %v908 = vpop.f32.mrb[0].mxu0
        %909 = vmatprep.mubr.bf16.mxu0 0
        %910 = vmatmul.mubr.bf16.gmra.mrb[0].mxu0 %v770
        %v911 = vpop.f32.mrb[0].mxu0
        %v912 = vadd.f32 %v795, %v911
        %v913 = vpop.f32.mrb[0].mxu0
        %v914 = vpop.f32.mrb[0].mxu0
        %v915 = vadd.f32 %v795, %v914
        %v916 = vpop.f32.mrb[0].mxu0
        %917 = vmatprep.mubr.bf16.mxu0 0
        %918 = vmatmul.mubr.bf16.gmra.mrb[0].mxu0 %v771
        %v919 = vpop.f32.mrb[0].mxu0
        %v920 = vadd.f32 %v795, %v919
        %v921 = vpop.f32.mrb[0].mxu0
        %v922 = vpop.f32.mrb[0].mxu0
        %v923 = vadd.f32 %v795, %v922
        %v924 = vpop.f32.mrb[0].mxu0
        %925 = vmatprep.mubr.bf16.mxu0 0
        %926 = vmatmul.mubr.bf16.gmra.mrb[0].mxu0 %v772
        %v927 = vpop.f32.mrb[0].mxu0
        %v928 = vadd.f32 %v795, %v927
        %v929 = vpop.f32.mrb[0].mxu0
        %v930 = vpop.f32.mrb[0].mxu0
        %v931 = vadd.f32 %v795, %v930
        %v932 = vpop.f32.mrb[0].mxu0
        %933 = vmatprep.mubr.bf16.mxu0 0
        %934 = vmatmul.mubr.bf16.gmra.mrb[0].mxu0 %v773
        %v935 = vpop.f32.mrb[0].mxu0
        %v936 = vadd.f32 %v795, %v935
        %v937 = vpop.f32.mrb[0].mxu0
        %v938 = vpop.f32.mrb[0].mxu0
        %v939 = vadd.f32 %v795, %v938
        %v940 = vpop.f32.mrb[0].mxu0
        %941 = vdwg.mxu0
        %v942 = vmax.f32 %v880, 0.0
        %v943 = vmax.f32 %v883, 0.0
        %v944 = vmax.f32 %v888, 0.0
        %v945 = vmax.f32 %v891, 0.0
        %v946 = vmax.f32 %v896, 0.0
        %v947 = vmax.f32 %v899, 0.0
        %v948 = vmax.f32 %v904, 0.0
        %v949 = vmax.f32 %v907, 0.0
        %v950 = vmax.f32 %v912, 0.0
        %v951 = vmax.f32 %v915, 0.0
        %v952 = vmax.f32 %v920, 0.0
        %v953 = vmax.f32 %v923, 0.0
        %v954 = vmax.f32 %v928, 0.0
        %v955 = vmax.f32 %v931, 0.0
        %v956 = vmax.f32 %v936, 0.0
        %v957 = vmax.f32 %v939, 0.0
        %v958 = vpack.c.bf16 %v943, %v942
        %v959 = vpack.c.bf16 %v945, %v944
        %v960 = vpack.c.bf16 %v947, %v946
        %v961 = vpack.c.bf16 %v949, %v948
        %v962 = vpack.c.bf16 %v951, %v950
        %v963 = vpack.c.bf16 %v953, %v952
        %v964 = vpack.c.bf16 %v955, %v954
        %v965 = vpack.c.bf16 %v957, %v956
        %v966 = vld [vmem:[%s7] sm:$0xf]
        %v967 = vld [vmem:[%s7 + $0x4] sm:$0xf]
        %v968 = vld [vmem:[%s7 + $0x8] sm:$0xf]
        %v969 = vld [vmem:[%s7 + $0xc] sm:$0xf]
        %v970 = vld [vmem:[%s7 + $0x10] sm:$0xf]
        %v971 = vld [vmem:[%s7 + $0x14] sm:$0xf]
        %v972 = vld [vmem:[%s7 + $0x18] sm:$0xf]
        %v973 = vld [vmem:[%s7 + $0x1c] sm:$0xf]
        %v974 = vld [vmem:[%s7 + $0x20] sm:$0xf]
        %v975 = vld [vmem:[%s7 + $0x24] sm:$0xf]
        %v976 = vld [vmem:[%s7 + $0x28] sm:$0xf]
        %v977 = vld [vmem:[%s7 + $0x2c] sm:$0xf]
        %v978 = vld [vmem:[%s7 + $0x30] sm:$0xf]
        %v979 = vld [vmem:[%s7 + $0x34] sm:$0xf]
        %v980 = vld [vmem:[%s7 + $0x38] sm:$0xf]
        %v981 = vld [vmem:[%s7 + $0x3c] sm:$0xf]
        %v982 = vld [vmem:[%s8] sm:$0x1]
        %v984 = vlaneseq
        %v985 = vshrl.u32 %v984, 7
        %v986 = vsub.s32 0, %v985
        %v987 = vrot.slane %v982, %v986
        %v1005 = vunpack.c.l.b16 %v966
        %v1006 = vunpack.c.l.b16 %v967
        %v1007 = vunpack.c.l.b16 %v968
        %v1008 = vunpack.c.l.b16 %v969
        %v1009 = vunpack.c.l.b16 %v970
        %v1010 = vunpack.c.l.b16 %v971
        %v1011 = vunpack.c.l.b16 %v972
        %v1012 = vunpack.c.l.b16 %v973
        %v1013 = vunpack.c.l.b16 %v974
        %v1014 = vunpack.c.l.b16 %v975
        %v1015 = vunpack.c.l.b16 %v976
        %v1016 = vunpack.c.l.b16 %v977
        %v1017 = vunpack.c.l.b16 %v978
        %v1018 = vunpack.c.l.b16 %v979
        %v1019 = vunpack.c.l.b16 %v980
        %v1020 = vunpack.c.l.b16 %v981
        %v1021 = vpack.c.b16 %v1006, %v1005
        %v1022 = vpack.c.b16 %v1008, %v1007
        %v1023 = vpack.c.b16 %v1010, %v1009
        %v1024 = vpack.c.b16 %v1012, %v1011
        %v1025 = vpack.c.b16 %v1014, %v1013
        %v1026 = vpack.c.b16 %v1016, %v1015
        %v1027 = vpack.c.b16 %v1018, %v1017
        %v1028 = vpack.c.b16 %v1020, %v1019
        %1037 = vmatprep.subr.bf16.mxu0 0
        %1038 = vmatpush1.bf16.msra.mxu0 %v1021
        %1039 = vmatprep.subr.bf16.mxu0 0
        %1040 = vmatpush1.bf16.msra.mxu0 %v1022
        %1041 = vmatprep.subr.bf16.mxu0 0
        %1042 = vmatpush1.bf16.msra.mxu0 %v1023
        %1043 = vmatprep.subr.bf16.mxu0 0
        %1044 = vmatpush1.bf16.msra.mxu0 %v1024
        %1045 = vmatprep.subr.bf16.mxu0 0
        %1046 = vmatpush1.bf16.msra.mxu0 %v1025
        %1047 = vmatprep.subr.bf16.mxu0 0
        %1048 = vmatpush1.bf16.msra.mxu0 %v1026
        %1049 = vmatprep.subr.bf16.mxu0 0
        %1050 = vmatpush1.bf16.msra.mxu0 %v1027
        %1051 = vmatprep.subr.bf16.mxu0 0
        %1052 = vmatpush1.bf16.msra.mxu0 %v1028
        %1053 = vmatprep.subr.bf16.mxu0 0
        %1054 = vmatpush1.bf16.msra.mxu0 0
        %1055 = vmatprep.subr.bf16.mxu0 0
        %1056 = vmatpush1.bf16.msra.mxu0 0
        %1057 = vmatprep.subr.bf16.mxu0 0
        %1058 = vmatpush1.bf16.msra.mxu0 0
        %1059 = vmatprep.subr.bf16.mxu0 0
        %1060 = vmatpush1.bf16.msra.mxu0 0
        %1061 = vmatprep.subr.bf16.mxu0 0
        %1062 = vmatpush1.bf16.msra.mxu0 0
        %1063 = vmatprep.subr.bf16.mxu0 0
        %1064 = vmatpush1.bf16.msra.mxu0 0
        %1065 = vmatprep.subr.bf16.mxu0 0
        %1066 = vmatpush1.bf16.msra.mxu0 0
        %1067 = vmatprep.subr.bf16.mxu0 0
        %1068 = vmatpush1.bf16.msra.mxu0 0
        %1069 = vmatprep.mubr.bf16.mxu0 0
        %1070 = vmatmul.mubr.bf16.gmra.mrb[0].mxu0 %v958
        %v1071 = vpop.f32.mrb[0].mxu0
        %v1072 = vadd.f32 %v987, %v1071
        %v1073 = vpop.f32.mrb[0].mxu0
        %v1074 = vpop.f32.mrb[0].mxu0
        %v1075 = vadd.f32 %v987, %v1074
        %v1076 = vpop.f32.mrb[0].mxu0
        %1077 = vmatprep.mubr.bf16.mxu0 0
        %1078 = vmatmul.mubr.bf16.gmra.mrb[0].mxu0 %v959
        %v1079 = vpop.f32.mrb[0].mxu0
        %v1080 = vadd.f32 %v987, %v1079
        %v1081 = vpop.f32.mrb[0].mxu0
        %v1082 = vpop.f32.mrb[0].mxu0
        %v1083 = vadd.f32 %v987, %v1082
        %v1084 = vpop.f32.mrb[0].mxu0
        %1085 = vmatprep.mubr.bf16.mxu0 0
        %1086 = vmatmul.mubr.bf16.gmra.mrb[0].mxu0 %v960
        %v1087 = vpop.f32.mrb[0].mxu0
        %v1088 = vadd.f32 %v987, %v1087
        %v1089 = vpop.f32.mrb[0].mxu0
        %v1090 = vpop.f32.mrb[0].mxu0
        %v1091 = vadd.f32 %v987, %v1090
        %v1092 = vpop.f32.mrb[0].mxu0
        %1093 = vmatprep.mubr.bf16.mxu0 0
        %1094 = vmatmul.mubr.bf16.gmra.mrb[0].mxu0 %v961
        %v1095 = vpop.f32.mrb[0].mxu0
        %v1096 = vadd.f32 %v987, %v1095
        %v1097 = vpop.f32.mrb[0].mxu0
        %v1098 = vpop.f32.mrb[0].mxu0
        %v1099 = vadd.f32 %v987, %v1098
        %v1100 = vpop.f32.mrb[0].mxu0
        %1101 = vmatprep.mubr.bf16.mxu0 0
        %1102 = vmatmul.mubr.bf16.gmra.mrb[0].mxu0 %v962
        %v1103 = vpop.f32.mrb[0].mxu0
        %v1104 = vadd.f32 %v987, %v1103
        %v1105 = vpop.f32.mrb[0].mxu0
        %v1106 = vpop.f32.mrb[0].mxu0
        %v1107 = vadd.f32 %v987, %v1106
        %v1108 = vpop.f32.mrb[0].mxu0
        %1109 = vmatprep.mubr.bf16.mxu0 0
        %1110 = vmatmul.mubr.bf16.gmra.mrb[0].mxu0 %v963
        %v1111 = vpop.f32.mrb[0].mxu0
        %v1112 = vadd.f32 %v987, %v1111
        %v1113 = vpop.f32.mrb[0].mxu0
        %v1114 = vpop.f32.mrb[0].mxu0
        %v1115 = vadd.f32 %v987, %v1114
        %v1116 = vpop.f32.mrb[0].mxu0
        %1117 = vmatprep.mubr.bf16.mxu0 0
        %1118 = vmatmul.mubr.bf16.gmra.mrb[0].mxu0 %v964
        %v1119 = vpop.f32.mrb[0].mxu0
        %v1120 = vadd.f32 %v987, %v1119
        %v1121 = vpop.f32.mrb[0].mxu0
        %v1122 = vpop.f32.mrb[0].mxu0
        %v1123 = vadd.f32 %v987, %v1122
        %v1124 = vpop.f32.mrb[0].mxu0
        %1125 = vmatprep.mubr.bf16.mxu0 0
        %1126 = vmatmul.mubr.bf16.gmra.mrb[0].mxu0 %v965
        %v1127 = vpop.f32.mrb[0].mxu0
        %v1128 = vadd.f32 %v987, %v1127
        %v1129 = vpop.f32.mrb[0].mxu0
        %v1130 = vpop.f32.mrb[0].mxu0
        %v1131 = vadd.f32 %v987, %v1130
        %v1132 = vpop.f32.mrb[0].mxu0
        %1133 = vdwg.mxu0
        %v1134 = vmax.f32 %v1072, 0.0
        %v1135 = vmax.f32 %v1075, 0.0
        %v1136 = vmax.f32 %v1080, 0.0
        %v1137 = vmax.f32 %v1083, 0.0
        %v1138 = vmax.f32 %v1088, 0.0
        %v1139 = vmax.f32 %v1091, 0.0
        %v1140 = vmax.f32 %v1096, 0.0
        %v1141 = vmax.f32 %v1099, 0.0
        %v1142 = vmax.f32 %v1104, 0.0
        %v1143 = vmax.f32 %v1107, 0.0
        %v1144 = vmax.f32 %v1112, 0.0
        %v1145 = vmax.f32 %v1115, 0.0
        %v1146 = vmax.f32 %v1120, 0.0
        %v1147 = vmax.f32 %v1123, 0.0
        %v1148 = vmax.f32 %v1128, 0.0
        %v1149 = vmax.f32 %v1131, 0.0
        %v1150 = vpack.c.bf16 %v1135, %v1134
        %v1151 = vpack.c.bf16 %v1137, %v1136
        %v1152 = vpack.c.bf16 %v1139, %v1138
        %v1153 = vpack.c.bf16 %v1141, %v1140
        %v1154 = vpack.c.bf16 %v1143, %v1142
        %v1155 = vpack.c.bf16 %v1145, %v1144
        %v1156 = vpack.c.bf16 %v1147, %v1146
        %v1157 = vpack.c.bf16 %v1149, %v1148
        %v1158 = vld [vmem:[%s9] sm:$0xf]
        %v1159 = vld [vmem:[%s9 + $0x4] sm:$0xf]
        %v1160 = vld [vmem:[%s9 + $0x8] sm:$0xf]
        %v1161 = vld [vmem:[%s9 + $0xc] sm:$0xf]
        %v1162 = vld [vmem:[%s9 + $0x10] sm:$0xf]
        %v1163 = vld [vmem:[%s9 + $0x14] sm:$0xf]
        %v1164 = vld [vmem:[%s9 + $0x18] sm:$0xf]
        %v1165 = vld [vmem:[%s9 + $0x1c] sm:$0xf]
        %v1166 = vld [vmem:[%s9 + $0x20] sm:$0xf]
        %v1167 = vld [vmem:[%s9 + $0x24] sm:$0xf]
        %v1168 = vld [vmem:[%s9 + $0x28] sm:$0xf]
        %v1169 = vld [vmem:[%s9 + $0x2c] sm:$0xf]
        %v1170 = vld [vmem:[%s9 + $0x30] sm:$0xf]
        %v1171 = vld [vmem:[%s9 + $0x34] sm:$0xf]
        %v1172 = vld [vmem:[%s9 + $0x38] sm:$0xf]
        %v1173 = vld [vmem:[%s9 + $0x3c] sm:$0xf]
        %v1174 = vld [vmem:[%s10] sm:$0x1]
        %v1176 = vlaneseq
        %v1177 = vshrl.u32 %v1176, 7
        %v1178 = vsub.s32 0, %v1177
        %v1179 = vrot.slane %v1174, %v1178
        %v1197 = vunpack.c.l.b16 %v1158
        %v1198 = vunpack.c.l.b16 %v1159
        %v1199 = vunpack.c.l.b16 %v1160
        %v1200 = vunpack.c.l.b16 %v1161
        %v1201 = vunpack.c.l.b16 %v1162
        %v1202 = vunpack.c.l.b16 %v1163
        %v1203 = vunpack.c.l.b16 %v1164
        %v1204 = vunpack.c.l.b16 %v1165
        %v1205 = vunpack.c.l.b16 %v1166
        %v1206 = vunpack.c.l.b16 %v1167
        %v1207 = vunpack.c.l.b16 %v1168
        %v1208 = vunpack.c.l.b16 %v1169
        %v1209 = vunpack.c.l.b16 %v1170
        %v1210 = vunpack.c.l.b16 %v1171
        %v1211 = vunpack.c.l.b16 %v1172
        %v1212 = vunpack.c.l.b16 %v1173
        %v1213 = vpack.c.b16 %v1198, %v1197
        %v1214 = vpack.c.b16 %v1200, %v1199
        %v1215 = vpack.c.b16 %v1202, %v1201
        %v1216 = vpack.c.b16 %v1204, %v1203
        %v1217 = vpack.c.b16 %v1206, %v1205
        %v1218 = vpack.c.b16 %v1208, %v1207
        %v1219 = vpack.c.b16 %v1210, %v1209
        %v1220 = vpack.c.b16 %v1212, %v1211
        %1229 = vmatprep.subr.bf16.mxu0 0
        %1230 = vmatpush1.bf16.msra.mxu0 %v1213
        %1231 = vmatprep.subr.bf16.mxu0 0
        %1232 = vmatpush1.bf16.msra.mxu0 %v1214
        %1233 = vmatprep.subr.bf16.mxu0 0
        %1234 = vmatpush1.bf16.msra.mxu0 %v1215
        %1235 = vmatprep.subr.bf16.mxu0 0
        %1236 = vmatpush1.bf16.msra.mxu0 %v1216
        %1237 = vmatprep.subr.bf16.mxu0 0
        %1238 = vmatpush1.bf16.msra.mxu0 %v1217
        %1239 = vmatprep.subr.bf16.mxu0 0
        %1240 = vmatpush1.bf16.msra.mxu0 %v1218
        %1241 = vmatprep.subr.bf16.mxu0 0
        %1242 = vmatpush1.bf16.msra.mxu0 %v1219
        %1243 = vmatprep.subr.bf16.mxu0 0
        %1244 = vmatpush1.bf16.msra.mxu0 %v1220
        %1245 = vmatprep.subr.bf16.mxu0 0
        %1246 = vmatpush1.bf16.msra.mxu0 0
        %1247 = vmatprep.subr.bf16.mxu0 0
        %1248 = vmatpush1.bf16.msra.mxu0 0
        %1249 = vmatprep.subr.bf16.mxu0 0
        %1250 = vmatpush1.bf16.msra.mxu0 0
        %1251 = vmatprep.subr.bf16.mxu0 0
        %1252 = vmatpush1.bf16.msra.mxu0 0
        %1253 = vmatprep.subr.bf16.mxu0 0
        %1254 = vmatpush1.bf16.msra.mxu0 0
        %1255 = vmatprep.subr.bf16.mxu0 0
        %1256 = vmatpush1.bf16.msra.mxu0 0
        %1257 = vmatprep.subr.bf16.mxu0 0
        %1258 = vmatpush1.bf16.msra.mxu0 0
        %1259 = vmatprep.subr.bf16.mxu0 0
        %1260 = vmatpush1.bf16.msra.mxu0 0
        %1261 = vmatprep.mubr.bf16.mxu0 0
        %1262 = vmatmul.mubr.bf16.gmra.mrb[0].mxu0 %v1150
        %v1263 = vpop.f32.mrb[0].mxu0
        %v1264 = vadd.f32 %v1179, %v1263
        %v1265 = vpop.f32.mrb[0].mxu0
        %v1266 = vpop.f32.mrb[0].mxu0
        %v1267 = vadd.f32 %v1179, %v1266
        %v1268 = vpop.f32.mrb[0].mxu0
        %1269 = vmatprep.mubr.bf16.mxu0 0
        %1270 = vmatmul.mubr.bf16.gmra.mrb[0].mxu0 %v1151
        %v1271 = vpop.f32.mrb[0].mxu0
        %v1272 = vadd.f32 %v1179, %v1271
        %v1273 = vpop.f32.mrb[0].mxu0
        %v1274 = vpop.f32.mrb[0].mxu0
        %v1275 = vadd.f32 %v1179, %v1274
        %v1276 = vpop.f32.mrb[0].mxu0
        %1277 = vmatprep.mubr.bf16.mxu0 0
        %1278 = vmatmul.mubr.bf16.gmra.mrb[0].mxu0 %v1152
        %v1279 = vpop.f32.mrb[0].mxu0
        %v1280 = vadd.f32 %v1179, %v1279
        %v1281 = vpop.f32.mrb[0].mxu0
        %v1282 = vpop.f32.mrb[0].mxu0
        %v1283 = vadd.f32 %v1179, %v1282
        %v1284 = vpop.f32.mrb[0].mxu0
        %1285 = vmatprep.mubr.bf16.mxu0 0
        %1286 = vmatmul.mubr.bf16.gmra.mrb[0].mxu0 %v1153
        %v1287 = vpop.f32.mrb[0].mxu0
        %v1288 = vadd.f32 %v1179, %v1287
        %v1289 = vpop.f32.mrb[0].mxu0
        %v1290 = vpop.f32.mrb[0].mxu0
        %v1291 = vadd.f32 %v1179, %v1290
        %v1292 = vpop.f32.mrb[0].mxu0
        %1293 = vmatprep.mubr.bf16.mxu0 0
        %1294 = vmatmul.mubr.bf16.gmra.mrb[0].mxu0 %v1154
        %v1295 = vpop.f32.mrb[0].mxu0
        %v1296 = vadd.f32 %v1179, %v1295
        %v1297 = vpop.f32.mrb[0].mxu0
        %v1298 = vpop.f32.mrb[0].mxu0
        %v1299 = vadd.f32 %v1179, %v1298
        %v1300 = vpop.f32.mrb[0].mxu0
        %1301 = vmatprep.mubr.bf16.mxu0 0
        %1302 = vmatmul.mubr.bf16.gmra.mrb[0].mxu0 %v1155
        %v1303 = vpop.f32.mrb[0].mxu0
        %v1304 = vadd.f32 %v1179, %v1303
        %v1305 = vpop.f32.mrb[0].mxu0
        %v1306 = vpop.f32.mrb[0].mxu0
        %v1307 = vadd.f32 %v1179, %v1306
        %v1308 = vpop.f32.mrb[0].mxu0
        %1309 = vmatprep.mubr.bf16.mxu0 0
        %1310 = vmatmul.mubr.bf16.gmra.mrb[0].mxu0 %v1156
        %v1311 = vpop.f32.mrb[0].mxu0
        %v1312 = vadd.f32 %v1179, %v1311
        %v1313 = vpop.f32.mrb[0].mxu0
        %v1314 = vpop.f32.mrb[0].mxu0
        %v1315 = vadd.f32 %v1179, %v1314
        %v1316 = vpop.f32.mrb[0].mxu0
        %1317 = vmatprep.mubr.bf16.mxu0 0
        %1318 = vmatmul.mubr.bf16.gmra.mrb[0].mxu0 %v1157
        %v1319 = vpop.f32.mrb[0].mxu0
        %v1320 = vadd.f32 %v1179, %v1319
        %v1321 = vpop.f32.mrb[0].mxu0
        %v1322 = vpop.f32.mrb[0].mxu0
        %v1323 = vadd.f32 %v1179, %v1322
        %v1324 = vpop.f32.mrb[0].mxu0
        %1325 = vdwg.mxu0
        %1326 = vmax.xlane.f32.xlu0 %v1264
        %v1327 = vpop.xlane.xlu0 %1326
        %1328 = vmax.xlane.f32.xlu0 %v1267
        %v1329 = vpop.xlane.xlu0 %1328
        %1330 = vmax.xlane.f32.xlu0 %v1272
        %v1331 = vpop.xlane.xlu0 %1330
        %1332 = vmax.xlane.f32.xlu0 %v1275
        %v1333 = vpop.xlane.xlu0 %1332
        %1334 = vmax.xlane.f32.xlu0 %v1280
        %v1335 = vpop.xlane.xlu0 %1334
        %1336 = vmax.xlane.f32.xlu0 %v1283
        %v1337 = vpop.xlane.xlu0 %1336
        %1338 = vmax.xlane.f32.xlu0 %v1288
        %v1339 = vpop.xlane.xlu0 %1338
        %1340 = vmax.xlane.f32.xlu0 %v1291
        %v1341 = vpop.xlane.xlu0 %1340
        %1342 = vmax.xlane.f32.xlu0 %v1296
        %v1343 = vpop.xlane.xlu0 %1342
        %1344 = vmax.xlane.f32.xlu0 %v1299
        %v1345 = vpop.xlane.xlu0 %1344
        %1346 = vmax.xlane.f32.xlu0 %v1304
        %v1347 = vpop.xlane.xlu0 %1346
        %1348 = vmax.xlane.f32.xlu0 %v1307
        %v1349 = vpop.xlane.xlu0 %1348
        %1350 = vmax.xlane.f32.xlu0 %v1312
        %v1351 = vpop.xlane.xlu0 %1350
        %1352 = vmax.xlane.f32.xlu0 %v1315
        %v1353 = vpop.xlane.xlu0 %1352
        %1354 = vmax.xlane.f32.xlu0 %v1320
        %v1355 = vpop.xlane.xlu0 %1354
        %1356 = vmax.xlane.f32.xlu0 %v1323
        %v1357 = vpop.xlane.xlu0 %1356
        %v1358 = vsub.f32 %v1264, %v1327
        %v1359 = vsub.f32 %v1267, %v1329
        %v1360 = vsub.f32 %v1272, %v1331
        %v1361 = vsub.f32 %v1275, %v1333
        %v1362 = vsub.f32 %v1280, %v1335
        %v1363 = vsub.f32 %v1283, %v1337
        %v1364 = vsub.f32 %v1288, %v1339
        %v1365 = vsub.f32 %v1291, %v1341
        %v1366 = vsub.f32 %v1296, %v1343
        %v1367 = vsub.f32 %v1299, %v1345
        %v1368 = vsub.f32 %v1304, %v1347
        %v1369 = vsub.f32 %v1307, %v1349
        %v1370 = vsub.f32 %v1312, %v1351
        %v1371 = vsub.f32 %v1315, %v1353
        %v1372 = vsub.f32 %v1320, %v1355
        %v1373 = vsub.f32 %v1323, %v1357
        %v1374 = vmul.f32 %v1358, 1.442695
        %v1375 = vpow.pop %v1374
        %v1376 = vmul.f32 %v1359, 1.442695
        %v1377 = vpow.pop %v1376
        %v1378 = vmul.f32 %v1360, 1.442695
        %v1379 = vpow.pop %v1378
        %v1380 = vmul.f32 %v1361, 1.442695
        %v1381 = vpow.pop %v1380
        %v1382 = vmul.f32 %v1362, 1.442695
        %v1383 = vpow.pop %v1382
        %v1384 = vmul.f32 %v1363, 1.442695
        %v1385 = vpow.pop %v1384
        %v1386 = vmul.f32 %v1364, 1.442695
        %v1387 = vpow.pop %v1386
        %v1388 = vmul.f32 %v1365, 1.442695
        %v1389 = vpow.pop %v1388
        %v1390 = vmul.f32 %v1366, 1.442695
        %v1391 = vpow.pop %v1390
        %v1392 = vmul.f32 %v1367, 1.442695
        %v1393 = vpow.pop %v1392
        %v1394 = vmul.f32 %v1368, 1.442695
        %v1395 = vpow.pop %v1394
        %v1396 = vmul.f32 %v1369, 1.442695
        %v1397 = vpow.pop %v1396
        %v1398 = vmul.f32 %v1370, 1.442695
        %v1399 = vpow.pop %v1398
        %v1400 = vmul.f32 %v1371, 1.442695
        %v1401 = vpow.pop %v1400
        %v1402 = vmul.f32 %v1372, 1.442695
        %v1403 = vpow.pop %v1402
        %v1404 = vmul.f32 %v1373, 1.442695
        %v1405 = vpow.pop %v1404
        %1406 = vadd.xlane.f32.xlu0 %v1375
        %v1407 = vpop.xlane.xlu0 %1406
        %1408 = vadd.xlane.f32.xlu0 %v1377
        %v1409 = vpop.xlane.xlu0 %1408
        %1410 = vadd.xlane.f32.xlu0 %v1379
        %v1411 = vpop.xlane.xlu0 %1410
        %1412 = vadd.xlane.f32.xlu0 %v1381
        %v1413 = vpop.xlane.xlu0 %1412
        %1414 = vadd.xlane.f32.xlu0 %v1383
        %v1415 = vpop.xlane.xlu0 %1414
        %1416 = vadd.xlane.f32.xlu0 %v1385
        %v1417 = vpop.xlane.xlu0 %1416
        %1418 = vadd.xlane.f32.xlu0 %v1387
        %v1419 = vpop.xlane.xlu0 %1418
        %1420 = vadd.xlane.f32.xlu0 %v1389
        %v1421 = vpop.xlane.xlu0 %1420
        %1422 = vadd.xlane.f32.xlu0 %v1391
        %v1423 = vpop.xlane.xlu0 %1422
        %1424 = vadd.xlane.f32.xlu0 %v1393
        %v1425 = vpop.xlane.xlu0 %1424
        %1426 = vadd.xlane.f32.xlu0 %v1395
        %v1427 = vpop.xlane.xlu0 %1426
        %1428 = vadd.xlane.f32.xlu0 %v1397
        %v1429 = vpop.xlane.xlu0 %1428
        %1430 = vadd.xlane.f32.xlu0 %v1399
        %v1431 = vpop.xlane.xlu0 %1430
        %1432 = vadd.xlane.f32.xlu0 %v1401
        %v1433 = vpop.xlane.xlu0 %1432
        %1434 = vadd.xlane.f32.xlu0 %v1403
        %v1435 = vpop.xlane.xlu0 %1434
        %1436 = vadd.xlane.f32.xlu0 %v1405
        %v1437 = vpop.xlane.xlu0 %1436
        %v1438 = vlog2.pop %v1407
        %v1439 = vmul.f32 %v1438, 0.6931472
        %v1440 = vlog2.pop %v1409
        %v1441 = vmul.f32 %v1440, 0.6931472
        %v1442 = vlog2.pop %v1411
        %v1443 = vmul.f32 %v1442, 0.6931472
        %v1444 = vlog2.pop %v1413
        %v1445 = vmul.f32 %v1444, 0.6931472
        %v1446 = vlog2.pop %v1415
        %v1447 = vmul.f32 %v1446, 0.6931472
        %v1448 = vlog2.pop %v1417
        %v1449 = vmul.f32 %v1448, 0.6931472
        %v1450 = vlog2.pop %v1419
        %v1451 = vmul.f32 %v1450, 0.6931472
        %v1452 = vlog2.pop %v1421
        %v1453 = vmul.f32 %v1452, 0.6931472
        %v1454 = vlog2.pop %v1423
        %v1455 = vmul.f32 %v1454, 0.6931472
        %v1456 = vlog2.pop %v1425
        %v1457 = vmul.f32 %v1456, 0.6931472
        %v1458 = vlog2.pop %v1427
        %v1459 = vmul.f32 %v1458, 0.6931472
        %v1460 = vlog2.pop %v1429
        %v1461 = vmul.f32 %v1460, 0.6931472
        %v1462 = vlog2.pop %v1431
        %v1463 = vmul.f32 %v1462, 0.6931472
        %v1464 = vlog2.pop %v1433
        %v1465 = vmul.f32 %v1464, 0.6931472
        %v1466 = vlog2.pop %v1435
        %v1467 = vmul.f32 %v1466, 0.6931472
        %v1468 = vlog2.pop %v1437
        %v1469 = vmul.f32 %v1468, 0.6931472
        %v1470 = vsub.f32 %v1358, %v1439
        %v1471 = vsub.f32 %v1359, %v1441
        %v1472 = vsub.f32 %v1360, %v1443
        %v1473 = vsub.f32 %v1361, %v1445
        %v1474 = vsub.f32 %v1362, %v1447
        %v1475 = vsub.f32 %v1363, %v1449
        %v1476 = vsub.f32 %v1364, %v1451
        %v1477 = vsub.f32 %v1365, %v1453
        %v1478 = vsub.f32 %v1366, %v1455
        %v1479 = vsub.f32 %v1367, %v1457
        %v1480 = vsub.f32 %v1368, %v1459
        %v1481 = vsub.f32 %v1369, %v1461
        %v1482 = vsub.f32 %v1370, %v1463
        %v1483 = vsub.f32 %v1371, %v1465
        %v1484 = vsub.f32 %v1372, %v1467
        %v1485 = vsub.f32 %v1373, %v1469
        %v1486 = vpack.c.bf16 %v1471, %v1470
        %v1487 = vpack.c.bf16 %v1473, %v1472
        %v1488 = vpack.c.bf16 %v1475, %v1474
        %v1489 = vpack.c.bf16 %v1477, %v1476
        %v1490 = vpack.c.bf16 %v1479, %v1478
        %v1491 = vpack.c.bf16 %v1481, %v1480
        %v1492 = vpack.c.bf16 %v1483, %v1482
        %v1493 = vpack.c.bf16 %v1485, %v1484
        %v1502 = vunpack.c.l.b16 %v1486
        %v1503 = vunpack.c.h.b16 %v1486
        %v1504 = vunpack.c.l.b16 %v1487
        %v1505 = vunpack.c.h.b16 %v1487
        %v1506 = vunpack.c.l.b16 %v1488
        %v1507 = vunpack.c.h.b16 %v1488
        %v1508 = vunpack.c.l.b16 %v1489
        %v1509 = vunpack.c.h.b16 %v1489
        %v1510 = vunpack.c.l.b16 %v1490
        %v1511 = vunpack.c.h.b16 %v1490
        %v1512 = vunpack.c.l.b16 %v1491
        %v1513 = vunpack.c.h.b16 %v1491
        %v1514 = vunpack.c.l.b16 %v1492
        %v1515 = vunpack.c.h.b16 %v1492
        %v1516 = vunpack.c.l.b16 %v1493
        %v1517 = vunpack.c.h.b16 %v1493
        %v1518 = vpack.c.b16 %v1502, %v1502
        %v1519 = vpack.c.b16 %v1503, %v1503
        %v1520 = vpack.c.b16 %v1504, %v1504
        %v1521 = vpack.c.b16 %v1505, %v1505
        %v1522 = vpack.c.b16 %v1506, %v1506
        %v1523 = vpack.c.b16 %v1507, %v1507
        %v1524 = vpack.c.b16 %v1508, %v1508
        %v1525 = vpack.c.b16 %v1509, %v1509
        %v1526 = vpack.c.b16 %v1510, %v1510
        %v1527 = vpack.c.b16 %v1511, %v1511
        %v1528 = vpack.c.b16 %v1512, %v1512
        %v1529 = vpack.c.b16 %v1513, %v1513
        %v1530 = vpack.c.b16 %v1514, %v1514
        %v1531 = vpack.c.b16 %v1515, %v1515
        %v1532 = vpack.c.b16 %v1516, %v1516
        %v1533 = vpack.c.b16 %v1517, %v1517
        %1550 = vst [vmem:[%s380] sm:$0xf] %v1518
        %1551 = vst [vmem:[%s380 + $0x4] sm:$0xf] %v1519
        %1552 = vst [vmem:[%s380 + $0x8] sm:$0xf] %v1520
        %1553 = vst [vmem:[%s380 + $0xc] sm:$0xf] %v1521
        %1554 = vst [vmem:[%s380 + $0x10] sm:$0xf] %v1522
        %1555 = vst [vmem:[%s380 + $0x14] sm:$0xf] %v1523
        %1556 = vst [vmem:[%s380 + $0x18] sm:$0xf] %v1524
        %1557 = vst [vmem:[%s380 + $0x1c] sm:$0xf] %v1525
        %1558 = vst [vmem:[%s380 + $0x20] sm:$0xf] %v1526
        %1559 = vst [vmem:[%s380 + $0x24] sm:$0xf] %v1527
        %1560 = vst [vmem:[%s380 + $0x28] sm:$0xf] %v1528
        %1561 = vst [vmem:[%s380 + $0x2c] sm:$0xf] %v1529
        %1562 = vst [vmem:[%s380 + $0x30] sm:$0xf] %v1530
        %1563 = vst [vmem:[%s380 + $0x34] sm:$0xf] %v1531
        %1564 = vst [vmem:[%s380 + $0x38] sm:$0xf] %v1532
        %1565 = vst [vmem:[%s380 + $0x3c] sm:$0xf] %v1533
        %s1566 = sand.u32 %s269, 1
        %s1567 = scalar_lea.sflag [#allocation3], %s1566
        %s1568 = sand.u32 %s269, 1
        %s1569 = smul.addr %s1568, 64
        %s1570 = scalar_lea.vmem [#allocation2], %s1569
        // Predicated region
        $region65: #{tpu_custom_call.1} parent=63 // pred_check
          %p1571 = pneg %p279
        $region66: #{tpu_custom_call.1} parent=63 // pred_check_branch
          %1573 = sbr.rel (%p1571) target = $region68
        $region67: #{tpu_custom_call.1} parent=63 // pred_region
          %s1574 = smul.u32 16, %s25
          %s1576 = ssub.s32 1024, 1024
          %1577 = vsyncadd %s1567, %s1576
          %s1578 = smul.addr %s1574, 64
          %s1579 = scalar_lea.hbm %s11, %s1578
          %s1580 = sshll.u32 %s1570, 4
          %s1581 = int_to_ptr.vmem [resolvable:$true] %s1580
          %1586 = dma.vmem_to_hbm [thread:$0]  %s1581, 1024, %s1579, %s1567, 64, 64, 4
        $region68: #{tpu_custom_call.1} parent=63 // pred_fallthru
          _
      $region64: #{tpu_custom_call.1} parent=5 // pred_fallthru
        _
      %p1587 = scmp.le.s32.totalorder 2, %s20
      // Predicated region
      $region69: #{tpu_custom_call.1} parent=5 // pred_check
        %p1588 = pneg %p1587
      $region70: #{tpu_custom_call.1} parent=5 // pred_check_branch
        %1590 = sbr.rel (%p1588) target = $region72
      $region71: #{tpu_custom_call.1} parent=5 // pred_region
        %s1591 = ssub.s32 %s20, 2
        // Predicated region
        $region73: #{tpu_custom_call.1} parent=71 // pred_check
          %p1592 = pneg %p285
        $region74: #{tpu_custom_call.1} parent=71 // pred_check_branch
          %1594 = sbr.rel (%p1592) target = $region76
        $region75: #{tpu_custom_call.1} parent=71 // pred_region
          %s1595 = sand.u32 %s270, 1
          %s1596 = scalar_lea.sflag [#allocation3], %s1595
          %s1597 = sand.u32 %s270, 1
          %s1598 = smul.addr %s1597, 64
          %s1599 = scalar_lea.vmem [#allocation2], %s1598
          %1600 = dma.done %s1596, 1024
        $region76: #{tpu_custom_call.1} parent=71 // pred_fallthru
          _
      $region72: #{tpu_custom_call.1} parent=5 // pred_fallthru
        _
    $region6: #{tpu_custom_call.1} parent=1 // loop_footer
      %s24 = sadd.s32 1, %s20
    $region7: #{tpu_custom_call.1} parent=1 // loop_footer_branch
      %19 = sbr.rel target = $region3
    $region8: #{tpu_custom_call.1} parent=1 // loop_exit
      _
    %1601 = vsyncpa [#allocation3], 1
    %s1602 = scalar_lea.sflag [#allocation3], 1
    %1603 = vsyncpa %s1602, 1

</llo_original>
